<compile_context>
chip_gen: v7x
topology: tpu7x:2x2x1
jax: 0.10.0
libtpu: 0.0.40
codegen_flags: <defaults>
</compile_context>

<pallas_src>
import functools

import jax
import jax.numpy as jnp
from jax.experimental import pallas as pl
from jax.experimental.pallas import tpu as pltpu

IN_DIM = 784
HID = 400
LATENT = 20


def vae_kernel(x_ref, eps_ref,
               w1_ref, b1_ref,
               wml_ref, bml_ref,
               w3_ref, b3_ref,
               w4_ref, b4_ref,
               recon_ref, mulv_ref):
    # Activations stay f32 for the VPU/EUP work; MXU operands are bf16.
    x = x_ref[...]                                                  # (tm, 784)

    # encode: fc1 -> relu
    h1 = jnp.dot(x.astype(jnp.bfloat16), w1_ref[...],
                 preferred_element_type=jnp.float32) + b1_ref[...]
    h1 = jnp.maximum(h1, 0.0)

    # fused fc21 || fc22 -> (tm, 40); [:, :20] = mu, [:, 20:] = logvar
    mulv = jnp.dot(h1.astype(jnp.bfloat16), wml_ref[...],
                   preferred_element_type=jnp.float32) + bml_ref[...]
    mu = mulv[:, :LATENT]
    logvar = mulv[:, LATENT:]

    # reparameterize: z = mu + eps * exp(0.5 * logvar)
    z = mu + eps_ref[...] * jnp.exp(0.5 * logvar)

    # decode: fc3 -> relu -> fc4 -> sigmoid
    h3 = jnp.dot(z.astype(jnp.bfloat16), w3_ref[...],
                 preferred_element_type=jnp.float32) + b3_ref[...]
    h3 = jnp.maximum(h3, 0.0)
    logits = jnp.dot(h3.astype(jnp.bfloat16), w4_ref[...],
                     preferred_element_type=jnp.float32) + b4_ref[...]

    recon_ref[...] = jax.nn.sigmoid(logits)
    mulv_ref[...] = mulv


def _resident(shape):
    # Weight/bias block: constant index_map => stays in VMEM across batch tiles.
    return pl.BlockSpec(shape, lambda i: (0,) * len(shape))


@functools.partial(jax.jit, static_argnames=("tm",))
def vae_forward(x_nchw, eps, params, tm=256):
    """x_nchw: (B, 1, 28, 28) float32, eps: (B, 20) float32."""
    B = x_nchw.shape[0]
    x = x_nchw.reshape(B, IN_DIM).astype(jnp.float32)   # torch x.view(-1, 784)
    eps = eps.astype(jnp.float32)

    (w1, b1, w21, b21, w22, b22, w3, b3, w4, b4) = params
    # Fuse the two latent projections; stream weights as bf16.
    w_ml = jnp.concatenate([w21, w22], axis=1).astype(jnp.bfloat16)   # (400, 40)
    b_ml = jnp.concatenate([b21, b22], axis=1).astype(jnp.float32)    # (1, 40)
    w1b = w1.astype(jnp.bfloat16)
    w3b = w3.astype(jnp.bfloat16)
    w4b = w4.astype(jnp.bfloat16)

    # Batch tiling: tile rounded to a sublane multiple, batch padded to a tile
    # multiple (padding rows are zeros and sliced off afterwards).
    tm_eff = max(8, min(tm, ((B + 7) // 8) * 8))
    tm_eff = (tm_eff // 8) * 8
    Bp = ((B + tm_eff - 1) // tm_eff) * tm_eff
    if Bp != B:
        pad = Bp - B
        x = jnp.pad(x, ((0, pad), (0, 0)))
        eps = jnp.pad(eps, ((0, pad), (0, 0)))
    nb = Bp // tm_eff

    weight_elems = IN_DIM * HID + HID * 2 * LATENT + LATENT * HID + HID * IN_DIM
    cost = pl.CostEstimate(
        flops=2 * Bp * weight_elems,
        transcendentals=Bp * (LATENT + IN_DIM),          # exp(std) + sigmoid
        bytes_accessed=(2 * weight_elems                  # bf16 weights
                        + 4 * (HID + 2 * LATENT + HID + IN_DIM)          # biases
                        + 4 * Bp * (2 * IN_DIM + 3 * LATENT)))           # x/eps/outs

    recon, mulv = pl.pallas_call(
        vae_kernel,
        out_shape=(
            jax.ShapeDtypeStruct((Bp, IN_DIM), jnp.float32),       # recon
            jax.ShapeDtypeStruct((Bp, 2 * LATENT), jnp.float32),   # mu || logvar
        ),
        grid_spec=pltpu.PrefetchScalarGridSpec(
            num_scalar_prefetch=0,
            grid=(nb,),
            in_specs=[
                pl.BlockSpec((tm_eff, IN_DIM), lambda i: (i, 0)),    # x
                pl.BlockSpec((tm_eff, LATENT), lambda i: (i, 0)),    # eps
                _resident(w1b.shape), _resident(b1.shape),
                _resident(w_ml.shape), _resident(b_ml.shape),
                _resident(w3b.shape), _resident(b3.shape),
                _resident(w4b.shape), _resident(b4.shape),
            ],
            out_specs=[
                pl.BlockSpec((tm_eff, IN_DIM), lambda i: (i, 0)),
                pl.BlockSpec((tm_eff, 2 * LATENT), lambda i: (i, 0)),
            ],
        ),
        compiler_params=pltpu.CompilerParams(
            dimension_semantics=("parallel",),   # v7x: shard batch tiles over 2 TCs
            vmem_limit_bytes=16 * 1024 * 1024,
        ),
        cost_estimate=cost,
    )(x, eps, w1b, b1, w_ml, b_ml, w3b, b3, w4b, b4)

    recon = recon[:B]
    mu = mulv[:B, :LATENT]
    logvar = mulv[:B, LATENT:]
    return recon, mu, logvar


def init_params(key):
    """Deterministic init matching nn.Linear shapes (uniform +-1/sqrt(fan_in)).
    Weights stored as (in_features, out_features), f32 masters."""
    def linear(k, fan_in, fan_out):
        kw, kb = jax.random.split(k)
        bound = 1.0 / jnp.sqrt(fan_in)
        w = jax.random.uniform(kw, (fan_in, fan_out), jnp.float32, -bound, bound)
        b = jax.random.uniform(kb, (1, fan_out), jnp.float32, -bound, bound)
        return w, b

    k1, k21, k22, k3, k4 = jax.random.split(key, 5)
    w1, b1 = linear(k1, IN_DIM, HID)
    w21, b21 = linear(k21, HID, LATENT)
    w22, b22 = linear(k22, HID, LATENT)
    w3, b3 = linear(k3, LATENT, HID)
    w4, b4 = linear(k4, HID, IN_DIM)
    return (w1, b1, w21, b21, w22, b22, w3, b3, w4, b4)


def reference_forward(x_nchw, eps, params):
    """Plain-JAX reference with the same bf16 MXU operands as the kernel."""
    (w1, b1, w21, b21, w22, b22, w3, b3, w4, b4) = params
    bf = lambda a: a.astype(jnp.bfloat16)
    mm = lambda a, w: jnp.dot(bf(a), bf(w), preferred_element_type=jnp.float32)
    x = x_nchw.reshape(x_nchw.shape[0], IN_DIM)
    h1 = jnp.maximum(mm(x, w1) + b1, 0.0)
    mu = mm(h1, w21) + b21
    logvar = mm(h1, w22) + b22
    z = mu + eps * jnp.exp(0.5 * logvar)
    h3 = jnp.maximum(mm(z, w3) + b3, 0.0)
    recon = jax.nn.sigmoid(mm(h3, w4) + b4)
    return recon, mu, logvar


if __name__ == "__main__":
    key = jax.random.PRNGKey(0)
    kx, keps, kp = jax.random.split(key, 3)

    B = 64
    x = jax.random.normal(kx, (B, 1, 28, 28), jnp.float32)   # NCHW, like MNIST
    eps = jax.random.normal(keps, (B, LATENT), jnp.float32)  # randn_like(std)
    params = init_params(kp)

    # tm=16 exercises the multi-step batch-tiled grid at this small batch.
    recon, mu, logvar = jax.block_until_ready(vae_forward(x, eps, params, tm=16))

    r_ref, m_ref, lv_ref = reference_forward(x, eps, params)
    assert recon.shape == (B, IN_DIM) and mu.shape == (B, LATENT) and logvar.shape == (B, LATENT)
    assert jnp.allclose(recon, r_ref, atol=2e-3, rtol=2e-3)
    assert jnp.allclose(mu, m_ref, atol=2e-3, rtol=2e-3)
    assert jnp.allclose(logvar, lv_ref, atol=2e-3, rtol=2e-3)

    print("KERNEL_OK")
</pallas_src>

<mosaic_0001>
module attributes {stable_mosaic.version = 11 : i64} {
  func.func @vae_kernel(%arg0: i32, %arg1: memref<16x784xf32, #tpu.memory_space<vmem>>, %arg2: memref<16x20xf32, #tpu.memory_space<vmem>>, %arg3: memref<784x400xbf16, #tpu.memory_space<vmem>>, %arg4: memref<1x400xf32, #tpu.memory_space<vmem>>, %arg5: memref<400x40xbf16, #tpu.memory_space<vmem>>, %arg6: memref<1x40xf32, #tpu.memory_space<vmem>>, %arg7: memref<20x400xbf16, #tpu.memory_space<vmem>>, %arg8: memref<1x400xf32, #tpu.memory_space<vmem>>, %arg9: memref<400x784xbf16, #tpu.memory_space<vmem>>, %arg10: memref<1x784xf32, #tpu.memory_space<vmem>>, %arg11: memref<16x784xf32, #tpu.memory_space<vmem>>, %arg12: memref<16x40xf32, #tpu.memory_space<vmem>>) attributes {dimension_semantics = [#tpu.dimension_semantics<parallel>], iteration_bounds = array<i64: 4>, scalar_prefetch = 0 : i64, scratch_operands = 0 : i64, tpu.core_type = #tpu.core_type<tc>, window_params = [{transform_indices = @transform_0, window_bounds = array<i64: 16, 784>}, {transform_indices = @transform_1, window_bounds = array<i64: 16, 20>}, {pipeline_mode = #tpu.pipeline_mode<synchronous>, transform_indices = @transform_2, window_bounds = array<i64: 784, 400>}, {pipeline_mode = #tpu.pipeline_mode<synchronous>, transform_indices = @transform_3, window_bounds = array<i64: 1, 400>}, {pipeline_mode = #tpu.pipeline_mode<synchronous>, transform_indices = @transform_4, window_bounds = array<i64: 400, 40>}, {pipeline_mode = #tpu.pipeline_mode<synchronous>, transform_indices = @transform_5, window_bounds = array<i64: 1, 40>}, {pipeline_mode = #tpu.pipeline_mode<synchronous>, transform_indices = @transform_6, window_bounds = array<i64: 20, 400>}, {pipeline_mode = #tpu.pipeline_mode<synchronous>, transform_indices = @transform_7, window_bounds = array<i64: 1, 400>}, {pipeline_mode = #tpu.pipeline_mode<synchronous>, transform_indices = @transform_8, window_bounds = array<i64: 400, 784>}, {pipeline_mode = #tpu.pipeline_mode<synchronous>, transform_indices = @transform_9, window_bounds = array<i64: 1, 784>}, {transform_indices = @transform_10, window_bounds = array<i64: 16, 784>}, {transform_indices = @transform_11, window_bounds = array<i64: 16, 40>}]} {
    %c0 = arith.constant 0 : index
    %c0_0 = arith.constant 0 : index
    %0 = vector.load %arg1[%c0, %c0_0] : memref<16x784xf32, #tpu.memory_space<vmem>>, vector<16x784xf32>
    %1 = arith.truncf %0 : vector<16x784xf32> to vector<16x784xbf16>
    %c0_1 = arith.constant 0 : index
    %c0_2 = arith.constant 0 : index
    %2 = vector.load %arg3[%c0_1, %c0_2] : memref<784x400xbf16, #tpu.memory_space<vmem>>, vector<784x400xbf16>
    %cst = arith.constant dense<0.000000e+00> : vector<16x400xf32>
    %3 = tpu.matmul %1, %2, %cst {dimension_numbers = #tpu.dot_dimension_numbers<[1], [0], [0], [1], [0, 0, 1, 1], [], []>} : vector<16x784xbf16>, vector<784x400xbf16>, vector<16x400xf32> -> vector<16x400xf32>
    %c0_3 = arith.constant 0 : index
    %c0_4 = arith.constant 0 : index
    %4 = vector.load %arg4[%c0_3, %c0_4] : memref<1x400xf32, #tpu.memory_space<vmem>>, vector<1x400xf32>
    %5 = vector.broadcast %4 : vector<1x400xf32> to vector<16x400xf32>
    %6 = arith.addf %3, %5 : vector<16x400xf32>
    %cst_5 = arith.constant 0.000000e+00 : f32
    %7 = vector.broadcast %cst_5 : f32 to vector<16x400xf32>
    %8 = arith.maximumf %6, %7 : vector<16x400xf32>
    %9 = arith.truncf %8 : vector<16x400xf32> to vector<16x400xbf16>
    %c0_6 = arith.constant 0 : index
    %c0_7 = arith.constant 0 : index
    %10 = vector.load %arg5[%c0_6, %c0_7] : memref<400x40xbf16, #tpu.memory_space<vmem>>, vector<400x40xbf16>
    %cst_8 = arith.constant dense<0.000000e+00> : vector<16x40xf32>
    %11 = tpu.matmul %9, %10, %cst_8 {dimension_numbers = #tpu.dot_dimension_numbers<[1], [0], [0], [1], [0, 0, 1, 1], [], []>} : vector<16x400xbf16>, vector<400x40xbf16>, vector<16x40xf32> -> vector<16x40xf32>
    %c0_9 = arith.constant 0 : index
    %c0_10 = arith.constant 0 : index
    %12 = vector.load %arg6[%c0_9, %c0_10] : memref<1x40xf32, #tpu.memory_space<vmem>>, vector<1x40xf32>
    %13 = vector.broadcast %12 : vector<1x40xf32> to vector<16x40xf32>
    %14 = arith.addf %11, %13 : vector<16x40xf32>
    %15 = vector.extract_strided_slice %14 {offsets = [0, 0], sizes = [16, 20], strides = [1, 1]} : vector<16x40xf32> to vector<16x20xf32>
    %16 = vector.extract_strided_slice %14 {offsets = [0, 20], sizes = [16, 20], strides = [1, 1]} : vector<16x40xf32> to vector<16x20xf32>
    %c0_11 = arith.constant 0 : index
    %c0_12 = arith.constant 0 : index
    %17 = vector.load %arg2[%c0_11, %c0_12] : memref<16x20xf32, #tpu.memory_space<vmem>>, vector<16x20xf32>
    %cst_13 = arith.constant 5.000000e-01 : f32
    %18 = vector.broadcast %cst_13 : f32 to vector<16x20xf32>
    %19 = arith.mulf %18, %16 : vector<16x20xf32>
    %20 = math.exp %19 : vector<16x20xf32>
    %21 = arith.mulf %17, %20 : vector<16x20xf32>
    %22 = arith.addf %15, %21 : vector<16x20xf32>
    %23 = arith.truncf %22 : vector<16x20xf32> to vector<16x20xbf16>
    %c0_14 = arith.constant 0 : index
    %c0_15 = arith.constant 0 : index
    %24 = vector.load %arg7[%c0_14, %c0_15] : memref<20x400xbf16, #tpu.memory_space<vmem>>, vector<20x400xbf16>
    %cst_16 = arith.constant dense<0.000000e+00> : vector<16x400xf32>
    %25 = tpu.matmul %23, %24, %cst_16 {dimension_numbers = #tpu.dot_dimension_numbers<[1], [0], [0], [1], [0, 0, 1, 1], [], []>} : vector<16x20xbf16>, vector<20x400xbf16>, vector<16x400xf32> -> vector<16x400xf32>
    %c0_17 = arith.constant 0 : index
    %c0_18 = arith.constant 0 : index
    %26 = vector.load %arg8[%c0_17, %c0_18] : memref<1x400xf32, #tpu.memory_space<vmem>>, vector<1x400xf32>
    %27 = vector.broadcast %26 : vector<1x400xf32> to vector<16x400xf32>
    %28 = arith.addf %25, %27 : vector<16x400xf32>
    %cst_19 = arith.constant 0.000000e+00 : f32
    %29 = vector.broadcast %cst_19 : f32 to vector<16x400xf32>
    %30 = arith.maximumf %28, %29 : vector<16x400xf32>
    %31 = arith.truncf %30 : vector<16x400xf32> to vector<16x400xbf16>
    %c0_20 = arith.constant 0 : index
    %c0_21 = arith.constant 0 : index
    %32 = vector.load %arg9[%c0_20, %c0_21] : memref<400x784xbf16, #tpu.memory_space<vmem>>, vector<400x784xbf16>
    %cst_22 = arith.constant dense<0.000000e+00> : vector<16x784xf32>
    %33 = tpu.matmul %31, %32, %cst_22 {dimension_numbers = #tpu.dot_dimension_numbers<[1], [0], [0], [1], [0, 0, 1, 1], [], []>} : vector<16x400xbf16>, vector<400x784xbf16>, vector<16x784xf32> -> vector<16x784xf32>
    %c0_23 = arith.constant 0 : index
    %c0_24 = arith.constant 0 : index
    %34 = vector.load %arg10[%c0_23, %c0_24] : memref<1x784xf32, #tpu.memory_space<vmem>>, vector<1x784xf32>
    %35 = vector.broadcast %34 : vector<1x784xf32> to vector<16x784xf32>
    %36 = arith.addf %33, %35 : vector<16x784xf32>
    %37 = arith.negf %36 : vector<16x784xf32>
    %38 = math.exp %37 : vector<16x784xf32>
    %cst_25 = arith.constant 1.000000e+00 : f32
    %39 = vector.broadcast %cst_25 : f32 to vector<16x784xf32>
    %40 = arith.addf %39, %38 : vector<16x784xf32>
    %41 = arith.divf %39, %40 : vector<16x784xf32>
    %c0_26 = arith.constant 0 : index
    %c0_27 = arith.constant 0 : index
    %42 = vector.load %arg11[%c0_26, %c0_27] : memref<16x784xf32, #tpu.memory_space<vmem>>, vector<16x784xf32>
    tpu.vector_store %arg11[%c0_26, %c0_27], %41 {strides = array<i32>} : memref<16x784xf32, #tpu.memory_space<vmem>>, vector<16x784xf32>,
    %c0_28 = arith.constant 0 : index
    %c0_29 = arith.constant 0 : index
    %43 = vector.load %arg12[%c0_28, %c0_29] : memref<16x40xf32, #tpu.memory_space<vmem>>, vector<16x40xf32>
    tpu.vector_store %arg12[%c0_28, %c0_29], %14 {strides = array<i32>} : memref<16x40xf32, #tpu.memory_space<vmem>>, vector<16x40xf32>,
    return
  }
  func.func @transform_0(%arg0: i32) -> (i32, i32) {
    %c0_i32 = arith.constant 0 : i32
    %c0_i32_0 = arith.constant 0 : i32
    return %arg0, %c0_i32 : i32, i32
  }
  func.func @transform_1(%arg0: i32) -> (i32, i32) {
    %c0_i32 = arith.constant 0 : i32
    %c0_i32_0 = arith.constant 0 : i32
    return %arg0, %c0_i32 : i32, i32
  }
  func.func @transform_2(%arg0: i32) -> (i32, i32) {
    %c0_i32 = arith.constant 0 : i32
    %c0_i32_0 = arith.constant 0 : i32
    %c0_i32_1 = arith.constant 0 : i32
    return %c0_i32, %c0_i32_0 : i32, i32
  }
  func.func @transform_3(%arg0: i32) -> (i32, i32) {
    %c0_i32 = arith.constant 0 : i32
    %c0_i32_0 = arith.constant 0 : i32
    %c0_i32_1 = arith.constant 0 : i32
    return %c0_i32, %c0_i32_0 : i32, i32
  }
  func.func @transform_4(%arg0: i32) -> (i32, i32) {
    %c0_i32 = arith.constant 0 : i32
    %c0_i32_0 = arith.constant 0 : i32
    %c0_i32_1 = arith.constant 0 : i32
    return %c0_i32, %c0_i32_0 : i32, i32
  }
  func.func @transform_5(%arg0: i32) -> (i32, i32) {
    %c0_i32 = arith.constant 0 : i32
    %c0_i32_0 = arith.constant 0 : i32
    %c0_i32_1 = arith.constant 0 : i32
    return %c0_i32, %c0_i32_0 : i32, i32
  }
  func.func @transform_6(%arg0: i32) -> (i32, i32) {
    %c0_i32 = arith.constant 0 : i32
    %c0_i32_0 = arith.constant 0 : i32
    %c0_i32_1 = arith.constant 0 : i32
    return %c0_i32, %c0_i32_0 : i32, i32
  }
  func.func @transform_7(%arg0: i32) -> (i32, i32) {
    %c0_i32 = arith.constant 0 : i32
    %c0_i32_0 = arith.constant 0 : i32
    %c0_i32_1 = arith.constant 0 : i32
    return %c0_i32, %c0_i32_0 : i32, i32
  }
  func.func @transform_8(%arg0: i32) -> (i32, i32) {
    %c0_i32 = arith.constant 0 : i32
    %c0_i32_0 = arith.constant 0 : i32
    %c0_i32_1 = arith.constant 0 : i32
    return %c0_i32, %c0_i32_0 : i32, i32
  }
  func.func @transform_9(%arg0: i32) -> (i32, i32) {
    %c0_i32 = arith.constant 0 : i32
    %c0_i32_0 = arith.constant 0 : i32
    %c0_i32_1 = arith.constant 0 : i32
    return %c0_i32, %c0_i32_0 : i32, i32
  }
  func.func @transform_10(%arg0: i32) -> (i32, i32) {
    %c0_i32 = arith.constant 0 : i32
    %c0_i32_0 = arith.constant 0 : i32
    return %arg0, %c0_i32 : i32, i32
  }
  func.func @transform_11(%arg0: i32) -> (i32, i32) {
    %c0_i32 = arith.constant 0 : i32
    %c0_i32_0 = arith.constant 0 : i32
    return %arg0, %c0_i32 : i32, i32
  }
}

</mosaic_0001>

<llo_original>
// kernel: vae_forward.1
$region0: #{vae_forward.1}
  #allocation0 [shape = 'u32[]', space=smem, size = 0x4, offset = 0x4, fixed_abs, tag = 'smem constant byte address 0x4 - core index']
  #allocation1 [shape = 'u32[144,128]{1,0:T(1,128)}', space=vmem, size = 0x12000, scoped, tag = 'internal scratch']
  %s0 = inlined_call_operand.vmem [shape: f32[64,784], index: 0, kind: input, shape index: {}]
  %s1 = inlined_call_operand.vmem [shape: f32[64,20], index: 1, kind: input, shape index: {}]
  %s2 = inlined_call_operand.vmem [shape: bf16[784,400], index: 2, kind: input, shape index: {}]
  %s3 = inlined_call_operand.vmem [shape: f32[1,400], index: 3, kind: input, shape index: {}]
  %s4 = inlined_call_operand.vmem [shape: bf16[400,40], index: 4, kind: input, shape index: {}]
  %s5 = inlined_call_operand.vmem [shape: f32[1,40], index: 5, kind: input, shape index: {}]
  %s6 = inlined_call_operand.vmem [shape: bf16[20,400], index: 6, kind: input, shape index: {}]
  %s7 = inlined_call_operand.vmem [shape: f32[1,400], index: 7, kind: input, shape index: {}]
  %s8 = inlined_call_operand.vmem [shape: bf16[400,784], index: 8, kind: input, shape index: {}]
  %s9 = inlined_call_operand.vmem [shape: f32[1,784], index: 9, kind: input, shape index: {}]
  %s10 = inlined_call_operand.hbm [shape: f32[64,784], index: 10, kind: output, shape index: {0}]
  %s11 = inlined_call_operand.vmem [shape: f32[64,40], index: 11, kind: output, shape index: {1}]
  %12 = xla_tuple %s10, %s11
  %s13 = sld [smem:[#allocation0]]
  $region81: #{vae_forward.1} parent=0
    _
  %s15 = ssub.s32 1, %s13
  %s16 = scalar_select 0, %s15, %s13
  $region1: #{vae_forward.1} parent=0
    #allocation2 [shape = 'u8[114688]{0}', space=vmem, size = 0x1c000, scoped, tag = 'output window, operand 0']
    #allocation3 [shape = 's32[2]{0}', space=sflag, size = 0x8, scoped, tag = 'scoped memory for vae_forward.1']
    %17 = vsyncpa [#allocation3], 0
    %s18 = scalar_lea.sflag [#allocation3], 1
    %19 = vsyncpa %s18, 0
    loop: start=0, step=1, limit=6
    $region2: #{vae_forward.1} parent=1 // loop_pre_header
      _
    $region3: #{vae_forward.1} parent=1 // loop_header
      %s21 = sphi 0, %s25
      %p22 = scmp.ge.s32.totalorder %s21, 6
      %s31 = sphi 0, %s33
      %s34 = sphi 0, %s31
      %s35 = sphi 0, %s34
      %s51 = sphi 0, %s35
      %s57 = sphi 0, %s59
      %s60 = sphi 0, %s57
      %s61 = sphi 0, %s60
      %s77 = sphi 0, %s61
      %s81 = sphi 0, %s81
      %s83 = sphi 0, %s81
      %s84 = sphi 0, %s83
      %s98 = sphi 0, %s84
      %s102 = sphi 0, %s102
      %s104 = sphi 0, %s102
      %s105 = sphi 0, %s104
      %s119 = sphi 0, %s105
      %s123 = sphi 0, %s123
      %s125 = sphi 0, %s123
      %s126 = sphi 0, %s125
      %s140 = sphi 0, %s126
      %s144 = sphi 0, %s144
      %s146 = sphi 0, %s144
      %s147 = sphi 0, %s146
      %s161 = sphi 0, %s147
      %s165 = sphi 0, %s165
      %s167 = sphi 0, %s165
      %s168 = sphi 0, %s167
      %s182 = sphi 0, %s168
      %s186 = sphi 0, %s186
      %s188 = sphi 0, %s186
      %s189 = sphi 0, %s188
      %s203 = sphi 0, %s189
      %s207 = sphi 0, %s207
      %s209 = sphi 0, %s207
      %s210 = sphi 0, %s209
      %s224 = sphi 0, %s210
      %s228 = sphi 0, %s228
      %s230 = sphi 0, %s228
      %s231 = sphi 0, %s230
      %s245 = sphi 0, %s231
      %s251 = sphi 0, %s253
      %s254 = sphi 0, %s251
      %s255 = sphi 0, %s254
      %s271 = sphi 0, %s255
      %s277 = sphi 0, %s279
      %s280 = sphi 0, %s277
      %s281 = sphi 0, %s280
      %s297 = sphi 0, %s281
    $region4: #{vae_forward.1} parent=1 // loop_header_branch
      %24 = sbr.rel (%p22) target = $region8
    $region5: #{vae_forward.1} parent=1 // loop_body
      %s26 = ssub.s32 %s21, 1
      %s27 = ssub.s32 %s21, 2
      %s28 = sadd.s32 %s21, 1
      %s29 = ssub.s32 %s21, %s28
      %p30 = scmp.eq.s32.totalorder %s29, 0
      %s32 = sadd.s32 %s31, 1
      %s33 = scalar_select %p30, %s31, %s32
      %p36 = pneg %p30
      %p37 = scmp.eq.s32.totalorder %s21, 3
      %p38 = por %p36, %p37
      %p39 = scmp.ne.s32.totalorder %s31, %s34
      %p40 = scmp.eq.s32.totalorder %s21, 0
      %p41 = por %p39, %p40
      %p42 = scmp.ne.s32.totalorder %s31, %s34
      %p43 = scmp.eq.s32.totalorder %s26, 3
      %p44 = por %p42, %p43
      %p45 = scmp.ne.s32.totalorder %s34, %s35
      %p46 = scmp.eq.s32.totalorder %s26, 0
      %p47 = por %p45, %p46
      %p48 = scmp.ne.s32.totalorder %s34, %s35
      %p49 = scmp.eq.s32.totalorder %s27, 3
      %p50 = por %p48, %p49
      %p52 = scmp.ne.s32.totalorder %s35, %s51
      %p53 = scmp.eq.s32.totalorder %s27, 0
      %p54 = por %p52, %p53
      %s55 = ssub.s32 %s21, %s28
      %p56 = scmp.eq.s32.totalorder %s55, 0
      %s58 = sadd.s32 %s57, 1
      %s59 = scalar_select %p56, %s57, %s58
      %p62 = pneg %p56
      %p63 = scmp.eq.s32.totalorder %s21, 3
      %p64 = por %p62, %p63
      %p65 = scmp.ne.s32.totalorder %s57, %s60
      %p66 = scmp.eq.s32.totalorder %s21, 0
      %p67 = por %p65, %p66
      %p68 = scmp.ne.s32.totalorder %s57, %s60
      %p69 = scmp.eq.s32.totalorder %s26, 3
      %p70 = por %p68, %p69
      %p71 = scmp.ne.s32.totalorder %s60, %s61
      %p72 = scmp.eq.s32.totalorder %s26, 0
      %p73 = por %p71, %p72
      %p74 = scmp.ne.s32.totalorder %s60, %s61
      %p75 = scmp.eq.s32.totalorder %s27, 3
      %p76 = por %p74, %p75
      %p78 = scmp.ne.s32.totalorder %s61, %s77
      %p79 = scmp.eq.s32.totalorder %s27, 0
      %p80 = por %p78, %p79
      %s82 = sadd.s32 %s81, 1
      %p85 = scmp.eq.s32.totalorder %s21, 3
      %p86 = scmp.ne.s32.totalorder %s81, %s83
      %p87 = scmp.eq.s32.totalorder %s21, 0
      %p88 = por %p86, %p87
      %p89 = scmp.ne.s32.totalorder %s81, %s83
      %p90 = scmp.eq.s32.totalorder %s26, 3
      %p91 = por %p89, %p90
      %p92 = scmp.ne.s32.totalorder %s83, %s84
      %p93 = scmp.eq.s32.totalorder %s26, 0
      %p94 = por %p92, %p93
      %p95 = scmp.ne.s32.totalorder %s83, %s84
      %p96 = scmp.eq.s32.totalorder %s27, 3
      %p97 = por %p95, %p96
      %p99 = scmp.ne.s32.totalorder %s84, %s98
      %p100 = scmp.eq.s32.totalorder %s27, 0
      %p101 = por %p99, %p100
      %s103 = sadd.s32 %s102, 1
      %p106 = scmp.eq.s32.totalorder %s21, 3
      %p107 = scmp.ne.s32.totalorder %s102, %s104
      %p108 = scmp.eq.s32.totalorder %s21, 0
      %p109 = por %p107, %p108
      %p110 = scmp.ne.s32.totalorder %s102, %s104
      %p111 = scmp.eq.s32.totalorder %s26, 3
      %p112 = por %p110, %p111
      %p113 = scmp.ne.s32.totalorder %s104, %s105
      %p114 = scmp.eq.s32.totalorder %s26, 0
      %p115 = por %p113, %p114
      %p116 = scmp.ne.s32.totalorder %s104, %s105
      %p117 = scmp.eq.s32.totalorder %s27, 3
      %p118 = por %p116, %p117
      %p120 = scmp.ne.s32.totalorder %s105, %s119
      %p121 = scmp.eq.s32.totalorder %s27, 0
      %p122 = por %p120, %p121
      %s124 = sadd.s32 %s123, 1
      %p127 = scmp.eq.s32.totalorder %s21, 3
      %p128 = scmp.ne.s32.totalorder %s123, %s125
      %p129 = scmp.eq.s32.totalorder %s21, 0
      %p130 = por %p128, %p129
      %p131 = scmp.ne.s32.totalorder %s123, %s125
      %p132 = scmp.eq.s32.totalorder %s26, 3
      %p133 = por %p131, %p132
      %p134 = scmp.ne.s32.totalorder %s125, %s126
      %p135 = scmp.eq.s32.totalorder %s26, 0
      %p136 = por %p134, %p135
      %p137 = scmp.ne.s32.totalorder %s125, %s126
      %p138 = scmp.eq.s32.totalorder %s27, 3
      %p139 = por %p137, %p138
      %p141 = scmp.ne.s32.totalorder %s126, %s140
      %p142 = scmp.eq.s32.totalorder %s27, 0
      %p143 = por %p141, %p142
      %s145 = sadd.s32 %s144, 1
      %p148 = scmp.eq.s32.totalorder %s21, 3
      %p149 = scmp.ne.s32.totalorder %s144, %s146
      %p150 = scmp.eq.s32.totalorder %s21, 0
      %p151 = por %p149, %p150
      %p152 = scmp.ne.s32.totalorder %s144, %s146
      %p153 = scmp.eq.s32.totalorder %s26, 3
      %p154 = por %p152, %p153
      %p155 = scmp.ne.s32.totalorder %s146, %s147
      %p156 = scmp.eq.s32.totalorder %s26, 0
      %p157 = por %p155, %p156
      %p158 = scmp.ne.s32.totalorder %s146, %s147
      %p159 = scmp.eq.s32.totalorder %s27, 3
      %p160 = por %p158, %p159
      %p162 = scmp.ne.s32.totalorder %s147, %s161
      %p163 = scmp.eq.s32.totalorder %s27, 0
      %p164 = por %p162, %p163
      %s166 = sadd.s32 %s165, 1
      %p169 = scmp.eq.s32.totalorder %s21, 3
      %p170 = scmp.ne.s32.totalorder %s165, %s167
      %p171 = scmp.eq.s32.totalorder %s21, 0
      %p172 = por %p170, %p171
      %p173 = scmp.ne.s32.totalorder %s165, %s167
      %p174 = scmp.eq.s32.totalorder %s26, 3
      %p175 = por %p173, %p174
      %p176 = scmp.ne.s32.totalorder %s167, %s168
      %p177 = scmp.eq.s32.totalorder %s26, 0
      %p178 = por %p176, %p177
      %p179 = scmp.ne.s32.totalorder %s167, %s168
      %p180 = scmp.eq.s32.totalorder %s27, 3
      %p181 = por %p179, %p180
      %p183 = scmp.ne.s32.totalorder %s168, %s182
      %p184 = scmp.eq.s32.totalorder %s27, 0
      %p185 = por %p183, %p184
      %s187 = sadd.s32 %s186, 1
      %p190 = scmp.eq.s32.totalorder %s21, 3
      %p191 = scmp.ne.s32.totalorder %s186, %s188
      %p192 = scmp.eq.s32.totalorder %s21, 0
      %p193 = por %p191, %p192
      %p194 = scmp.ne.s32.totalorder %s186, %s188
      %p195 = scmp.eq.s32.totalorder %s26, 3
      %p196 = por %p194, %p195
      %p197 = scmp.ne.s32.totalorder %s188, %s189
      %p198 = scmp.eq.s32.totalorder %s26, 0
      %p199 = por %p197, %p198
      %p200 = scmp.ne.s32.totalorder %s188, %s189
      %p201 = scmp.eq.s32.totalorder %s27, 3
      %p202 = por %p200, %p201
      %p204 = scmp.ne.s32.totalorder %s189, %s203
      %p205 = scmp.eq.s32.totalorder %s27, 0
      %p206 = por %p204, %p205
      %s208 = sadd.s32 %s207, 1
      %p211 = scmp.eq.s32.totalorder %s21, 3
      %p212 = scmp.ne.s32.totalorder %s207, %s209
      %p213 = scmp.eq.s32.totalorder %s21, 0
      %p214 = por %p212, %p213
      %p215 = scmp.ne.s32.totalorder %s207, %s209
      %p216 = scmp.eq.s32.totalorder %s26, 3
      %p217 = por %p215, %p216
      %p218 = scmp.ne.s32.totalorder %s209, %s210
      %p219 = scmp.eq.s32.totalorder %s26, 0
      %p220 = por %p218, %p219
      %p221 = scmp.ne.s32.totalorder %s209, %s210
      %p222 = scmp.eq.s32.totalorder %s27, 3
      %p223 = por %p221, %p222
      %p225 = scmp.ne.s32.totalorder %s210, %s224
      %p226 = scmp.eq.s32.totalorder %s27, 0
      %p227 = por %p225, %p226
      %s229 = sadd.s32 %s228, 1
      %p232 = scmp.eq.s32.totalorder %s21, 3
      %p233 = scmp.ne.s32.totalorder %s228, %s230
      %p234 = scmp.eq.s32.totalorder %s21, 0
      %p235 = por %p233, %p234
      %p236 = scmp.ne.s32.totalorder %s228, %s230
      %p237 = scmp.eq.s32.totalorder %s26, 3
      %p238 = por %p236, %p237
      %p239 = scmp.ne.s32.totalorder %s230, %s231
      %p240 = scmp.eq.s32.totalorder %s26, 0
      %p241 = por %p239, %p240
      %p242 = scmp.ne.s32.totalorder %s230, %s231
      %p243 = scmp.eq.s32.totalorder %s27, 3
      %p244 = por %p242, %p243
      %p246 = scmp.ne.s32.totalorder %s231, %s245
      %p247 = scmp.eq.s32.totalorder %s27, 0
      %p248 = por %p246, %p247
      %s249 = ssub.s32 %s21, %s28
      %p250 = scmp.eq.s32.totalorder %s249, 0
      %s252 = sadd.s32 %s251, 1
      %s253 = scalar_select %p250, %s251, %s252
      %p256 = pneg %p250
      %p257 = scmp.eq.s32.totalorder %s21, 3
      %p258 = por %p256, %p257
      %p259 = scmp.ne.s32.totalorder %s251, %s254
      %p260 = scmp.eq.s32.totalorder %s21, 0
      %p261 = por %p259, %p260
      %p262 = scmp.ne.s32.totalorder %s251, %s254
      %p263 = scmp.eq.s32.totalorder %s26, 3
      %p264 = por %p262, %p263
      %p265 = scmp.ne.s32.totalorder %s254, %s255
      %p266 = scmp.eq.s32.totalorder %s26, 0
      %p267 = por %p265, %p266
      %p268 = scmp.ne.s32.totalorder %s254, %s255
      %p269 = scmp.eq.s32.totalorder %s27, 3
      %p270 = por %p268, %p269
      %p272 = scmp.ne.s32.totalorder %s255, %s271
      %p273 = scmp.eq.s32.totalorder %s27, 0
      %p274 = por %p272, %p273
      %s275 = ssub.s32 %s21, %s28
      %p276 = scmp.eq.s32.totalorder %s275, 0
      %s278 = sadd.s32 %s277, 1
      %s279 = scalar_select %p276, %s277, %s278
      %p282 = pneg %p276
      %p283 = scmp.eq.s32.totalorder %s21, 3
      %p284 = por %p282, %p283
      %p285 = scmp.ne.s32.totalorder %s277, %s280
      %p286 = scmp.eq.s32.totalorder %s21, 0
      %p287 = por %p285, %p286
      %p288 = scmp.ne.s32.totalorder %s277, %s280
      %p289 = scmp.eq.s32.totalorder %s26, 3
      %p290 = por %p288, %p289
      %p291 = scmp.ne.s32.totalorder %s280, %s281
      %p292 = scmp.eq.s32.totalorder %s26, 0
      %p293 = por %p291, %p292
      %p294 = scmp.ne.s32.totalorder %s280, %s281
      %p295 = scmp.eq.s32.totalorder %s27, 3
      %p296 = por %p294, %p295
      %p298 = scmp.ne.s32.totalorder %s281, %s297
      %p299 = scmp.eq.s32.totalorder %s27, 0
      %p300 = por %p298, %p299
      %p301 = scmp.le.s32.totalorder 1, %s21
      %p302 = scmp.lt.s32.totalorder %s21, 5
      %p303 = pnand %p301, %p302
      %p304 = pneg %p303
      // Predicated region
      $region9: #{vae_forward.1} parent=5 // pred_check
        _
      $region10: #{vae_forward.1} parent=5 // pred_check_branch
        %306 = sbr.rel (%p303) target = $region12
      $region11: #{vae_forward.1} parent=5 // pred_region
        %s307 = ssub.s32 %s21, 1
        // Predicated region
        $region13: #{vae_forward.1} parent=11 // pred_check
          %p308 = pneg %p94
        $region14: #{vae_forward.1} parent=11 // pred_check_branch
          %310 = sbr.rel (%p308) target = $region16
        $region15: #{vae_forward.1} parent=11 // pred_region
          _
        $region16: #{vae_forward.1} parent=11 // pred_fallthru
          _
        // Predicated region
        $region17: #{vae_forward.1} parent=11 // pred_check
          %p311 = pneg %p115
        $region18: #{vae_forward.1} parent=11 // pred_check_branch
          %313 = sbr.rel (%p311) target = $region20
        $region19: #{vae_forward.1} parent=11 // pred_region
          _
        $region20: #{vae_forward.1} parent=11 // pred_fallthru
          _
        // Predicated region
        $region21: #{vae_forward.1} parent=11 // pred_check
          %p314 = pneg %p136
        $region22: #{vae_forward.1} parent=11 // pred_check_branch
          %316 = sbr.rel (%p314) target = $region24
        $region23: #{vae_forward.1} parent=11 // pred_region
          _
        $region24: #{vae_forward.1} parent=11 // pred_fallthru
          _
        // Predicated region
        $region25: #{vae_forward.1} parent=11 // pred_check
          %p317 = pneg %p157
        $region26: #{vae_forward.1} parent=11 // pred_check_branch
          %319 = sbr.rel (%p317) target = $region28
        $region27: #{vae_forward.1} parent=11 // pred_region
          _
        $region28: #{vae_forward.1} parent=11 // pred_fallthru
          _
        // Predicated region
        $region29: #{vae_forward.1} parent=11 // pred_check
          %p320 = pneg %p178
        $region30: #{vae_forward.1} parent=11 // pred_check_branch
          %322 = sbr.rel (%p320) target = $region32
        $region31: #{vae_forward.1} parent=11 // pred_region
          _
        $region32: #{vae_forward.1} parent=11 // pred_fallthru
          _
        // Predicated region
        $region33: #{vae_forward.1} parent=11 // pred_check
          %p323 = pneg %p199
        $region34: #{vae_forward.1} parent=11 // pred_check_branch
          %325 = sbr.rel (%p323) target = $region36
        $region35: #{vae_forward.1} parent=11 // pred_region
          _
        $region36: #{vae_forward.1} parent=11 // pred_fallthru
          _
        // Predicated region
        $region37: #{vae_forward.1} parent=11 // pred_check
          %p326 = pneg %p220
        $region38: #{vae_forward.1} parent=11 // pred_check_branch
          %328 = sbr.rel (%p326) target = $region40
        $region39: #{vae_forward.1} parent=11 // pred_region
          _
        $region40: #{vae_forward.1} parent=11 // pred_fallthru
          _
        // Predicated region
        $region41: #{vae_forward.1} parent=11 // pred_check
          %p329 = pneg %p241
        $region42: #{vae_forward.1} parent=11 // pred_check_branch
          %331 = sbr.rel (%p329) target = $region44
        $region43: #{vae_forward.1} parent=11 // pred_region
          _
        $region44: #{vae_forward.1} parent=11 // pred_fallthru
          _
      $region12: #{vae_forward.1} parent=5 // pred_fallthru
        _
      %p332 = scmp.lt.s32.totalorder %s21, 4
      // Predicated region
      $region45: #{vae_forward.1} parent=5 // pred_check
        %p333 = pneg %p332
      $region46: #{vae_forward.1} parent=5 // pred_check_branch
        %335 = sbr.rel (%p333) target = $region48
      $region47: #{vae_forward.1} parent=5 // pred_region
        // Predicated region
        $region49: #{vae_forward.1} parent=47 // pred_check
          %p336 = pneg %p41
        $region50: #{vae_forward.1} parent=47 // pred_check_branch
          %338 = sbr.rel (%p336) target = $region52
        $region51: #{vae_forward.1} parent=47 // pred_region
          %s339 = smul.u32 2, %s21
          %p340 = scmp.lt.s32.totalorder %s339, 7
          %s341 = scalar_select %p340, %s339, 7
          %s342 = smul.addr %s341, 7
          %s343 = smul.addr %s342, 8
          %s344 = scalar_lea.vmem %s0, %s343
          %s345 = smul.u32 2, %s21
        $region52: #{vae_forward.1} parent=47 // pred_fallthru
          _
        // Predicated region
        $region53: #{vae_forward.1} parent=47 // pred_check
          %p346 = pneg %p67
        $region54: #{vae_forward.1} parent=47 // pred_check_branch
          %348 = sbr.rel (%p346) target = $region56
        $region55: #{vae_forward.1} parent=47 // pred_region
          %s349 = smul.u32 2, %s21
          %p350 = scmp.lt.s32.totalorder %s349, 7
          %s351 = scalar_select %p350, %s349, 7
          %s352 = smul.addr %s351, 8
          %s353 = scalar_lea.vmem %s1, %s352
          %s354 = smul.u32 2, %s21
        $region56: #{vae_forward.1} parent=47 // pred_fallthru
          _
      $region48: #{vae_forward.1} parent=5 // pred_fallthru
        _
      %p355 = scmp.le.s32.totalorder 1, %s21
      %p356 = scmp.lt.s32.totalorder %s21, 5
      %p357 = pnand %p355, %p356
      %p358 = pneg %p357
      // Predicated region
      $region57: #{vae_forward.1} parent=5 // pred_check
        _
      $region58: #{vae_forward.1} parent=5 // pred_check_branch
        %360 = sbr.rel (%p357) target = $region60
      $region59: #{vae_forward.1} parent=5 // pred_region
        %s361 = ssub.s32 %s21, 1
        %s362 = smul.u32 2, %s26
        %p363 = scmp.lt.s32.totalorder %s362, 7
        %s364 = scalar_select %p363, %s362, 7
        %s365 = smul.addr %s364, 7
        %s366 = smul.addr %s365, 8
        %s367 = scalar_lea.vmem %s0, %s366
        %p368 = pneg %p47
        %p369 = pneg %p44
        %s370 = smul.u32 2, %s26
        %p371 = scmp.lt.s32.totalorder %s370, 7
        %s372 = scalar_select %p371, %s370, 7
        %s373 = smul.addr %s372, 8
        %s374 = scalar_lea.vmem %s1, %s373
        %p375 = pneg %p73
        %p376 = pneg %p70
        %p377 = pneg %p94
        %p378 = pneg %p91
        %p379 = pneg %p115
        %p380 = pneg %p112
        %p381 = pneg %p136
        %p382 = pneg %p133
        %p383 = pneg %p157
        %p384 = pneg %p154
        %p385 = pneg %p178
        %p386 = pneg %p175
        %p387 = pneg %p199
        %p388 = pneg %p196
        %p389 = pneg %p220
        %p390 = pneg %p217
        %p391 = pneg %p241
        %p392 = pneg %p238
        %p393 = pneg %p267
        %p394 = pneg %p264
        %s395 = sand.u32 %s254, 1
        %s396 = scalar_lea.sflag [#allocation3], %s395
        %s397 = sand.u32 %s254, 1
        %s398 = smul.addr %s397, 112
        %s399 = scalar_lea.vmem [#allocation2], %s398
        %p400 = pneg %p293
        %p401 = pneg %p290
        %s402 = smul.u32 2, %s26
        %p403 = scmp.lt.s32.totalorder %s402, 7
        %s404 = scalar_select %p403, %s402, 7
        %s405 = smul.addr %s404, 8
        %s406 = scalar_lea.vmem %s11, %s405
        %s407 = smul.u32 2, %s26
        %p408 = scmp.lt.s32.totalorder %s407, 7
        %s409 = scalar_select %p408, %s407, 7
        %s410 = smul.addr %s409, 7
        %s411 = smul.addr %s410, 8
        %s412 = scalar_lea.vmem %s0, %s411
        %s413 = smul.u32 2, %s26
        %s414 = smul.u32 2, %s26
        %p415 = scmp.lt.s32.totalorder %s414, 7
        %s416 = scalar_select %p415, %s414, 7
        %s417 = smul.addr %s416, 8
        %s418 = scalar_lea.vmem %s1, %s417
        %s419 = smul.u32 2, %s26
        %s420 = smul.u32 2, %s26
        %s421 = smul.u32 2, %s26
        %p422 = scmp.lt.s32.totalorder %s421, 7
        %s423 = scalar_select %p422, %s421, 7
        %s424 = smul.addr %s423, 8
        %s425 = scalar_lea.vmem %s11, %s424
        %s426 = smul.u32 2, %s26
        %v428 = vld [vmem:[%s412] sm:$0xff]
        %v429 = vld [vmem:[%s412 + $0x8] sm:$0xff]
        %v430 = vld [vmem:[%s412 + $0x10] sm:$0xff]
        %v431 = vld [vmem:[%s412 + $0x18] sm:$0xff]
        %v432 = vld [vmem:[%s412 + $0x20] sm:$0xff]
        %v433 = vld [vmem:[%s412 + $0x28] sm:$0xff]
        %v434 = vld [vmem:[%s412 + $0x30] sm:$0xff]
        %v435 = vld [vmem:[%s412 + $0x38] sm:$0xff]
        %v436 = vld [vmem:[%s412 + $0x40] sm:$0xff]
        %v437 = vld [vmem:[%s412 + $0x48] sm:$0xff]
        %v438 = vld [vmem:[%s412 + $0x50] sm:$0xff]
        %v439 = vld [vmem:[%s412 + $0x58] sm:$0xff]
        %v440 = vld [vmem:[%s412 + $0x60] sm:$0xff]
        %v441 = vld [vmem:[%s412 + $0x68] sm:$0xff]
        %v442 = vpack.c.bf16 %v435, %v428
        %v443 = vpack.c.bf16 %v436, %v429
        %v444 = vpack.c.bf16 %v437, %v430
        %v445 = vpack.c.bf16 %v438, %v431
        %v446 = vpack.c.bf16 %v439, %v432
        %v447 = vpack.c.bf16 %v440, %v433
        %v448 = vpack.c.bf16 %v441, %v434
        %v449 = vld [vmem:[%s2] sm:$0xff]
        %v450 = vld [vmem:[%s2 + $0x8] sm:$0xff]
        %v451 = vld [vmem:[%s2 + $0x10] sm:$0xff]
        %v452 = vld [vmem:[%s2 + $0x18] sm:$0xff]
        %v453 = vld [vmem:[%s2 + $0x20] sm:$0xff]
        %v454 = vld [vmem:[%s2 + $0x28] sm:$0xff]
        %v455 = vld [vmem:[%s2 + $0x30] sm:$0xff]
        %v456 = vld [vmem:[%s2 + $0x38] sm:$0xff]
        %v457 = vld [vmem:[%s2 + $0x40] sm:$0xff]
        %v458 = vld [vmem:[%s2 + $0x48] sm:$0xff]
        %v459 = vld [vmem:[%s2 + $0x50] sm:$0xff]
        %v460 = vld [vmem:[%s2 + $0x58] sm:$0xff]
        %v461 = vld [vmem:[%s2 + $0x60] sm:$0xff]
        %v462 = vld [vmem:[%s2 + $0x68] sm:$0xff]
        %v463 = vld [vmem:[%s2 + $0x70] sm:$0xff]
        %v464 = vld [vmem:[%s2 + $0x78] sm:$0xff]
        %v465 = vld [vmem:[%s2 + $0x80] sm:$0xff]
        %v466 = vld [vmem:[%s2 + $0x88] sm:$0xff]
        %v467 = vld [vmem:[%s2 + $0x90] sm:$0xff]
        %v468 = vld [vmem:[%s2 + $0x98] sm:$0xff]
        %v469 = vld [vmem:[%s2 + $0xa0] sm:$0xff]
        %v470 = vld [vmem:[%s2 + $0xa8] sm:$0xff]
        %v471 = vld [vmem:[%s2 + $0xb0] sm:$0xff]
        %v472 = vld [vmem:[%s2 + $0xb8] sm:$0xff]
        %v473 = vld [vmem:[%s2 + $0xc0] sm:$0xff]
        %v474 = vld [vmem:[%s2 + $0xc8] sm:$0xff]
        %v475 = vld [vmem:[%s2 + $0xd0] sm:$0xff]
        %v476 = vld [vmem:[%s2 + $0xd8] sm:$0xff]
        %v477 = vld [vmem:[%s2 + $0xe0] sm:$0xff]
        %v478 = vld [vmem:[%s2 + $0xe8] sm:$0xff]
        %v479 = vld [vmem:[%s2 + $0xf0] sm:$0xff]
        %v480 = vld [vmem:[%s2 + $0xf8] sm:$0xff]
        %v481 = vld [vmem:[%s2 + $0x100] sm:$0xff]
        %v482 = vld [vmem:[%s2 + $0x108] sm:$0xff]
        %v483 = vld [vmem:[%s2 + $0x110] sm:$0xff]
        %v484 = vld [vmem:[%s2 + $0x118] sm:$0xff]
        %v485 = vld [vmem:[%s2 + $0x120] sm:$0xff]
        %v486 = vld [vmem:[%s2 + $0x128] sm:$0xff]
        %v487 = vld [vmem:[%s2 + $0x130] sm:$0xff]
        %v488 = vld [vmem:[%s2 + $0x138] sm:$0xff]
        %v489 = vld [vmem:[%s2 + $0x140] sm:$0xff]
        %v490 = vld [vmem:[%s2 + $0x148] sm:$0xff]
        %v491 = vld [vmem:[%s2 + $0x150] sm:$0xff]
        %v492 = vld [vmem:[%s2 + $0x158] sm:$0xff]
        %v493 = vld [vmem:[%s2 + $0x160] sm:$0xff]
        %v494 = vld [vmem:[%s2 + $0x168] sm:$0xff]
        %v495 = vld [vmem:[%s2 + $0x170] sm:$0xff]
        %v496 = vld [vmem:[%s2 + $0x178] sm:$0xff]
        %v497 = vld [vmem:[%s2 + $0x180] sm:$0xff]
        %v498 = vld [vmem:[%s2 + $0x188] sm:$0xff]
        %v499 = vld [vmem:[%s2 + $0x190] sm:$0xff]
        %v500 = vld [vmem:[%s2 + $0x198] sm:$0xff]
        %v501 = vld [vmem:[%s2 + $0x1a0] sm:$0xff]
        %v502 = vld [vmem:[%s2 + $0x1a8] sm:$0xff]
        %v503 = vld [vmem:[%s2 + $0x1b0] sm:$0xff]
        %v504 = vld [vmem:[%s2 + $0x1b8] sm:$0xff]
        %v505 = vld [vmem:[%s2 + $0x1c0] sm:$0xff]
        %v506 = vld [vmem:[%s2 + $0x1c8] sm:$0xff]
        %v507 = vld [vmem:[%s2 + $0x1d0] sm:$0xff]
        %v508 = vld [vmem:[%s2 + $0x1d8] sm:$0xff]
        %v509 = vld [vmem:[%s2 + $0x1e0] sm:$0xff]
        %v510 = vld [vmem:[%s2 + $0x1e8] sm:$0xff]
        %v511 = vld [vmem:[%s2 + $0x1f0] sm:$0xff]
        %v512 = vld [vmem:[%s2 + $0x1f8] sm:$0xff]
        %v513 = vld [vmem:[%s2 + $0x200] sm:$0xff]
        %v514 = vld [vmem:[%s2 + $0x208] sm:$0xff]
        %v515 = vld [vmem:[%s2 + $0x210] sm:$0xff]
        %v516 = vld [vmem:[%s2 + $0x218] sm:$0xff]
        %v517 = vld [vmem:[%s2 + $0x220] sm:$0xff]
        %v518 = vld [vmem:[%s2 + $0x228] sm:$0xff]
        %v519 = vld [vmem:[%s2 + $0x230] sm:$0xff]
        %v520 = vld [vmem:[%s2 + $0x238] sm:$0xff]
        %v521 = vld [vmem:[%s2 + $0x240] sm:$0xff]
        %v522 = vld [vmem:[%s2 + $0x248] sm:$0xff]
        %v523 = vld [vmem:[%s2 + $0x250] sm:$0xff]
        %v524 = vld [vmem:[%s2 + $0x258] sm:$0xff]
        %v525 = vld [vmem:[%s2 + $0x260] sm:$0xff]
        %v526 = vld [vmem:[%s2 + $0x268] sm:$0xff]
        %v527 = vld [vmem:[%s2 + $0x270] sm:$0xff]
        %v528 = vld [vmem:[%s2 + $0x278] sm:$0xff]
        %v529 = vld [vmem:[%s2 + $0x280] sm:$0xff]
        %v530 = vld [vmem:[%s2 + $0x288] sm:$0xff]
        %v531 = vld [vmem:[%s2 + $0x290] sm:$0xff]
        %v532 = vld [vmem:[%s2 + $0x298] sm:$0xff]
        %v533 = vld [vmem:[%s2 + $0x2a0] sm:$0xff]
        %v534 = vld [vmem:[%s2 + $0x2a8] sm:$0xff]
        %v535 = vld [vmem:[%s2 + $0x2b0] sm:$0xff]
        %v536 = vld [vmem:[%s2 + $0x2b8] sm:$0xff]
        %v537 = vld [vmem:[%s2 + $0x2c0] sm:$0xff]
        %v538 = vld [vmem:[%s2 + $0x2c8] sm:$0xff]
        %v539 = vld [vmem:[%s2 + $0x2d0] sm:$0xff]
        %v540 = vld [vmem:[%s2 + $0x2d8] sm:$0xff]
        %v541 = vld [vmem:[%s2 + $0x2e0] sm:$0xff]
        %v542 = vld [vmem:[%s2 + $0x2e8] sm:$0xff]
        %v543 = vld [vmem:[%s2 + $0x2f0] sm:$0xff]
        %v544 = vld [vmem:[%s2 + $0x2f8] sm:$0xff]
        %v545 = vld [vmem:[%s2 + $0x300] sm:$0xff]
        %v546 = vld [vmem:[%s2 + $0x308] sm:$0xff]
        %v547 = vld [vmem:[%s2 + $0x310] sm:$0xff]
        %v548 = vld [vmem:[%s2 + $0x318] sm:$0xff]
        %v549 = vld [vmem:[%s2 + $0x320] sm:$0xff]
        %v550 = vld [vmem:[%s2 + $0x328] sm:$0xff]
        %v551 = vld [vmem:[%s2 + $0x330] sm:$0xff]
        %v552 = vld [vmem:[%s2 + $0x338] sm:$0xff]
        %v553 = vld [vmem:[%s2 + $0x340] sm:$0xff]
        %v554 = vld [vmem:[%s2 + $0x348] sm:$0xff]
        %v555 = vld [vmem:[%s2 + $0x350] sm:$0xff]
        %v556 = vld [vmem:[%s2 + $0x358] sm:$0xff]
        %v557 = vld [vmem:[%s2 + $0x360] sm:$0xff]
        %v558 = vld [vmem:[%s2 + $0x368] sm:$0xff]
        %v559 = vld [vmem:[%s2 + $0x370] sm:$0xff]
        %v560 = vld [vmem:[%s2 + $0x378] sm:$0xff]
        %v561 = vld [vmem:[%s2 + $0x380] sm:$0xff]
        %v562 = vld [vmem:[%s2 + $0x388] sm:$0xff]
        %v563 = vld [vmem:[%s2 + $0x390] sm:$0xff]
        %v564 = vld [vmem:[%s2 + $0x398] sm:$0xff]
        %v565 = vld [vmem:[%s2 + $0x3a0] sm:$0xff]
        %v566 = vld [vmem:[%s2 + $0x3a8] sm:$0xff]
        %v567 = vld [vmem:[%s2 + $0x3b0] sm:$0xff]
        %v568 = vld [vmem:[%s2 + $0x3b8] sm:$0xff]
        %v569 = vld [vmem:[%s2 + $0x3c0] sm:$0xff]
        %v570 = vld [vmem:[%s2 + $0x3c8] sm:$0xff]
        %v571 = vld [vmem:[%s2 + $0x3d0] sm:$0xff]
        %v572 = vld [vmem:[%s2 + $0x3d8] sm:$0xff]
        %v573 = vld [vmem:[%s2 + $0x3e0] sm:$0xff]
        %v574 = vld [vmem:[%s2 + $0x3e8] sm:$0xff]
        %v575 = vld [vmem:[%s2 + $0x3f0] sm:$0xff]
        %v576 = vld [vmem:[%s2 + $0x3f8] sm:$0xff]
        %v577 = vld [vmem:[%s2 + $0x400] sm:$0xff]
        %v578 = vld [vmem:[%s2 + $0x408] sm:$0xff]
        %v579 = vld [vmem:[%s2 + $0x410] sm:$0xff]
        %v580 = vld [vmem:[%s2 + $0x418] sm:$0xff]
        %v581 = vld [vmem:[%s2 + $0x420] sm:$0xff]
        %v582 = vld [vmem:[%s2 + $0x428] sm:$0xff]
        %v583 = vld [vmem:[%s2 + $0x430] sm:$0xff]
        %v584 = vld [vmem:[%s2 + $0x438] sm:$0xff]
        %v585 = vld [vmem:[%s2 + $0x440] sm:$0xff]
        %v586 = vld [vmem:[%s2 + $0x448] sm:$0xff]
        %v587 = vld [vmem:[%s2 + $0x450] sm:$0xff]
        %v588 = vld [vmem:[%s2 + $0x458] sm:$0xff]
        %v589 = vld [vmem:[%s2 + $0x460] sm:$0xff]
        %v590 = vld [vmem:[%s2 + $0x468] sm:$0xff]
        %v591 = vld [vmem:[%s2 + $0x470] sm:$0xff]
        %v592 = vld [vmem:[%s2 + $0x478] sm:$0xff]
        %v593 = vld [vmem:[%s2 + $0x480] sm:$0xff]
        %v594 = vld [vmem:[%s2 + $0x488] sm:$0xff]
        %v595 = vld [vmem:[%s2 + $0x490] sm:$0xff]
        %v596 = vld [vmem:[%s2 + $0x498] sm:$0xff]
        %v597 = vld [vmem:[%s2 + $0x4a0] sm:$0xff]
        %v598 = vld [vmem:[%s2 + $0x4a8] sm:$0xff]
        %v599 = vld [vmem:[%s2 + $0x4b0] sm:$0xff]
        %v600 = vld [vmem:[%s2 + $0x4b8] sm:$0xff]
        %v601 = vld [vmem:[%s2 + $0x4c0] sm:$0xff]
        %v602 = vld [vmem:[%s2 + $0x4c8] sm:$0xff]
        %v603 = vld [vmem:[%s2 + $0x4d0] sm:$0xff]
        %v604 = vld [vmem:[%s2 + $0x4d8] sm:$0xff]
        %v605 = vld [vmem:[%s2 + $0x4e0] sm:$0xff]
        %v606 = vld [vmem:[%s2 + $0x4e8] sm:$0xff]
        %v607 = vld [vmem:[%s2 + $0x4f0] sm:$0xff]
        %v608 = vld [vmem:[%s2 + $0x4f8] sm:$0xff]
        %v609 = vld [vmem:[%s2 + $0x500] sm:$0xff]
        %v610 = vld [vmem:[%s2 + $0x508] sm:$0xff]
        %v611 = vld [vmem:[%s2 + $0x510] sm:$0xff]
        %v612 = vld [vmem:[%s2 + $0x518] sm:$0xff]
        %v613 = vld [vmem:[%s2 + $0x520] sm:$0xff]
        %v614 = vld [vmem:[%s2 + $0x528] sm:$0xff]
        %v615 = vld [vmem:[%s2 + $0x530] sm:$0xff]
        %v616 = vld [vmem:[%s2 + $0x538] sm:$0xff]
        %v617 = vld [vmem:[%s2 + $0x540] sm:$0xff]
        %v618 = vld [vmem:[%s2 + $0x548] sm:$0xff]
        %v619 = vld [vmem:[%s2 + $0x550] sm:$0xff]
        %v620 = vld [vmem:[%s2 + $0x558] sm:$0xff]
        %v621 = vld [vmem:[%s2 + $0x560] sm:$0xff]
        %v622 = vld [vmem:[%s2 + $0x568] sm:$0xff]
        %v623 = vld [vmem:[%s2 + $0x570] sm:$0xff]
        %v624 = vld [vmem:[%s2 + $0x578] sm:$0xff]
        %v625 = vld [vmem:[%s2 + $0x580] sm:$0xff]
        %v626 = vld [vmem:[%s2 + $0x588] sm:$0xff]
        %v627 = vld [vmem:[%s2 + $0x590] sm:$0xff]
        %v628 = vld [vmem:[%s2 + $0x598] sm:$0xff]
        %v629 = vld [vmem:[%s2 + $0x5a0] sm:$0xff]
        %v630 = vld [vmem:[%s2 + $0x5a8] sm:$0xff]
        %v631 = vld [vmem:[%s2 + $0x5b0] sm:$0xff]
        %v632 = vld [vmem:[%s2 + $0x5b8] sm:$0xff]
        %v633 = vld [vmem:[%s2 + $0x5c0] sm:$0xff]
        %v634 = vld [vmem:[%s2 + $0x5c8] sm:$0xff]
        %v635 = vld [vmem:[%s2 + $0x5d0] sm:$0xff]
        %v636 = vld [vmem:[%s2 + $0x5d8] sm:$0xff]
        %v637 = vld [vmem:[%s2 + $0x5e0] sm:$0xff]
        %v638 = vld [vmem:[%s2 + $0x5e8] sm:$0xff]
        %v639 = vld [vmem:[%s2 + $0x5f0] sm:$0xff]
        %v640 = vld [vmem:[%s2 + $0x5f8] sm:$0xff]
        %v641 = vld [vmem:[%s2 + $0x600] sm:$0xff]
        %v642 = vld [vmem:[%s2 + $0x608] sm:$0xff]
        %v643 = vld [vmem:[%s2 + $0x610] sm:$0xff]
        %v644 = vld [vmem:[%s2 + $0x618] sm:$0xff]
        %v645 = vld [vmem:[%s3] sm:$0xf]
        %v647 = vlaneseq
        %v648 = vshrl.u32 %v647, 7
        %v649 = vsub.s32 0, %v648
        %v650 = vrot.slane %v645, %v649
        %v651 = vlaneseq
        %v652 = vshrl.u32 %v651, 7
        %v653 = vsub.s32 1, %v652
        %v654 = vrot.slane %v645, %v653
        %v655 = vlaneseq
        %v656 = vshrl.u32 %v655, 7
        %v657 = vsub.s32 2, %v656
        %v658 = vrot.slane %v645, %v657
        %v659 = vlaneseq
        %v660 = vshrl.u32 %v659, 7
        %v661 = vsub.s32 3, %v660
        %v662 = vrot.slane %v645, %v661
        %v863 = vunpack.c.l.b16 %v449
        %v864 = vunpack.c.h.b16 %v449
        %v865 = vunpack.c.l.b16 %v450
        %v866 = vunpack.c.h.b16 %v450
        %v867 = vunpack.c.l.b16 %v451
        %v868 = vunpack.c.h.b16 %v451
        %v869 = vunpack.c.l.b16 %v452
        %v870 = vunpack.c.h.b16 %v452
        %v871 = vunpack.c.l.b16 %v453
        %v872 = vunpack.c.h.b16 %v453
        %v873 = vunpack.c.l.b16 %v454
        %v874 = vunpack.c.h.b16 %v454
        %v875 = vunpack.c.l.b16 %v455
        %v876 = vunpack.c.h.b16 %v455
        %v877 = vunpack.c.l.b16 %v456
        %v878 = vunpack.c.h.b16 %v456
        %v879 = vunpack.c.l.b16 %v457
        %v880 = vunpack.c.h.b16 %v457
        %v881 = vunpack.c.l.b16 %v458
        %v882 = vunpack.c.h.b16 %v458
        %v883 = vunpack.c.l.b16 %v459
        %v884 = vunpack.c.h.b16 %v459
        %v885 = vunpack.c.l.b16 %v460
        %v886 = vunpack.c.h.b16 %v460
        %v887 = vunpack.c.l.b16 %v461
        %v888 = vunpack.c.h.b16 %v461
        %v889 = vunpack.c.l.b16 %v462
        %v890 = vunpack.c.h.b16 %v462
        %v891 = vunpack.c.l.b16 %v463
        %v892 = vunpack.c.h.b16 %v463
        %v893 = vunpack.c.l.b16 %v464
        %v894 = vunpack.c.h.b16 %v464
        %v895 = vunpack.c.l.b16 %v465
        %v896 = vunpack.c.h.b16 %v465
        %v897 = vunpack.c.l.b16 %v466
        %v898 = vunpack.c.h.b16 %v466
        %v899 = vunpack.c.l.b16 %v467
        %v900 = vunpack.c.h.b16 %v467
        %v901 = vunpack.c.l.b16 %v468
        %v902 = vunpack.c.h.b16 %v468
        %v903 = vunpack.c.l.b16 %v469
        %v904 = vunpack.c.h.b16 %v469
        %v905 = vunpack.c.l.b16 %v470
        %v906 = vunpack.c.h.b16 %v470
        %v907 = vunpack.c.l.b16 %v471
        %v908 = vunpack.c.h.b16 %v471
        %v909 = vunpack.c.l.b16 %v472
        %v910 = vunpack.c.h.b16 %v472
        %v911 = vunpack.c.l.b16 %v473
        %v912 = vunpack.c.h.b16 %v473
        %v913 = vunpack.c.l.b16 %v474
        %v914 = vunpack.c.h.b16 %v474
        %v915 = vunpack.c.l.b16 %v475
        %v916 = vunpack.c.h.b16 %v475
        %v917 = vunpack.c.l.b16 %v476
        %v918 = vunpack.c.h.b16 %v476
        %v919 = vunpack.c.l.b16 %v477
        %v920 = vunpack.c.h.b16 %v477
        %v921 = vunpack.c.l.b16 %v478
        %v922 = vunpack.c.h.b16 %v478
        %v923 = vunpack.c.l.b16 %v479
        %v924 = vunpack.c.h.b16 %v479
        %v925 = vunpack.c.l.b16 %v480
        %v926 = vunpack.c.h.b16 %v480
        %v927 = vunpack.c.l.b16 %v481
        %v928 = vunpack.c.h.b16 %v481
        %v929 = vunpack.c.l.b16 %v482
        %v930 = vunpack.c.h.b16 %v482
        %v931 = vunpack.c.l.b16 %v483
        %v932 = vunpack.c.h.b16 %v483
        %v933 = vunpack.c.l.b16 %v484
        %v934 = vunpack.c.h.b16 %v484
        %v935 = vunpack.c.l.b16 %v485
        %v936 = vunpack.c.h.b16 %v485
        %v937 = vunpack.c.l.b16 %v486
        %v938 = vunpack.c.h.b16 %v486
        %v939 = vunpack.c.l.b16 %v487
        %v940 = vunpack.c.h.b16 %v487
        %v941 = vunpack.c.l.b16 %v488
        %v942 = vunpack.c.h.b16 %v488
        %v943 = vunpack.c.l.b16 %v489
        %v944 = vunpack.c.h.b16 %v489
        %v945 = vunpack.c.l.b16 %v490
        %v946 = vunpack.c.h.b16 %v490
        %v947 = vunpack.c.l.b16 %v491
        %v948 = vunpack.c.h.b16 %v491
        %v949 = vunpack.c.l.b16 %v492
        %v950 = vunpack.c.h.b16 %v492
        %v951 = vunpack.c.l.b16 %v493
        %v952 = vunpack.c.h.b16 %v493
        %v953 = vunpack.c.l.b16 %v494
        %v954 = vunpack.c.h.b16 %v494
        %v955 = vunpack.c.l.b16 %v495
        %v956 = vunpack.c.h.b16 %v495
        %v957 = vunpack.c.l.b16 %v496
        %v958 = vunpack.c.h.b16 %v496
        %v959 = vunpack.c.l.b16 %v497
        %v960 = vunpack.c.h.b16 %v497
        %v961 = vunpack.c.l.b16 %v498
        %v962 = vunpack.c.h.b16 %v498
        %v963 = vunpack.c.l.b16 %v499
        %v964 = vunpack.c.h.b16 %v499
        %v965 = vunpack.c.l.b16 %v500
        %v966 = vunpack.c.h.b16 %v500
        %v967 = vunpack.c.l.b16 %v501
        %v968 = vunpack.c.h.b16 %v501
        %v969 = vunpack.c.l.b16 %v502
        %v970 = vunpack.c.h.b16 %v502
        %v971 = vunpack.c.l.b16 %v503
        %v972 = vunpack.c.h.b16 %v503
        %v973 = vunpack.c.l.b16 %v504
        %v974 = vunpack.c.h.b16 %v504
        %v975 = vunpack.c.l.b16 %v505
        %v976 = vunpack.c.h.b16 %v505
        %v977 = vunpack.c.l.b16 %v506
        %v978 = vunpack.c.h.b16 %v506
        %v979 = vunpack.c.l.b16 %v507
        %v980 = vunpack.c.h.b16 %v507
        %v981 = vunpack.c.l.b16 %v508
        %v982 = vunpack.c.h.b16 %v508
        %v983 = vunpack.c.l.b16 %v509
        %v984 = vunpack.c.h.b16 %v509
        %v985 = vunpack.c.l.b16 %v510
        %v986 = vunpack.c.h.b16 %v510
        %v987 = vunpack.c.l.b16 %v511
        %v988 = vunpack.c.h.b16 %v511
        %v989 = vunpack.c.l.b16 %v512
        %v990 = vunpack.c.h.b16 %v512
        %v991 = vunpack.c.l.b16 %v513
        %v992 = vunpack.c.h.b16 %v513
        %v993 = vunpack.c.l.b16 %v514
        %v994 = vunpack.c.h.b16 %v514
        %v995 = vunpack.c.l.b16 %v515
        %v996 = vunpack.c.h.b16 %v515
        %v997 = vunpack.c.l.b16 %v516
        %v998 = vunpack.c.h.b16 %v516
        %v999 = vunpack.c.l.b16 %v517
        %v1000 = vunpack.c.h.b16 %v517
        %v1001 = vunpack.c.l.b16 %v518
        %v1002 = vunpack.c.h.b16 %v518
        %v1003 = vunpack.c.l.b16 %v519
        %v1004 = vunpack.c.h.b16 %v519
        %v1005 = vunpack.c.l.b16 %v520
        %v1006 = vunpack.c.h.b16 %v520
        %v1007 = vunpack.c.l.b16 %v521
        %v1008 = vunpack.c.h.b16 %v521
        %v1009 = vunpack.c.l.b16 %v522
        %v1010 = vunpack.c.h.b16 %v522
        %v1011 = vunpack.c.l.b16 %v523
        %v1012 = vunpack.c.h.b16 %v523
        %v1013 = vunpack.c.l.b16 %v524
        %v1014 = vunpack.c.h.b16 %v524
        %v1015 = vunpack.c.l.b16 %v525
        %v1016 = vunpack.c.h.b16 %v525
        %v1017 = vunpack.c.l.b16 %v526
        %v1018 = vunpack.c.h.b16 %v526
        %v1019 = vunpack.c.l.b16 %v527
        %v1020 = vunpack.c.h.b16 %v527
        %v1021 = vunpack.c.l.b16 %v528
        %v1022 = vunpack.c.h.b16 %v528
        %v1023 = vunpack.c.l.b16 %v529
        %v1024 = vunpack.c.h.b16 %v529
        %v1025 = vunpack.c.l.b16 %v530
        %v1026 = vunpack.c.h.b16 %v530
        %v1027 = vunpack.c.l.b16 %v531
        %v1028 = vunpack.c.h.b16 %v531
        %v1029 = vunpack.c.l.b16 %v532
        %v1030 = vunpack.c.h.b16 %v532
        %v1031 = vunpack.c.l.b16 %v533
        %v1032 = vunpack.c.h.b16 %v533
        %v1033 = vunpack.c.l.b16 %v534
        %v1034 = vunpack.c.h.b16 %v534
        %v1035 = vunpack.c.l.b16 %v535
        %v1036 = vunpack.c.h.b16 %v535
        %v1037 = vunpack.c.l.b16 %v536
        %v1038 = vunpack.c.h.b16 %v536
        %v1039 = vunpack.c.l.b16 %v537
        %v1040 = vunpack.c.h.b16 %v537
        %v1041 = vunpack.c.l.b16 %v538
        %v1042 = vunpack.c.h.b16 %v538
        %v1043 = vunpack.c.l.b16 %v539
        %v1044 = vunpack.c.h.b16 %v539
        %v1045 = vunpack.c.l.b16 %v540
        %v1046 = vunpack.c.h.b16 %v540
        %v1047 = vunpack.c.l.b16 %v541
        %v1048 = vunpack.c.h.b16 %v541
        %v1049 = vunpack.c.l.b16 %v542
        %v1050 = vunpack.c.h.b16 %v542
        %v1051 = vunpack.c.l.b16 %v543
        %v1052 = vunpack.c.h.b16 %v543
        %v1053 = vunpack.c.l.b16 %v544
        %v1054 = vunpack.c.h.b16 %v544
        %v1055 = vunpack.c.l.b16 %v545
        %v1056 = vunpack.c.h.b16 %v545
        %v1057 = vunpack.c.l.b16 %v546
        %v1058 = vunpack.c.h.b16 %v546
        %v1059 = vunpack.c.l.b16 %v547
        %v1060 = vunpack.c.h.b16 %v547
        %v1061 = vunpack.c.l.b16 %v548
        %v1062 = vunpack.c.h.b16 %v548
        %v1063 = vunpack.c.l.b16 %v549
        %v1064 = vunpack.c.h.b16 %v549
        %v1065 = vunpack.c.l.b16 %v550
        %v1066 = vunpack.c.h.b16 %v550
        %v1067 = vunpack.c.l.b16 %v551
        %v1068 = vunpack.c.h.b16 %v551
        %v1069 = vunpack.c.l.b16 %v552
        %v1070 = vunpack.c.h.b16 %v552
        %v1071 = vunpack.c.l.b16 %v553
        %v1072 = vunpack.c.h.b16 %v553
        %v1073 = vunpack.c.l.b16 %v554
        %v1074 = vunpack.c.h.b16 %v554
        %v1075 = vunpack.c.l.b16 %v555
        %v1076 = vunpack.c.h.b16 %v555
        %v1077 = vunpack.c.l.b16 %v556
        %v1078 = vunpack.c.h.b16 %v556
        %v1079 = vunpack.c.l.b16 %v557
        %v1080 = vunpack.c.h.b16 %v557
        %v1081 = vunpack.c.l.b16 %v558
        %v1082 = vunpack.c.h.b16 %v558
        %v1083 = vunpack.c.l.b16 %v559
        %v1084 = vunpack.c.h.b16 %v559
        %v1085 = vunpack.c.l.b16 %v560
        %v1086 = vunpack.c.h.b16 %v560
        %v1087 = vunpack.c.l.b16 %v561
        %v1088 = vunpack.c.h.b16 %v561
        %v1089 = vunpack.c.l.b16 %v562
        %v1090 = vunpack.c.h.b16 %v562
        %v1091 = vunpack.c.l.b16 %v563
        %v1092 = vunpack.c.h.b16 %v563
        %v1093 = vunpack.c.l.b16 %v564
        %v1094 = vunpack.c.h.b16 %v564
        %v1095 = vunpack.c.l.b16 %v565
        %v1096 = vunpack.c.h.b16 %v565
        %v1097 = vunpack.c.l.b16 %v566
        %v1098 = vunpack.c.h.b16 %v566
        %v1099 = vunpack.c.l.b16 %v567
        %v1100 = vunpack.c.h.b16 %v567
        %v1101 = vunpack.c.l.b16 %v568
        %v1102 = vunpack.c.h.b16 %v568
        %v1103 = vunpack.c.l.b16 %v569
        %v1104 = vunpack.c.h.b16 %v569
        %v1105 = vunpack.c.l.b16 %v570
        %v1106 = vunpack.c.h.b16 %v570
        %v1107 = vunpack.c.l.b16 %v571
        %v1108 = vunpack.c.h.b16 %v571
        %v1109 = vunpack.c.l.b16 %v572
        %v1110 = vunpack.c.h.b16 %v572
        %v1111 = vunpack.c.l.b16 %v573
        %v1112 = vunpack.c.h.b16 %v573
        %v1113 = vunpack.c.l.b16 %v574
        %v1114 = vunpack.c.h.b16 %v574
        %v1115 = vunpack.c.l.b16 %v575
        %v1116 = vunpack.c.h.b16 %v575
        %v1117 = vunpack.c.l.b16 %v576
        %v1118 = vunpack.c.h.b16 %v576
        %v1119 = vunpack.c.l.b16 %v577
        %v1120 = vunpack.c.h.b16 %v577
        %v1121 = vunpack.c.l.b16 %v578
        %v1122 = vunpack.c.h.b16 %v578
        %v1123 = vunpack.c.l.b16 %v579
        %v1124 = vunpack.c.h.b16 %v579
        %v1125 = vunpack.c.l.b16 %v580
        %v1126 = vunpack.c.h.b16 %v580
        %v1127 = vunpack.c.l.b16 %v581
        %v1128 = vunpack.c.h.b16 %v581
        %v1129 = vunpack.c.l.b16 %v582
        %v1130 = vunpack.c.h.b16 %v582
        %v1131 = vunpack.c.l.b16 %v583
        %v1132 = vunpack.c.h.b16 %v583
        %v1133 = vunpack.c.l.b16 %v584
        %v1134 = vunpack.c.h.b16 %v584
        %v1135 = vunpack.c.l.b16 %v585
        %v1136 = vunpack.c.h.b16 %v585
        %v1137 = vunpack.c.l.b16 %v586
        %v1138 = vunpack.c.h.b16 %v586
        %v1139 = vunpack.c.l.b16 %v587
        %v1140 = vunpack.c.h.b16 %v587
        %v1141 = vunpack.c.l.b16 %v588
        %v1142 = vunpack.c.h.b16 %v588
        %v1143 = vunpack.c.l.b16 %v589
        %v1144 = vunpack.c.h.b16 %v589
        %v1145 = vunpack.c.l.b16 %v590
        %v1146 = vunpack.c.h.b16 %v590
        %v1147 = vunpack.c.l.b16 %v591
        %v1148 = vunpack.c.h.b16 %v591
        %v1149 = vunpack.c.l.b16 %v592
        %v1150 = vunpack.c.h.b16 %v592
        %v1151 = vunpack.c.l.b16 %v593
        %v1152 = vunpack.c.h.b16 %v593
        %v1153 = vunpack.c.l.b16 %v594
        %v1154 = vunpack.c.h.b16 %v594
        %v1155 = vunpack.c.l.b16 %v595
        %v1156 = vunpack.c.h.b16 %v595
        %v1157 = vunpack.c.l.b16 %v596
        %v1158 = vunpack.c.h.b16 %v596
        %v1159 = vunpack.c.l.b16 %v597
        %v1160 = vunpack.c.h.b16 %v597
        %v1161 = vunpack.c.l.b16 %v598
        %v1162 = vunpack.c.h.b16 %v598
        %v1163 = vunpack.c.l.b16 %v599
        %v1164 = vunpack.c.h.b16 %v599
        %v1165 = vunpack.c.l.b16 %v600
        %v1166 = vunpack.c.h.b16 %v600
        %v1167 = vunpack.c.l.b16 %v601
        %v1168 = vunpack.c.h.b16 %v601
        %v1169 = vunpack.c.l.b16 %v602
        %v1170 = vunpack.c.h.b16 %v602
        %v1171 = vunpack.c.l.b16 %v603
        %v1172 = vunpack.c.h.b16 %v603
        %v1173 = vunpack.c.l.b16 %v604
        %v1174 = vunpack.c.h.b16 %v604
        %v1175 = vunpack.c.l.b16 %v605
        %v1176 = vunpack.c.h.b16 %v605
        %v1177 = vunpack.c.l.b16 %v606
        %v1178 = vunpack.c.h.b16 %v606
        %v1179 = vunpack.c.l.b16 %v607
        %v1180 = vunpack.c.h.b16 %v607
        %v1181 = vunpack.c.l.b16 %v608
        %v1182 = vunpack.c.h.b16 %v608
        %v1183 = vunpack.c.l.b16 %v609
        %v1184 = vunpack.c.h.b16 %v609
        %v1185 = vunpack.c.l.b16 %v610
        %v1186 = vunpack.c.h.b16 %v610
        %v1187 = vunpack.c.l.b16 %v611
        %v1188 = vunpack.c.h.b16 %v611
        %v1189 = vunpack.c.l.b16 %v612
        %v1190 = vunpack.c.h.b16 %v612
        %v1191 = vunpack.c.l.b16 %v613
        %v1192 = vunpack.c.h.b16 %v613
        %v1193 = vunpack.c.l.b16 %v614
        %v1194 = vunpack.c.h.b16 %v614
        %v1195 = vunpack.c.l.b16 %v615
        %v1196 = vunpack.c.h.b16 %v615
        %v1197 = vunpack.c.l.b16 %v616
        %v1198 = vunpack.c.h.b16 %v616
        %v1199 = vunpack.c.l.b16 %v617
        %v1200 = vunpack.c.h.b16 %v617
        %v1201 = vunpack.c.l.b16 %v618
        %v1202 = vunpack.c.h.b16 %v618
        %v1203 = vunpack.c.l.b16 %v619
        %v1204 = vunpack.c.h.b16 %v619
        %v1205 = vunpack.c.l.b16 %v620
        %v1206 = vunpack.c.h.b16 %v620
        %v1207 = vunpack.c.l.b16 %v621
        %v1208 = vunpack.c.h.b16 %v621
        %v1209 = vunpack.c.l.b16 %v622
        %v1210 = vunpack.c.h.b16 %v622
        %v1211 = vunpack.c.l.b16 %v623
        %v1212 = vunpack.c.h.b16 %v623
        %v1213 = vunpack.c.l.b16 %v624
        %v1214 = vunpack.c.h.b16 %v624
        %v1215 = vunpack.c.l.b16 %v625
        %v1216 = vunpack.c.h.b16 %v625
        %v1217 = vunpack.c.l.b16 %v626
        %v1218 = vunpack.c.h.b16 %v626
        %v1219 = vunpack.c.l.b16 %v627
        %v1220 = vunpack.c.h.b16 %v627
        %v1221 = vunpack.c.l.b16 %v628
        %v1222 = vunpack.c.h.b16 %v628
        %v1223 = vunpack.c.l.b16 %v629
        %v1224 = vunpack.c.h.b16 %v629
        %v1225 = vunpack.c.l.b16 %v630
        %v1226 = vunpack.c.h.b16 %v630
        %v1227 = vunpack.c.l.b16 %v631
        %v1228 = vunpack.c.h.b16 %v631
        %v1229 = vunpack.c.l.b16 %v632
        %v1230 = vunpack.c.h.b16 %v632
        %v1231 = vunpack.c.l.b16 %v633
        %v1232 = vunpack.c.h.b16 %v633
        %v1233 = vunpack.c.l.b16 %v634
        %v1234 = vunpack.c.h.b16 %v634
        %v1235 = vunpack.c.l.b16 %v635
        %v1236 = vunpack.c.h.b16 %v635
        %v1237 = vunpack.c.l.b16 %v636
        %v1238 = vunpack.c.h.b16 %v636
        %v1239 = vunpack.c.l.b16 %v637
        %v1240 = vunpack.c.h.b16 %v637
        %v1241 = vunpack.c.l.b16 %v638
        %v1242 = vunpack.c.h.b16 %v638
        %v1243 = vunpack.c.l.b16 %v639
        %v1244 = vunpack.c.h.b16 %v639
        %v1245 = vunpack.c.l.b16 %v640
        %v1246 = vunpack.c.h.b16 %v640
        %v1247 = vunpack.c.l.b16 %v641
        %v1248 = vunpack.c.h.b16 %v641
        %v1249 = vunpack.c.l.b16 %v642
        %v1250 = vunpack.c.h.b16 %v642
        %v1251 = vunpack.c.l.b16 %v643
        %v1252 = vunpack.c.h.b16 %v643
        %v1253 = vunpack.c.l.b16 %v644
        %v1254 = vunpack.c.h.b16 %v644
        %v1255 = vpack.c.b16 %v867, %v863
        %v1256 = vpack.c.b16 %v868, %v864
        %v1257 = vpack.c.b16 %v869, %v865
        %v1258 = vpack.c.b16 %v870, %v866
        %v1259 = vpack.c.b16 %v875, %v871
        %v1260 = vpack.c.b16 %v876, %v872
        %v1261 = vpack.c.b16 %v877, %v873
        %v1262 = vpack.c.b16 %v878, %v874
        %v1263 = vpack.c.b16 %v883, %v879
        %v1264 = vpack.c.b16 %v884, %v880
        %v1265 = vpack.c.b16 %v885, %v881
        %v1266 = vpack.c.b16 %v886, %v882
        %v1267 = vpack.c.b16 %v891, %v887
        %v1268 = vpack.c.b16 %v892, %v888
        %v1269 = vpack.c.b16 %v893, %v889
        %v1270 = vpack.c.b16 %v894, %v890
        %v1271 = vpack.c.b16 %v899, %v895
        %v1272 = vpack.c.b16 %v900, %v896
        %v1273 = vpack.c.b16 %v901, %v897
        %v1274 = vpack.c.b16 %v902, %v898
        %v1275 = vpack.c.b16 %v907, %v903
        %v1276 = vpack.c.b16 %v908, %v904
        %v1277 = vpack.c.b16 %v909, %v905
        %v1278 = vpack.c.b16 %v910, %v906
        %v1279 = vpack.c.b16 %v915, %v911
        %v1280 = vpack.c.b16 %v916, %v912
        %v1281 = vpack.c.b16 %v917, %v913
        %v1282 = vpack.c.b16 %v918, %v914
        %v1283 = vpack.c.b16 %v923, %v919
        %v1284 = vpack.c.b16 %v924, %v920
        %v1285 = vpack.c.b16 %v925, %v921
        %v1286 = vpack.c.b16 %v926, %v922
        %v1287 = vpack.c.b16 %v931, %v927
        %v1288 = vpack.c.b16 %v932, %v928
        %v1289 = vpack.c.b16 %v933, %v929
        %v1290 = vpack.c.b16 %v934, %v930
        %v1291 = vpack.c.b16 %v939, %v935
        %v1292 = vpack.c.b16 %v940, %v936
        %v1293 = vpack.c.b16 %v941, %v937
        %v1294 = vpack.c.b16 %v942, %v938
        %v1295 = vpack.c.b16 %v947, %v943
        %v1296 = vpack.c.b16 %v948, %v944
        %v1297 = vpack.c.b16 %v949, %v945
        %v1298 = vpack.c.b16 %v950, %v946
        %v1299 = vpack.c.b16 %v955, %v951
        %v1300 = vpack.c.b16 %v956, %v952
        %v1301 = vpack.c.b16 %v957, %v953
        %v1302 = vpack.c.b16 %v958, %v954
        %v1303 = vpack.c.b16 %v963, %v959
        %v1304 = vpack.c.b16 %v964, %v960
        %v1305 = vpack.c.b16 %v965, %v961
        %v1306 = vpack.c.b16 %v966, %v962
        %v1307 = vpack.c.b16 %v971, %v967
        %v1308 = vpack.c.b16 %v972, %v968
        %v1309 = vpack.c.b16 %v973, %v969
        %v1310 = vpack.c.b16 %v974, %v970
        %v1311 = vpack.c.b16 %v979, %v975
        %v1312 = vpack.c.b16 %v980, %v976
        %v1313 = vpack.c.b16 %v981, %v977
        %v1314 = vpack.c.b16 %v982, %v978
        %v1315 = vpack.c.b16 %v987, %v983
        %v1316 = vpack.c.b16 %v988, %v984
        %v1317 = vpack.c.b16 %v989, %v985
        %v1318 = vpack.c.b16 %v990, %v986
        %v1319 = vpack.c.b16 %v995, %v991
        %v1320 = vpack.c.b16 %v996, %v992
        %v1321 = vpack.c.b16 %v997, %v993
        %v1322 = vpack.c.b16 %v998, %v994
        %v1323 = vpack.c.b16 %v1003, %v999
        %v1324 = vpack.c.b16 %v1004, %v1000
        %v1325 = vpack.c.b16 %v1005, %v1001
        %v1326 = vpack.c.b16 %v1006, %v1002
        %v1327 = vpack.c.b16 %v1011, %v1007
        %v1328 = vpack.c.b16 %v1012, %v1008
        %v1329 = vpack.c.b16 %v1013, %v1009
        %v1330 = vpack.c.b16 %v1014, %v1010
        %v1331 = vpack.c.b16 %v1019, %v1015
        %v1332 = vpack.c.b16 %v1020, %v1016
        %v1333 = vpack.c.b16 %v1021, %v1017
        %v1334 = vpack.c.b16 %v1022, %v1018
        %v1335 = vpack.c.b16 %v1027, %v1023
        %v1336 = vpack.c.b16 %v1028, %v1024
        %v1337 = vpack.c.b16 %v1029, %v1025
        %v1338 = vpack.c.b16 %v1030, %v1026
        %v1339 = vpack.c.b16 %v1035, %v1031
        %v1340 = vpack.c.b16 %v1036, %v1032
        %v1341 = vpack.c.b16 %v1037, %v1033
        %v1342 = vpack.c.b16 %v1038, %v1034
        %v1343 = vpack.c.b16 %v1043, %v1039
        %v1344 = vpack.c.b16 %v1044, %v1040
        %v1345 = vpack.c.b16 %v1045, %v1041
        %v1346 = vpack.c.b16 %v1046, %v1042
        %v1347 = vpack.c.b16 %v1051, %v1047
        %v1348 = vpack.c.b16 %v1052, %v1048
        %v1349 = vpack.c.b16 %v1053, %v1049
        %v1350 = vpack.c.b16 %v1054, %v1050
        %v1351 = vpack.c.b16 %v1059, %v1055
        %v1352 = vpack.c.b16 %v1060, %v1056
        %v1353 = vpack.c.b16 %v1061, %v1057
        %v1354 = vpack.c.b16 %v1062, %v1058
        %v1355 = vpack.c.b16 %v1067, %v1063
        %v1356 = vpack.c.b16 %v1068, %v1064
        %v1357 = vpack.c.b16 %v1069, %v1065
        %v1358 = vpack.c.b16 %v1070, %v1066
        %v1359 = vpack.c.b16 %v1075, %v1071
        %v1360 = vpack.c.b16 %v1076, %v1072
        %v1361 = vpack.c.b16 %v1077, %v1073
        %v1362 = vpack.c.b16 %v1078, %v1074
        %v1363 = vpack.c.b16 %v1083, %v1079
        %v1364 = vpack.c.b16 %v1084, %v1080
        %v1365 = vpack.c.b16 %v1085, %v1081
        %v1366 = vpack.c.b16 %v1086, %v1082
        %v1367 = vpack.c.b16 %v1091, %v1087
        %v1368 = vpack.c.b16 %v1092, %v1088
        %v1369 = vpack.c.b16 %v1093, %v1089
        %v1370 = vpack.c.b16 %v1094, %v1090
        %v1371 = vpack.c.b16 %v1099, %v1095
        %v1372 = vpack.c.b16 %v1100, %v1096
        %v1373 = vpack.c.b16 %v1101, %v1097
        %v1374 = vpack.c.b16 %v1102, %v1098
        %v1375 = vpack.c.b16 %v1107, %v1103
        %v1376 = vpack.c.b16 %v1108, %v1104
        %v1377 = vpack.c.b16 %v1109, %v1105
        %v1378 = vpack.c.b16 %v1110, %v1106
        %v1379 = vpack.c.b16 %v1115, %v1111
        %v1380 = vpack.c.b16 %v1116, %v1112
        %v1381 = vpack.c.b16 %v1117, %v1113
        %v1382 = vpack.c.b16 %v1118, %v1114
        %v1383 = vpack.c.b16 %v1123, %v1119
        %v1384 = vpack.c.b16 %v1124, %v1120
        %v1385 = vpack.c.b16 %v1125, %v1121
        %v1386 = vpack.c.b16 %v1126, %v1122
        %v1387 = vpack.c.b16 %v1131, %v1127
        %v1388 = vpack.c.b16 %v1132, %v1128
        %v1389 = vpack.c.b16 %v1133, %v1129
        %v1390 = vpack.c.b16 %v1134, %v1130
        %v1391 = vpack.c.b16 %v1139, %v1135
        %v1392 = vpack.c.b16 %v1140, %v1136
        %v1393 = vpack.c.b16 %v1141, %v1137
        %v1394 = vpack.c.b16 %v1142, %v1138
        %v1395 = vpack.c.b16 %v1147, %v1143
        %v1396 = vpack.c.b16 %v1148, %v1144
        %v1397 = vpack.c.b16 %v1149, %v1145
        %v1398 = vpack.c.b16 %v1150, %v1146
        %v1399 = vpack.c.b16 %v1155, %v1151
        %v1400 = vpack.c.b16 %v1156, %v1152
        %v1401 = vpack.c.b16 %v1157, %v1153
        %v1402 = vpack.c.b16 %v1158, %v1154
        %v1403 = vpack.c.b16 %v1163, %v1159
        %v1404 = vpack.c.b16 %v1164, %v1160
        %v1405 = vpack.c.b16 %v1165, %v1161
        %v1406 = vpack.c.b16 %v1166, %v1162
        %v1407 = vpack.c.b16 %v1171, %v1167
        %v1408 = vpack.c.b16 %v1172, %v1168
        %v1409 = vpack.c.b16 %v1173, %v1169
        %v1410 = vpack.c.b16 %v1174, %v1170
        %v1411 = vpack.c.b16 %v1179, %v1175
        %v1412 = vpack.c.b16 %v1180, %v1176
        %v1413 = vpack.c.b16 %v1181, %v1177
        %v1414 = vpack.c.b16 %v1182, %v1178
        %v1415 = vpack.c.b16 %v1187, %v1183
        %v1416 = vpack.c.b16 %v1188, %v1184
        %v1417 = vpack.c.b16 %v1189, %v1185
        %v1418 = vpack.c.b16 %v1190, %v1186
        %v1419 = vpack.c.b16 %v1195, %v1191
        %v1420 = vpack.c.b16 %v1196, %v1192
        %v1421 = vpack.c.b16 %v1197, %v1193
        %v1422 = vpack.c.b16 %v1198, %v1194
        %v1423 = vpack.c.b16 %v1203, %v1199
        %v1424 = vpack.c.b16 %v1204, %v1200
        %v1425 = vpack.c.b16 %v1205, %v1201
        %v1426 = vpack.c.b16 %v1206, %v1202
        %v1427 = vpack.c.b16 %v1211, %v1207
        %v1428 = vpack.c.b16 %v1212, %v1208
        %v1429 = vpack.c.b16 %v1213, %v1209
        %v1430 = vpack.c.b16 %v1214, %v1210
        %v1431 = vpack.c.b16 %v1219, %v1215
        %v1432 = vpack.c.b16 %v1220, %v1216
        %v1433 = vpack.c.b16 %v1221, %v1217
        %v1434 = vpack.c.b16 %v1222, %v1218
        %v1435 = vpack.c.b16 %v1227, %v1223
        %v1436 = vpack.c.b16 %v1228, %v1224
        %v1437 = vpack.c.b16 %v1229, %v1225
        %v1438 = vpack.c.b16 %v1230, %v1226
        %v1439 = vpack.c.b16 %v1235, %v1231
        %v1440 = vpack.c.b16 %v1236, %v1232
        %v1441 = vpack.c.b16 %v1237, %v1233
        %v1442 = vpack.c.b16 %v1238, %v1234
        %v1443 = vpack.c.b16 %v1243, %v1239
        %v1444 = vpack.c.b16 %v1244, %v1240
        %v1445 = vpack.c.b16 %v1245, %v1241
        %v1446 = vpack.c.b16 %v1246, %v1242
        %v1447 = vpack.c.b16 %v1251, %v1247
        %v1448 = vpack.c.b16 %v1252, %v1248
        %v1449 = vpack.c.b16 %v1253, %v1249
        %v1450 = vpack.c.b16 %v1254, %v1250
        %vm1647 = vcmask 130048
        %v1649 = vsel %vm1647, %v448, 0
        %1651 = vmatprep.subr.bf16.mxu0 %v1256
        %1652 = vmatpush1.bf16.msra.mxu0 %v1255
        %1653 = vmatprep.subr.bf16.mxu0 %v1260
        %1654 = vmatpush1.bf16.msra.mxu0 %v1259
        %1655 = vmatprep.subr.bf16.mxu0 %v1264
        %1656 = vmatpush1.bf16.msra.mxu0 %v1263
        %1657 = vmatprep.subr.bf16.mxu0 %v1268
        %1658 = vmatpush1.bf16.msra.mxu0 %v1267
        %1659 = vmatprep.subr.bf16.mxu0 %v1272
        %1660 = vmatpush1.bf16.msra.mxu0 %v1271
        %1661 = vmatprep.subr.bf16.mxu0 %v1276
        %1662 = vmatpush1.bf16.msra.mxu0 %v1275
        %1663 = vmatprep.subr.bf16.mxu0 %v1280
        %1664 = vmatpush1.bf16.msra.mxu0 %v1279
        %1665 = vmatprep.subr.bf16.mxu0 %v1284
        %1666 = vmatpush1.bf16.msra.mxu0 %v1283
        %1667 = vmatprep.subr.bf16.mxu0 %v1288
        %1668 = vmatpush1.bf16.msra.mxu0 %v1287
        %1669 = vmatprep.subr.bf16.mxu0 %v1292
        %1670 = vmatpush1.bf16.msra.mxu0 %v1291
        %1671 = vmatprep.subr.bf16.mxu0 %v1296
        %1672 = vmatpush1.bf16.msra.mxu0 %v1295
        %1673 = vmatprep.subr.bf16.mxu0 %v1300
        %1674 = vmatpush1.bf16.msra.mxu0 %v1299
        %1675 = vmatprep.subr.bf16.mxu0 %v1304
        %1676 = vmatpush1.bf16.msra.mxu0 %v1303
        %1677 = vmatprep.subr.bf16.mxu0 %v1308
        %1678 = vmatpush1.bf16.msra.mxu0 %v1307
        %1679 = vmatprep.subr.bf16.mxu0 %v1312
        %1680 = vmatpush1.bf16.msra.mxu0 %v1311
        %1681 = vmatprep.subr.bf16.mxu0 %v1316
        %1682 = vmatpush1.bf16.msra.mxu0 %v1315
        %1683 = vmatprep.mubr.bf16.mxu0 %v443
        %1684 = vmatmul.mubr.bf16.gmra.mrb[0].mxu0 %v442
        %v1685 = vpop.f32.mrb[0].mxu0
        %v1686 = vadd.f32 %v650, %v1685
        %v1687 = vpop.f32.mrb[0].mxu0
        %v1688 = vadd.f32 %v654, %v1687
        %v1689 = vpop.f32.mrb[0].mxu0
        %v1690 = vadd.f32 %v650, %v1689
        %v1691 = vpop.f32.mrb[0].mxu0
        %v1692 = vadd.f32 %v654, %v1691
        %1693 = vdwg.mxu0
        %1694 = vmatprep.subr.bf16.mxu0 %v1320
        %1695 = vmatpush1.bf16.msra.mxu0 %v1319
        %1696 = vmatprep.subr.bf16.mxu0 %v1324
        %1697 = vmatpush1.bf16.msra.mxu0 %v1323
        %1698 = vmatprep.subr.bf16.mxu0 %v1328
        %1699 = vmatpush1.bf16.msra.mxu0 %v1327
        %1700 = vmatprep.subr.bf16.mxu0 %v1332
        %1701 = vmatpush1.bf16.msra.mxu0 %v1331
        %1702 = vmatprep.subr.bf16.mxu0 %v1336
        %1703 = vmatpush1.bf16.msra.mxu0 %v1335
        %1704 = vmatprep.subr.bf16.mxu0 %v1340
        %1705 = vmatpush1.bf16.msra.mxu0 %v1339
        %1706 = vmatprep.subr.bf16.mxu0 %v1344
        %1707 = vmatpush1.bf16.msra.mxu0 %v1343
        %1708 = vmatprep.subr.bf16.mxu0 %v1348
        %1709 = vmatpush1.bf16.msra.mxu0 %v1347
        %1710 = vmatprep.subr.bf16.mxu0 %v1352
        %1711 = vmatpush1.bf16.msra.mxu0 %v1351
        %1712 = vmatprep.subr.bf16.mxu0 %v1356
        %1713 = vmatpush1.bf16.msra.mxu0 %v1355
        %1714 = vmatprep.subr.bf16.mxu0 %v1360
        %1715 = vmatpush1.bf16.msra.mxu0 %v1359
        %1716 = vmatprep.subr.bf16.mxu0 %v1364
        %1717 = vmatpush1.bf16.msra.mxu0 %v1363
        %1718 = vmatprep.subr.bf16.mxu0 %v1368
        %1719 = vmatpush1.bf16.msra.mxu0 %v1367
        %1720 = vmatprep.subr.bf16.mxu0 %v1372
        %1721 = vmatpush1.bf16.msra.mxu0 %v1371
        %1722 = vmatprep.subr.bf16.mxu0 %v1376
        %1723 = vmatpush1.bf16.msra.mxu0 %v1375
        %1724 = vmatprep.subr.bf16.mxu0 %v1380
        %1725 = vmatpush1.bf16.msra.mxu0 %v1379
        %1726 = vmatprep.mubr.bf16.mxu0 %v445
        %1727 = vmatmul.mubr.bf16.gmra.mrb[0].mxu0 %v444
        %v1728 = vpop.f32.mrb[0].mxu0
        %v1729 = vadd.f32 %v1686, %v1728
        %v1730 = vpop.f32.mrb[0].mxu0
        %v1731 = vadd.f32 %v1688, %v1730
        %v1732 = vpop.f32.mrb[0].mxu0
        %v1733 = vadd.f32 %v1690, %v1732
        %v1734 = vpop.f32.mrb[0].mxu0
        %v1735 = vadd.f32 %v1692, %v1734
        %1736 = vdwg.mxu0
        %1737 = vmatprep.subr.bf16.mxu0 %v1384
        %1738 = vmatpush1.bf16.msra.mxu0 %v1383
        %1739 = vmatprep.subr.bf16.mxu0 %v1388
        %1740 = vmatpush1.bf16.msra.mxu0 %v1387
        %1741 = vmatprep.subr.bf16.mxu0 %v1392
        %1742 = vmatpush1.bf16.msra.mxu0 %v1391
        %1743 = vmatprep.subr.bf16.mxu0 %v1396
        %1744 = vmatpush1.bf16.msra.mxu0 %v1395
        %1745 = vmatprep.subr.bf16.mxu0 %v1400
        %1746 = vmatpush1.bf16.msra.mxu0 %v1399
        %1747 = vmatprep.subr.bf16.mxu0 %v1404
        %1748 = vmatpush1.bf16.msra.mxu0 %v1403
        %1749 = vmatprep.subr.bf16.mxu0 %v1408
        %1750 = vmatpush1.bf16.msra.mxu0 %v1407
        %1751 = vmatprep.subr.bf16.mxu0 %v1412
        %1752 = vmatpush1.bf16.msra.mxu0 %v1411
        %1753 = vmatprep.subr.bf16.mxu0 %v1416
        %1754 = vmatpush1.bf16.msra.mxu0 %v1415
        %1755 = vmatprep.subr.bf16.mxu0 %v1420
        %1756 = vmatpush1.bf16.msra.mxu0 %v1419
        %1757 = vmatprep.subr.bf16.mxu0 %v1424
        %1758 = vmatpush1.bf16.msra.mxu0 %v1423
        %1759 = vmatprep.subr.bf16.mxu0 %v1428
        %1760 = vmatpush1.bf16.msra.mxu0 %v1427
        %1761 = vmatprep.subr.bf16.mxu0 %v1432
        %1762 = vmatpush1.bf16.msra.mxu0 %v1431
        %1763 = vmatprep.subr.bf16.mxu0 %v1436
        %1764 = vmatpush1.bf16.msra.mxu0 %v1435
        %1765 = vmatprep.subr.bf16.mxu0 %v1440
        %1766 = vmatpush1.bf16.msra.mxu0 %v1439
        %1767 = vmatprep.subr.bf16.mxu0 %v1444
        %1768 = vmatpush1.bf16.msra.mxu0 %v1443
        %1769 = vmatprep.mubr.bf16.mxu0 %v447
        %1770 = vmatmul.mubr.bf16.gmra.mrb[0].mxu0 %v446
        %v1771 = vpop.f32.mrb[0].mxu0
        %v1772 = vadd.f32 %v1729, %v1771
        %v1773 = vpop.f32.mrb[0].mxu0
        %v1774 = vadd.f32 %v1731, %v1773
        %v1775 = vpop.f32.mrb[0].mxu0
        %v1776 = vadd.f32 %v1733, %v1775
        %v1777 = vpop.f32.mrb[0].mxu0
        %v1778 = vadd.f32 %v1735, %v1777
        %1779 = vdwg.mxu0
        %1780 = vmatprep.subr.bf16.mxu0 %v1448
        %1781 = vmatpush1.bf16.msra.mxu0 %v1447
        %1782 = vmatprep.subr.bf16.mxu0 0
        %1783 = vmatpush1.bf16.msra.mxu0 0
        %1784 = vmatprep.subr.bf16.mxu0 0
        %1785 = vmatpush1.bf16.msra.mxu0 0
        %1786 = vmatprep.subr.bf16.mxu0 0
        %1787 = vmatpush1.bf16.msra.mxu0 0
        %1788 = vmatprep.subr.bf16.mxu0 0
        %1789 = vmatpush1.bf16.msra.mxu0 0
        %1790 = vmatprep.subr.bf16.mxu0 0
        %1791 = vmatpush1.bf16.msra.mxu0 0
        %1792 = vmatprep.subr.bf16.mxu0 0
        %1793 = vmatpush1.bf16.msra.mxu0 0
        %1794 = vmatprep.subr.bf16.mxu0 0
        %1795 = vmatpush1.bf16.msra.mxu0 0
        %1796 = vmatprep.subr.bf16.mxu0 0
        %1797 = vmatpush1.bf16.msra.mxu0 0
        %1798 = vmatprep.subr.bf16.mxu0 0
        %1799 = vmatpush1.bf16.msra.mxu0 0
        %1800 = vmatprep.subr.bf16.mxu0 0
        %1801 = vmatpush1.bf16.msra.mxu0 0
        %1802 = vmatprep.subr.bf16.mxu0 0
        %1803 = vmatpush1.bf16.msra.mxu0 0
        %1804 = vmatprep.subr.bf16.mxu0 0
        %1805 = vmatpush1.bf16.msra.mxu0 0
        %1806 = vmatprep.subr.bf16.mxu0 0
        %1807 = vmatpush1.bf16.msra.mxu0 0
        %1808 = vmatprep.subr.bf16.mxu0 0
        %1809 = vmatpush1.bf16.msra.mxu0 0
        %1810 = vmatprep.subr.bf16.mxu0 0
        %1811 = vmatpush1.bf16.msra.mxu0 0
        %1812 = vmatprep.mubr.bf16.mxu0 0
        %1813 = vmatmul.mubr.bf16.gmra.mrb[0].mxu0 %v1649
        %v1814 = vpop.f32.mrb[0].mxu0
        %v1815 = vadd.f32 %v1772, %v1814
        %v1816 = vpop.f32.mrb[0].mxu0
        %v1817 = vadd.f32 %v1774, %v1816
        %v1818 = vpop.f32.mrb[0].mxu0
        %v1819 = vadd.f32 %v1776, %v1818
        %v1820 = vpop.f32.mrb[0].mxu0
        %v1821 = vadd.f32 %v1778, %v1820
        %1822 = vdwg.mxu0
        %1823 = vmatprep.subr.bf16.mxu0 %v1258
        %1824 = vmatpush1.bf16.msra.mxu0 %v1257
        %1825 = vmatprep.subr.bf16.mxu0 %v1262
        %1826 = vmatpush1.bf16.msra.mxu0 %v1261
        %1827 = vmatprep.subr.bf16.mxu0 %v1266
        %1828 = vmatpush1.bf16.msra.mxu0 %v1265
        %1829 = vmatprep.subr.bf16.mxu0 %v1270
        %1830 = vmatpush1.bf16.msra.mxu0 %v1269
        %1831 = vmatprep.subr.bf16.mxu0 %v1274
        %1832 = vmatpush1.bf16.msra.mxu0 %v1273
        %1833 = vmatprep.subr.bf16.mxu0 %v1278
        %1834 = vmatpush1.bf16.msra.mxu0 %v1277
        %1835 = vmatprep.subr.bf16.mxu0 %v1282
        %1836 = vmatpush1.bf16.msra.mxu0 %v1281
        %1837 = vmatprep.subr.bf16.mxu0 %v1286
        %1838 = vmatpush1.bf16.msra.mxu0 %v1285
        %1839 = vmatprep.subr.bf16.mxu0 %v1290
        %1840 = vmatpush1.bf16.msra.mxu0 %v1289
        %1841 = vmatprep.subr.bf16.mxu0 %v1294
        %1842 = vmatpush1.bf16.msra.mxu0 %v1293
        %1843 = vmatprep.subr.bf16.mxu0 %v1298
        %1844 = vmatpush1.bf16.msra.mxu0 %v1297
        %1845 = vmatprep.subr.bf16.mxu0 %v1302
        %1846 = vmatpush1.bf16.msra.mxu0 %v1301
        %1847 = vmatprep.subr.bf16.mxu0 %v1306
        %1848 = vmatpush1.bf16.msra.mxu0 %v1305
        %1849 = vmatprep.subr.bf16.mxu0 %v1310
        %1850 = vmatpush1.bf16.msra.mxu0 %v1309
        %1851 = vmatprep.subr.bf16.mxu0 %v1314
        %1852 = vmatpush1.bf16.msra.mxu0 %v1313
        %1853 = vmatprep.subr.bf16.mxu0 %v1318
        %1854 = vmatpush1.bf16.msra.mxu0 %v1317
        %1855 = vmatprep.mubr.bf16.mxu0 %v443
        %1856 = vmatmul.mubr.bf16.gmra.mrb[0].mxu0 %v442
        %v1857 = vpop.f32.mrb[0].mxu0
        %v1858 = vadd.f32 %v658, %v1857
        %v1859 = vpop.f32.mrb[0].mxu0
        %v1860 = vadd.f32 %v662, %v1859
        %v1861 = vpop.f32.mrb[0].mxu0
        %v1862 = vadd.f32 %v658, %v1861
        %v1863 = vpop.f32.mrb[0].mxu0
        %v1864 = vadd.f32 %v662, %v1863
        %1865 = vdwg.mxu0
        %1866 = vmatprep.subr.bf16.mxu0 %v1322
        %1867 = vmatpush1.bf16.msra.mxu0 %v1321
        %1868 = vmatprep.subr.bf16.mxu0 %v1326
        %1869 = vmatpush1.bf16.msra.mxu0 %v1325
        %1870 = vmatprep.subr.bf16.mxu0 %v1330
        %1871 = vmatpush1.bf16.msra.mxu0 %v1329
        %1872 = vmatprep.subr.bf16.mxu0 %v1334
        %1873 = vmatpush1.bf16.msra.mxu0 %v1333
        %1874 = vmatprep.subr.bf16.mxu0 %v1338
        %1875 = vmatpush1.bf16.msra.mxu0 %v1337
        %1876 = vmatprep.subr.bf16.mxu0 %v1342
        %1877 = vmatpush1.bf16.msra.mxu0 %v1341
        %1878 = vmatprep.subr.bf16.mxu0 %v1346
        %1879 = vmatpush1.bf16.msra.mxu0 %v1345
        %1880 = vmatprep.subr.bf16.mxu0 %v1350
        %1881 = vmatpush1.bf16.msra.mxu0 %v1349
        %1882 = vmatprep.subr.bf16.mxu0 %v1354
        %1883 = vmatpush1.bf16.msra.mxu0 %v1353
        %1884 = vmatprep.subr.bf16.mxu0 %v1358
        %1885 = vmatpush1.bf16.msra.mxu0 %v1357
        %1886 = vmatprep.subr.bf16.mxu0 %v1362
        %1887 = vmatpush1.bf16.msra.mxu0 %v1361
        %1888 = vmatprep.subr.bf16.mxu0 %v1366
        %1889 = vmatpush1.bf16.msra.mxu0 %v1365
        %1890 = vmatprep.subr.bf16.mxu0 %v1370
        %1891 = vmatpush1.bf16.msra.mxu0 %v1369
        %1892 = vmatprep.subr.bf16.mxu0 %v1374
        %1893 = vmatpush1.bf16.msra.mxu0 %v1373
        %1894 = vmatprep.subr.bf16.mxu0 %v1378
        %1895 = vmatpush1.bf16.msra.mxu0 %v1377
        %1896 = vmatprep.subr.bf16.mxu0 %v1382
        %1897 = vmatpush1.bf16.msra.mxu0 %v1381
        %1898 = vmatprep.mubr.bf16.mxu0 %v445
        %1899 = vmatmul.mubr.bf16.gmra.mrb[0].mxu0 %v444
        %v1900 = vpop.f32.mrb[0].mxu0
        %v1901 = vadd.f32 %v1858, %v1900
        %v1902 = vpop.f32.mrb[0].mxu0
        %v1903 = vadd.f32 %v1860, %v1902
        %v1904 = vpop.f32.mrb[0].mxu0
        %v1905 = vadd.f32 %v1862, %v1904
        %v1906 = vpop.f32.mrb[0].mxu0
        %v1907 = vadd.f32 %v1864, %v1906
        %1908 = vdwg.mxu0
        %1909 = vmatprep.subr.bf16.mxu0 %v1386
        %1910 = vmatpush1.bf16.msra.mxu0 %v1385
        %1911 = vmatprep.subr.bf16.mxu0 %v1390
        %1912 = vmatpush1.bf16.msra.mxu0 %v1389
        %1913 = vmatprep.subr.bf16.mxu0 %v1394
        %1914 = vmatpush1.bf16.msra.mxu0 %v1393
        %1915 = vmatprep.subr.bf16.mxu0 %v1398
        %1916 = vmatpush1.bf16.msra.mxu0 %v1397
        %1917 = vmatprep.subr.bf16.mxu0 %v1402
        %1918 = vmatpush1.bf16.msra.mxu0 %v1401
        %1919 = vmatprep.subr.bf16.mxu0 %v1406
        %1920 = vmatpush1.bf16.msra.mxu0 %v1405
        %1921 = vmatprep.subr.bf16.mxu0 %v1410
        %1922 = vmatpush1.bf16.msra.mxu0 %v1409
        %1923 = vmatprep.subr.bf16.mxu0 %v1414
        %1924 = vmatpush1.bf16.msra.mxu0 %v1413
        %1925 = vmatprep.subr.bf16.mxu0 %v1418
        %1926 = vmatpush1.bf16.msra.mxu0 %v1417
        %1927 = vmatprep.subr.bf16.mxu0 %v1422
        %1928 = vmatpush1.bf16.msra.mxu0 %v1421
        %1929 = vmatprep.subr.bf16.mxu0 %v1426
        %1930 = vmatpush1.bf16.msra.mxu0 %v1425
        %1931 = vmatprep.subr.bf16.mxu0 %v1430
        %1932 = vmatpush1.bf16.msra.mxu0 %v1429
        %1933 = vmatprep.subr.bf16.mxu0 %v1434
        %1934 = vmatpush1.bf16.msra.mxu0 %v1433
        %1935 = vmatprep.subr.bf16.mxu0 %v1438
        %1936 = vmatpush1.bf16.msra.mxu0 %v1437
        %1937 = vmatprep.subr.bf16.mxu0 %v1442
        %1938 = vmatpush1.bf16.msra.mxu0 %v1441
        %1939 = vmatprep.subr.bf16.mxu0 %v1446
        %1940 = vmatpush1.bf16.msra.mxu0 %v1445
        %1941 = vmatprep.mubr.bf16.mxu0 %v447
        %1942 = vmatmul.mubr.bf16.gmra.mrb[0].mxu0 %v446
        %v1943 = vpop.f32.mrb[0].mxu0
        %v1944 = vadd.f32 %v1901, %v1943
        %v1945 = vpop.f32.mrb[0].mxu0
        %v1946 = vadd.f32 %v1903, %v1945
        %v1947 = vpop.f32.mrb[0].mxu0
        %v1948 = vadd.f32 %v1905, %v1947
        %v1949 = vpop.f32.mrb[0].mxu0
        %v1950 = vadd.f32 %v1907, %v1949
        %1951 = vdwg.mxu0
        %1952 = vmatprep.subr.bf16.mxu0 %v1450
        %1953 = vmatpush1.bf16.msra.mxu0 %v1449
        %1954 = vmatprep.subr.bf16.mxu0 0
        %1955 = vmatpush1.bf16.msra.mxu0 0
        %1956 = vmatprep.subr.bf16.mxu0 0
        %1957 = vmatpush1.bf16.msra.mxu0 0
        %1958 = vmatprep.subr.bf16.mxu0 0
        %1959 = vmatpush1.bf16.msra.mxu0 0
        %1960 = vmatprep.subr.bf16.mxu0 0
        %1961 = vmatpush1.bf16.msra.mxu0 0
        %1962 = vmatprep.subr.bf16.mxu0 0
        %1963 = vmatpush1.bf16.msra.mxu0 0
        %1964 = vmatprep.subr.bf16.mxu0 0
        %1965 = vmatpush1.bf16.msra.mxu0 0
        %1966 = vmatprep.subr.bf16.mxu0 0
        %1967 = vmatpush1.bf16.msra.mxu0 0
        %1968 = vmatprep.subr.bf16.mxu0 0
        %1969 = vmatpush1.bf16.msra.mxu0 0
        %1970 = vmatprep.subr.bf16.mxu0 0
        %1971 = vmatpush1.bf16.msra.mxu0 0
        %1972 = vmatprep.subr.bf16.mxu0 0
        %1973 = vmatpush1.bf16.msra.mxu0 0
        %1974 = vmatprep.subr.bf16.mxu0 0
        %1975 = vmatpush1.bf16.msra.mxu0 0
        %1976 = vmatprep.subr.bf16.mxu0 0
        %1977 = vmatpush1.bf16.msra.mxu0 0
        %1978 = vmatprep.subr.bf16.mxu0 0
        %1979 = vmatpush1.bf16.msra.mxu0 0
        %1980 = vmatprep.subr.bf16.mxu0 0
        %1981 = vmatpush1.bf16.msra.mxu0 0
        %1982 = vmatprep.subr.bf16.mxu0 0
        %1983 = vmatpush1.bf16.msra.mxu0 0
        %1984 = vmatprep.mubr.bf16.mxu0 0
        %1985 = vmatmul.mubr.bf16.gmra.mrb[0].mxu0 %v1649
        %v1986 = vpop.f32.mrb[0].mxu0
        %v1987 = vadd.f32 %v1944, %v1986
        %v1988 = vpop.f32.mrb[0].mxu0
        %v1989 = vadd.f32 %v1946, %v1988
        %v1990 = vpop.f32.mrb[0].mxu0
        %v1991 = vadd.f32 %v1948, %v1990
        %v1992 = vpop.f32.mrb[0].mxu0
        %v1993 = vadd.f32 %v1950, %v1992
        %1994 = vdwg.mxu0
        %v1995 = vmax.f32 %v1815, 0.0
        %v1996 = vmax.f32 %v1817, 0.0
        %v1997 = vmax.f32 %v1987, 0.0
        %v1998 = vmax.f32 %v1989, 0.0
        %v1999 = vmax.f32 %v1819, 0.0
        %v2000 = vmax.f32 %v1821, 0.0
        %v2001 = vmax.f32 %v1991, 0.0
        %v2002 = vmax.f32 %v1993, 0.0
        %v2003 = vpack.c.bf16 %v1999, %v1995
        %v2004 = vpack.c.bf16 %v2000, %v1996
        %v2005 = vpack.c.bf16 %v2001, %v1997
        %v2006 = vpack.c.bf16 %v2002, %v1998
        %v2007 = vld [vmem:[%s4] sm:$0xf]
        %v2008 = vld [vmem:[%s4 + $0x4] sm:$0xf]
        %v2009 = vld [vmem:[%s4 + $0x8] sm:$0xf]
        %v2010 = vld [vmem:[%s4 + $0xc] sm:$0xf]
        %v2011 = vld [vmem:[%s4 + $0x10] sm:$0xf]
        %v2012 = vld [vmem:[%s4 + $0x14] sm:$0xf]
        %v2013 = vld [vmem:[%s4 + $0x18] sm:$0xf]
        %v2014 = vld [vmem:[%s4 + $0x1c] sm:$0xf]
        %v2015 = vld [vmem:[%s4 + $0x20] sm:$0xf]
        %v2016 = vld [vmem:[%s4 + $0x24] sm:$0xf]
        %v2017 = vld [vmem:[%s4 + $0x28] sm:$0xf]
        %v2018 = vld [vmem:[%s4 + $0x2c] sm:$0xf]
        %v2019 = vld [vmem:[%s4 + $0x30] sm:$0xf]
        %v2020 = vld [vmem:[%s4 + $0x34] sm:$0xf]
        %v2021 = vld [vmem:[%s4 + $0x38] sm:$0xf]
        %v2022 = vld [vmem:[%s4 + $0x3c] sm:$0xf]
        %v2023 = vld [vmem:[%s4 + $0x40] sm:$0xf]
        %v2024 = vld [vmem:[%s4 + $0x44] sm:$0xf]
        %v2025 = vld [vmem:[%s4 + $0x48] sm:$0xf]
        %v2026 = vld [vmem:[%s4 + $0x4c] sm:$0xf]
        %v2027 = vld [vmem:[%s4 + $0x50] sm:$0xf]
        %v2028 = vld [vmem:[%s4 + $0x54] sm:$0xf]
        %v2029 = vld [vmem:[%s4 + $0x58] sm:$0xf]
        %v2030 = vld [vmem:[%s4 + $0x5c] sm:$0xf]
        %v2031 = vld [vmem:[%s4 + $0x60] sm:$0xf]
        %v2032 = vld [vmem:[%s4 + $0x64] sm:$0xf]
        %v2033 = vld [vmem:[%s4 + $0x68] sm:$0xf]
        %v2034 = vld [vmem:[%s4 + $0x6c] sm:$0xf]
        %v2035 = vld [vmem:[%s4 + $0x70] sm:$0xf]
        %v2036 = vld [vmem:[%s4 + $0x74] sm:$0xf]
        %v2037 = vld [vmem:[%s4 + $0x78] sm:$0xf]
        %v2038 = vld [vmem:[%s4 + $0x7c] sm:$0xf]
        %v2039 = vld [vmem:[%s4 + $0x80] sm:$0xf]
        %v2040 = vld [vmem:[%s4 + $0x84] sm:$0xf]
        %v2041 = vld [vmem:[%s4 + $0x88] sm:$0xf]
        %v2042 = vld [vmem:[%s4 + $0x8c] sm:$0xf]
        %v2043 = vld [vmem:[%s4 + $0x90] sm:$0xf]
        %v2044 = vld [vmem:[%s4 + $0x94] sm:$0xf]
        %v2045 = vld [vmem:[%s4 + $0x98] sm:$0xf]
        %v2046 = vld [vmem:[%s4 + $0x9c] sm:$0xf]
        %v2047 = vld [vmem:[%s4 + $0xa0] sm:$0xf]
        %v2048 = vld [vmem:[%s4 + $0xa4] sm:$0xf]
        %v2049 = vld [vmem:[%s4 + $0xa8] sm:$0xf]
        %v2050 = vld [vmem:[%s4 + $0xac] sm:$0xf]
        %v2051 = vld [vmem:[%s4 + $0xb0] sm:$0xf]
        %v2052 = vld [vmem:[%s4 + $0xb4] sm:$0xf]
        %v2053 = vld [vmem:[%s4 + $0xb8] sm:$0xf]
        %v2054 = vld [vmem:[%s4 + $0xbc] sm:$0xf]
        %v2055 = vld [vmem:[%s4 + $0xc0] sm:$0xf]
        %v2056 = vld [vmem:[%s4 + $0xc4] sm:$0xf]
        %v2057 = vld [vmem:[%s5] sm:$0x1]
        %v2059 = vlaneseq
        %v2060 = vshrl.u32 %v2059, 7
        %v2061 = vsub.s32 0, %v2060
        %v2062 = vrot.slane %v2057, %v2061
        %v2114 = vunpack.c.l.b16 %v2007
        %v2115 = vunpack.c.l.b16 %v2008
        %v2116 = vunpack.c.l.b16 %v2009
        %v2117 = vunpack.c.l.b16 %v2010
        %v2118 = vunpack.c.l.b16 %v2011
        %v2119 = vunpack.c.l.b16 %v2012
        %v2120 = vunpack.c.l.b16 %v2013
        %v2121 = vunpack.c.l.b16 %v2014
        %v2122 = vunpack.c.l.b16 %v2015
        %v2123 = vunpack.c.l.b16 %v2016
        %v2124 = vunpack.c.l.b16 %v2017
        %v2125 = vunpack.c.l.b16 %v2018
        %v2126 = vunpack.c.l.b16 %v2019
        %v2127 = vunpack.c.l.b16 %v2020
        %v2128 = vunpack.c.l.b16 %v2021
        %v2129 = vunpack.c.l.b16 %v2022
        %v2130 = vunpack.c.l.b16 %v2023
        %v2131 = vunpack.c.l.b16 %v2024
        %v2132 = vunpack.c.l.b16 %v2025
        %v2133 = vunpack.c.l.b16 %v2026
        %v2134 = vunpack.c.l.b16 %v2027
        %v2135 = vunpack.c.l.b16 %v2028
        %v2136 = vunpack.c.l.b16 %v2029
        %v2137 = vunpack.c.l.b16 %v2030
        %v2138 = vunpack.c.l.b16 %v2031
        %v2139 = vunpack.c.l.b16 %v2032
        %v2140 = vunpack.c.l.b16 %v2033
        %v2141 = vunpack.c.l.b16 %v2034
        %v2142 = vunpack.c.l.b16 %v2035
        %v2143 = vunpack.c.l.b16 %v2036
        %v2144 = vunpack.c.l.b16 %v2037
        %v2145 = vunpack.c.l.b16 %v2038
        %v2146 = vunpack.c.l.b16 %v2039
        %v2147 = vunpack.c.l.b16 %v2040
        %v2148 = vunpack.c.l.b16 %v2041
        %v2149 = vunpack.c.l.b16 %v2042
        %v2150 = vunpack.c.l.b16 %v2043
        %v2151 = vunpack.c.l.b16 %v2044
        %v2152 = vunpack.c.l.b16 %v2045
        %v2153 = vunpack.c.l.b16 %v2046
        %v2154 = vunpack.c.l.b16 %v2047
        %v2155 = vunpack.c.l.b16 %v2048
        %v2156 = vunpack.c.l.b16 %v2049
        %v2157 = vunpack.c.l.b16 %v2050
        %v2158 = vunpack.c.l.b16 %v2051
        %v2159 = vunpack.c.l.b16 %v2052
        %v2160 = vunpack.c.l.b16 %v2053
        %v2161 = vunpack.c.l.b16 %v2054
        %v2162 = vunpack.c.l.b16 %v2055
        %v2163 = vunpack.c.l.b16 %v2056
        %v2164 = vpack.c.b16 %v2115, %v2114
        %v2165 = vpack.c.b16 %v2117, %v2116
        %v2166 = vpack.c.b16 %v2119, %v2118
        %v2167 = vpack.c.b16 %v2121, %v2120
        %v2168 = vpack.c.b16 %v2123, %v2122
        %v2169 = vpack.c.b16 %v2125, %v2124
        %v2170 = vpack.c.b16 %v2127, %v2126
        %v2171 = vpack.c.b16 %v2129, %v2128
        %v2172 = vpack.c.b16 %v2131, %v2130
        %v2173 = vpack.c.b16 %v2133, %v2132
        %v2174 = vpack.c.b16 %v2135, %v2134
        %v2175 = vpack.c.b16 %v2137, %v2136
        %v2176 = vpack.c.b16 %v2139, %v2138
        %v2177 = vpack.c.b16 %v2141, %v2140
        %v2178 = vpack.c.b16 %v2143, %v2142
        %v2179 = vpack.c.b16 %v2145, %v2144
        %v2180 = vpack.c.b16 %v2147, %v2146
        %v2181 = vpack.c.b16 %v2149, %v2148
        %v2182 = vpack.c.b16 %v2151, %v2150
        %v2183 = vpack.c.b16 %v2153, %v2152
        %v2184 = vpack.c.b16 %v2155, %v2154
        %v2185 = vpack.c.b16 %v2157, %v2156
        %v2186 = vpack.c.b16 %v2159, %v2158
        %v2187 = vpack.c.b16 %v2161, %v2160
        %v2188 = vpack.c.b16 %v2163, %v2162
        %v2215 = vsel %vm1647, %v2006, 0
        %2217 = vmatprep.subr.bf16.mxu0 0
        %2218 = vmatpush1.bf16.msra.mxu0 %v2164
        %2219 = vmatprep.subr.bf16.mxu0 0
        %2220 = vmatpush1.bf16.msra.mxu0 %v2165
        %2221 = vmatprep.subr.bf16.mxu0 0
        %2222 = vmatpush1.bf16.msra.mxu0 %v2166
        %2223 = vmatprep.subr.bf16.mxu0 0
        %2224 = vmatpush1.bf16.msra.mxu0 %v2167
        %2225 = vmatprep.subr.bf16.mxu0 0
        %2226 = vmatpush1.bf16.msra.mxu0 %v2168
        %2227 = vmatprep.subr.bf16.mxu0 0
        %2228 = vmatpush1.bf16.msra.mxu0 %v2169
        %2229 = vmatprep.subr.bf16.mxu0 0
        %2230 = vmatpush1.bf16.msra.mxu0 %v2170
        %2231 = vmatprep.subr.bf16.mxu0 0
        %2232 = vmatpush1.bf16.msra.mxu0 %v2171
        %2233 = vmatprep.subr.bf16.mxu0 0
        %2234 = vmatpush1.bf16.msra.mxu0 %v2172
        %2235 = vmatprep.subr.bf16.mxu0 0
        %2236 = vmatpush1.bf16.msra.mxu0 %v2173
        %2237 = vmatprep.subr.bf16.mxu0 0
        %2238 = vmatpush1.bf16.msra.mxu0 %v2174
        %2239 = vmatprep.subr.bf16.mxu0 0
        %2240 = vmatpush1.bf16.msra.mxu0 %v2175
        %2241 = vmatprep.subr.bf16.mxu0 0
        %2242 = vmatpush1.bf16.msra.mxu0 %v2176
        %2243 = vmatprep.subr.bf16.mxu0 0
        %2244 = vmatpush1.bf16.msra.mxu0 %v2177
        %2245 = vmatprep.subr.bf16.mxu0 0
        %2246 = vmatpush1.bf16.msra.mxu0 %v2178
        %2247 = vmatprep.subr.bf16.mxu0 0
        %2248 = vmatpush1.bf16.msra.mxu0 %v2179
        %2249 = vmatprep.mubr.bf16.mxu0 %v2004
        %2250 = vmatmul.mubr.bf16.gmra.mrb[0].mxu0 %v2003
        %v2251 = vpop.f32.mrb[0].mxu0
        %v2252 = vadd.f32 %v2062, %v2251
        %v2253 = vpop.f32.mrb[0].mxu0
        %v2254 = vpop.f32.mrb[0].mxu0
        %v2255 = vadd.f32 %v2062, %v2254
        %v2256 = vpop.f32.mrb[0].mxu0
        %2257 = vdwg.mxu0
        %2258 = vmatprep.subr.bf16.mxu0 0
        %2259 = vmatpush1.bf16.msra.mxu0 %v2180
        %2260 = vmatprep.subr.bf16.mxu0 0
        %2261 = vmatpush1.bf16.msra.mxu0 %v2181
        %2262 = vmatprep.subr.bf16.mxu0 0
        %2263 = vmatpush1.bf16.msra.mxu0 %v2182
        %2264 = vmatprep.subr.bf16.mxu0 0
        %2265 = vmatpush1.bf16.msra.mxu0 %v2183
        %2266 = vmatprep.subr.bf16.mxu0 0
        %2267 = vmatpush1.bf16.msra.mxu0 %v2184
        %2268 = vmatprep.subr.bf16.mxu0 0
        %2269 = vmatpush1.bf16.msra.mxu0 %v2185
        %2270 = vmatprep.subr.bf16.mxu0 0
        %2271 = vmatpush1.bf16.msra.mxu0 %v2186
        %2272 = vmatprep.subr.bf16.mxu0 0
        %2273 = vmatpush1.bf16.msra.mxu0 %v2187
        %2274 = vmatprep.subr.bf16.mxu0 0
        %2275 = vmatpush1.bf16.msra.mxu0 %v2188
        %2276 = vmatprep.subr.bf16.mxu0 0
        %2277 = vmatpush1.bf16.msra.mxu0 0
        %2278 = vmatprep.subr.bf16.mxu0 0
        %2279 = vmatpush1.bf16.msra.mxu0 0
        %2280 = vmatprep.subr.bf16.mxu0 0
        %2281 = vmatpush1.bf16.msra.mxu0 0
        %2282 = vmatprep.subr.bf16.mxu0 0
        %2283 = vmatpush1.bf16.msra.mxu0 0
        %2284 = vmatprep.subr.bf16.mxu0 0
        %2285 = vmatpush1.bf16.msra.mxu0 0
        %2286 = vmatprep.subr.bf16.mxu0 0
        %2287 = vmatpush1.bf16.msra.mxu0 0
        %2288 = vmatprep.subr.bf16.mxu0 0
        %2289 = vmatpush1.bf16.msra.mxu0 0
        %2290 = vmatprep.mubr.bf16.mxu0 %v2215
        %2291 = vmatmul.mubr.bf16.gmra.mrb[0].mxu0 %v2005
        %v2292 = vpop.f32.mrb[0].mxu0
        %v2293 = vadd.f32 %v2252, %v2292
        %v2294 = vpop.f32.mrb[0].mxu0
        %v2295 = vpop.f32.mrb[0].mxu0
        %v2296 = vadd.f32 %v2255, %v2295
        %v2297 = vpop.f32.mrb[0].mxu0
        %2298 = vdwg.mxu0
        %v2299 = vld [vmem:[%s418] sm:$0xff]
        %v2300 = vld [vmem:[%s418 + $0x8] sm:$0xff]
        %v2301 = vmul.f32 %v2293, 0.5
        %v2302 = vmul.f32 %v2296, 0.5
        %v2303 = vmul.f32 %v2301, 1.442695
        %v2304 = vpow.pop %v2303
        %v2305 = vmul.f32 %v2302, 1.442695
        %v2306 = vpow.pop %v2305
        %2309 = vrot.lane.b32.xlu0 %v2304, 108
        %v2310 = vpop.permute.xlu0 %2309
        %2311 = vrot.lane.b32.xlu0 %v2306, 108
        %v2312 = vpop.permute.xlu0 %2311
        %v2315 = vmul.f32 %v2299, %v2310
        %v2316 = vmul.f32 %v2300, %v2312
        %v2317 = vadd.f32 %v2293, %v2315
        %v2318 = vadd.f32 %v2296, %v2316
        %v2319 = vpack.c.bf16 %v2318, %v2317
        %v2320 = vld [vmem:[%s6] sm:$0xff]
        %v2321 = vld [vmem:[%s6 + $0x8] sm:$0xff]
        %v2322 = vld [vmem:[%s6 + $0x10] sm:$0xff]
        %v2323 = vld [vmem:[%s6 + $0x18] sm:$0xff]
        %v2324 = vld [vmem:[%s6 + $0x20] sm:$0x33]
        %v2325 = vld [vmem:[%s6 + $0x28] sm:$0x33]
        %v2326 = vld [vmem:[%s7] sm:$0xf]
        %v2328 = vlaneseq
        %v2329 = vshrl.u32 %v2328, 7
        %v2330 = vsub.s32 0, %v2329
        %v2331 = vrot.slane %v2326, %v2330
        %v2332 = vlaneseq
        %v2333 = vshrl.u32 %v2332, 7
        %v2334 = vsub.s32 1, %v2333
        %v2335 = vrot.slane %v2326, %v2334
        %v2336 = vlaneseq
        %v2337 = vshrl.u32 %v2336, 7
        %v2338 = vsub.s32 2, %v2337
        %v2339 = vrot.slane %v2326, %v2338
        %v2340 = vlaneseq
        %v2341 = vshrl.u32 %v2340, 7
        %v2342 = vsub.s32 3, %v2341
        %v2343 = vrot.slane %v2326, %v2342
        %v2354 = vunpack.c.l.b16 %v2320
        %v2355 = vunpack.c.h.b16 %v2320
        %v2356 = vunpack.c.l.b16 %v2321
        %v2357 = vunpack.c.h.b16 %v2321
        %v2358 = vunpack.c.l.b16 %v2322
        %v2359 = vunpack.c.h.b16 %v2322
        %v2360 = vunpack.c.l.b16 %v2323
        %v2361 = vunpack.c.h.b16 %v2323
        %v2362 = vunpack.c.l.b16 %v2324
        %v2363 = vunpack.c.h.b16 %v2324
        %v2364 = vunpack.c.l.b16 %v2325
        %v2365 = vunpack.c.h.b16 %v2325
        %v2366 = vpack.c.b16 %v2358, %v2354
        %v2367 = vpack.c.b16 %v2359, %v2355
        %v2368 = vpack.c.b16 %v2360, %v2356
        %v2369 = vpack.c.b16 %v2361, %v2357
        %v2370 = vpack.c.b16 %v2362, %v2362
        %v2371 = vpack.c.b16 %v2363, %v2363
        %v2372 = vpack.c.b16 %v2364, %v2364
        %v2373 = vpack.c.b16 %v2365, %v2365
        %vm2378 = vcmask 162816
        %v2380 = vsel %vm2378, %v2319, 0
        %vm2382 = vcmask 1041408
        %v2384 = vsel %vm2382, %v2370, 0
        %v2387 = vsel %vm2382, %v2371, 0
        %v2390 = vsel %vm2382, %v2372, 0
        %v2393 = vsel %vm2382, %v2373, 0
        %2395 = vmatprep.subr.bf16.mxu0 %v2367
        %2396 = vmatpush1.bf16.msra.mxu0 %v2366
        %2397 = vmatprep.subr.bf16.mxu0 %v2387
        %2398 = vmatpush1.bf16.msra.mxu0 %v2384
        %2399 = vmatprep.subr.bf16.mxu0 0
        %2400 = vmatpush1.bf16.msra.mxu0 0
        %2401 = vmatprep.subr.bf16.mxu0 0
        %2402 = vmatpush1.bf16.msra.mxu0 0
        %2403 = vmatprep.subr.bf16.mxu0 0
        %2404 = vmatpush1.bf16.msra.mxu0 0
        %2405 = vmatprep.subr.bf16.mxu0 0
        %2406 = vmatpush1.bf16.msra.mxu0 0
        %2407 = vmatprep.subr.bf16.mxu0 0
        %2408 = vmatpush1.bf16.msra.mxu0 0
        %2409 = vmatprep.subr.bf16.mxu0 0
        %2410 = vmatpush1.bf16.msra.mxu0 0
        %2411 = vmatprep.subr.bf16.mxu0 0
        %2412 = vmatpush1.bf16.msra.mxu0 0
        %2413 = vmatprep.subr.bf16.mxu0 0
        %2414 = vmatpush1.bf16.msra.mxu0 0
        %2415 = vmatprep.subr.bf16.mxu0 0
        %2416 = vmatpush1.bf16.msra.mxu0 0
        %2417 = vmatprep.subr.bf16.mxu0 0
        %2418 = vmatpush1.bf16.msra.mxu0 0
        %2419 = vmatprep.subr.bf16.mxu0 0
        %2420 = vmatpush1.bf16.msra.mxu0 0
        %2421 = vmatprep.subr.bf16.mxu0 0
        %2422 = vmatpush1.bf16.msra.mxu0 0
        %2423 = vmatprep.subr.bf16.mxu0 0
        %2424 = vmatpush1.bf16.msra.mxu0 0
        %2425 = vmatprep.subr.bf16.mxu0 0
        %2426 = vmatpush1.bf16.msra.mxu0 0
        %2427 = vmatprep.mubr.bf16.mxu0 0
        %2428 = vmatmul.mubr.bf16.gmra.mrb[0].mxu0 %v2380
        %v2429 = vpop.f32.mrb[0].mxu0
        %v2430 = vadd.f32 %v2331, %v2429
        %v2431 = vpop.f32.mrb[0].mxu0
        %v2432 = vadd.f32 %v2335, %v2431
        %v2433 = vpop.f32.mrb[0].mxu0
        %v2434 = vadd.f32 %v2331, %v2433
        %v2435 = vpop.f32.mrb[0].mxu0
        %v2436 = vadd.f32 %v2335, %v2435
        %2437 = vdwg.mxu0
        %2438 = vmatprep.subr.bf16.mxu0 %v2369
        %2439 = vmatpush1.bf16.msra.mxu0 %v2368
        %2440 = vmatprep.subr.bf16.mxu0 %v2393
        %2441 = vmatpush1.bf16.msra.mxu0 %v2390
        %2442 = vmatprep.subr.bf16.mxu0 0
        %2443 = vmatpush1.bf16.msra.mxu0 0
        %2444 = vmatprep.subr.bf16.mxu0 0
        %2445 = vmatpush1.bf16.msra.mxu0 0
        %2446 = vmatprep.subr.bf16.mxu0 0
        %2447 = vmatpush1.bf16.msra.mxu0 0
        %2448 = vmatprep.subr.bf16.mxu0 0
        %2449 = vmatpush1.bf16.msra.mxu0 0
        %2450 = vmatprep.subr.bf16.mxu0 0
        %2451 = vmatpush1.bf16.msra.mxu0 0
        %2452 = vmatprep.subr.bf16.mxu0 0
        %2453 = vmatpush1.bf16.msra.mxu0 0
        %2454 = vmatprep.subr.bf16.mxu0 0
        %2455 = vmatpush1.bf16.msra.mxu0 0
        %2456 = vmatprep.subr.bf16.mxu0 0
        %2457 = vmatpush1.bf16.msra.mxu0 0
        %2458 = vmatprep.subr.bf16.mxu0 0
        %2459 = vmatpush1.bf16.msra.mxu0 0
        %2460 = vmatprep.subr.bf16.mxu0 0
        %2461 = vmatpush1.bf16.msra.mxu0 0
        %2462 = vmatprep.subr.bf16.mxu0 0
        %2463 = vmatpush1.bf16.msra.mxu0 0
        %2464 = vmatprep.subr.bf16.mxu0 0
        %2465 = vmatpush1.bf16.msra.mxu0 0
        %2466 = vmatprep.subr.bf16.mxu0 0
        %2467 = vmatpush1.bf16.msra.mxu0 0
        %2468 = vmatprep.subr.bf16.mxu0 0
        %2469 = vmatpush1.bf16.msra.mxu0 0
        %2470 = vmatprep.mubr.bf16.mxu0 0
        %2471 = vmatmul.mubr.bf16.gmra.mrb[0].mxu0 %v2380
        %v2472 = vpop.f32.mrb[0].mxu0
        %v2473 = vadd.f32 %v2339, %v2472
        %v2474 = vpop.f32.mrb[0].mxu0
        %v2475 = vadd.f32 %v2343, %v2474
        %v2476 = vpop.f32.mrb[0].mxu0
        %v2477 = vadd.f32 %v2339, %v2476
        %v2478 = vpop.f32.mrb[0].mxu0
        %v2479 = vadd.f32 %v2343, %v2478
        %2480 = vdwg.mxu0
        %v2481 = vmax.f32 %v2430, 0.0
        %v2482 = vmax.f32 %v2432, 0.0
        %v2483 = vmax.f32 %v2473, 0.0
        %v2484 = vmax.f32 %v2475, 0.0
        %v2485 = vmax.f32 %v2434, 0.0
        %v2486 = vmax.f32 %v2436, 0.0
        %v2487 = vmax.f32 %v2477, 0.0
        %v2488 = vmax.f32 %v2479, 0.0
        %v2489 = vpack.c.bf16 %v2485, %v2481
        %v2490 = vpack.c.bf16 %v2486, %v2482
        %v2491 = vpack.c.bf16 %v2487, %v2483
        %v2492 = vpack.c.bf16 %v2488, %v2484
        %v2493 = vld [vmem:[%s8] sm:$0xff]
        %v2494 = vld [vmem:[%s8 + $0x8] sm:$0xff]
        %v2495 = vld [vmem:[%s8 + $0x10] sm:$0xff]
        %v2496 = vld [vmem:[%s8 + $0x18] sm:$0xf]
        %v2497 = vld [vmem:[%s8 + $0x1c] sm:$0xff]
        %v2498 = vld [vmem:[%s8 + $0x24] sm:$0xff]
        %v2499 = vld [vmem:[%s8 + $0x2c] sm:$0xff]
        %v2500 = vld [vmem:[%s8 + $0x34] sm:$0xf]
        %v2501 = vld [vmem:[%s8 + $0x38] sm:$0xff]
        %v2502 = vld [vmem:[%s8 + $0x40] sm:$0xff]
        %v2503 = vld [vmem:[%s8 + $0x48] sm:$0xff]
        %v2504 = vld [vmem:[%s8 + $0x50] sm:$0xf]
        %v2505 = vld [vmem:[%s8 + $0x54] sm:$0xff]
        %v2506 = vld [vmem:[%s8 + $0x5c] sm:$0xff]
        %v2507 = vld [vmem:[%s8 + $0x64] sm:$0xff]
        %v2508 = vld [vmem:[%s8 + $0x6c] sm:$0xf]
        %v2509 = vld [vmem:[%s8 + $0x70] sm:$0xff]
        %v2510 = vld [vmem:[%s8 + $0x78] sm:$0xff]
        %v2511 = vld [vmem:[%s8 + $0x80] sm:$0xff]
        %v2512 = vld [vmem:[%s8 + $0x88] sm:$0xf]
        %v2513 = vld [vmem:[%s8 + $0x8c] sm:$0xff]
        %v2514 = vld [vmem:[%s8 + $0x94] sm:$0xff]
        %v2515 = vld [vmem:[%s8 + $0x9c] sm:$0xff]
        %v2516 = vld [vmem:[%s8 + $0xa4] sm:$0xf]
        %v2517 = vld [vmem:[%s8 + $0xa8] sm:$0xff]
        %v2518 = vld [vmem:[%s8 + $0xb0] sm:$0xff]
        %v2519 = vld [vmem:[%s8 + $0xb8] sm:$0xff]
        %v2520 = vld [vmem:[%s8 + $0xc0] sm:$0xf]
        %v2521 = vld [vmem:[%s8 + $0xc4] sm:$0xff]
        %v2522 = vld [vmem:[%s8 + $0xcc] sm:$0xff]
        %v2523 = vld [vmem:[%s8 + $0xd4] sm:$0xff]
        %v2524 = vld [vmem:[%s8 + $0xdc] sm:$0xf]
        %v2525 = vld [vmem:[%s8 + $0xe0] sm:$0xff]
        %v2526 = vld [vmem:[%s8 + $0xe8] sm:$0xff]
        %v2527 = vld [vmem:[%s8 + $0xf0] sm:$0xff]
        %v2528 = vld [vmem:[%s8 + $0xf8] sm:$0xf]
        %v2529 = vld [vmem:[%s8 + $0xfc] sm:$0xff]
        %v2530 = vld [vmem:[%s8 + $0x104] sm:$0xff]
        %v2531 = vld [vmem:[%s8 + $0x10c] sm:$0xff]
        %v2532 = vld [vmem:[%s8 + $0x114] sm:$0xf]
        %v2533 = vld [vmem:[%s8 + $0x118] sm:$0xff]
        %v2534 = vld [vmem:[%s8 + $0x120] sm:$0xff]
        %v2535 = vld [vmem:[%s8 + $0x128] sm:$0xff]
        %v2536 = vld [vmem:[%s8 + $0x130] sm:$0xf]
        %v2537 = vld [vmem:[%s8 + $0x134] sm:$0xff]
        %v2538 = vld [vmem:[%s8 + $0x13c] sm:$0xff]
        %v2539 = vld [vmem:[%s8 + $0x144] sm:$0xff]
        %v2540 = vld [vmem:[%s8 + $0x14c] sm:$0xf]
        %v2541 = vld [vmem:[%s8 + $0x150] sm:$0xff]
        %v2542 = vld [vmem:[%s8 + $0x158] sm:$0xff]
        %v2543 = vld [vmem:[%s8 + $0x160] sm:$0xff]
        %v2544 = vld [vmem:[%s8 + $0x168] sm:$0xf]
        %v2545 = vld [vmem:[%s8 + $0x16c] sm:$0xff]
        %v2546 = vld [vmem:[%s8 + $0x174] sm:$0xff]
        %v2547 = vld [vmem:[%s8 + $0x17c] sm:$0xff]
        %v2548 = vld [vmem:[%s8 + $0x184] sm:$0xf]
        %v2549 = vld [vmem:[%s8 + $0x188] sm:$0xff]
        %v2550 = vld [vmem:[%s8 + $0x190] sm:$0xff]
        %v2551 = vld [vmem:[%s8 + $0x198] sm:$0xff]
        %v2552 = vld [vmem:[%s8 + $0x1a0] sm:$0xf]
        %v2553 = vld [vmem:[%s8 + $0x1a4] sm:$0xff]
        %v2554 = vld [vmem:[%s8 + $0x1ac] sm:$0xff]
        %v2555 = vld [vmem:[%s8 + $0x1b4] sm:$0xff]
        %v2556 = vld [vmem:[%s8 + $0x1bc] sm:$0xf]
        %v2557 = vld [vmem:[%s8 + $0x1c0] sm:$0xff]
        %v2558 = vld [vmem:[%s8 + $0x1c8] sm:$0xff]
        %v2559 = vld [vmem:[%s8 + $0x1d0] sm:$0xff]
        %v2560 = vld [vmem:[%s8 + $0x1d8] sm:$0xf]
        %v2561 = vld [vmem:[%s8 + $0x1dc] sm:$0xff]
        %v2562 = vld [vmem:[%s8 + $0x1e4] sm:$0xff]
        %v2563 = vld [vmem:[%s8 + $0x1ec] sm:$0xff]
        %v2564 = vld [vmem:[%s8 + $0x1f4] sm:$0xf]
        %v2565 = vld [vmem:[%s8 + $0x1f8] sm:$0xff]
        %v2566 = vld [vmem:[%s8 + $0x200] sm:$0xff]
        %v2567 = vld [vmem:[%s8 + $0x208] sm:$0xff]
        %v2568 = vld [vmem:[%s8 + $0x210] sm:$0xf]
        %v2569 = vld [vmem:[%s8 + $0x214] sm:$0xff]
        %v2570 = vld [vmem:[%s8 + $0x21c] sm:$0xff]
        %v2571 = vld [vmem:[%s8 + $0x224] sm:$0xff]
        %v2572 = vld [vmem:[%s8 + $0x22c] sm:$0xf]
        %v2573 = vld [vmem:[%s8 + $0x230] sm:$0xff]
        %v2574 = vld [vmem:[%s8 + $0x238] sm:$0xff]
        %v2575 = vld [vmem:[%s8 + $0x240] sm:$0xff]
        %v2576 = vld [vmem:[%s8 + $0x248] sm:$0xf]
        %v2577 = vld [vmem:[%s8 + $0x24c] sm:$0xff]
        %v2578 = vld [vmem:[%s8 + $0x254] sm:$0xff]
        %v2579 = vld [vmem:[%s8 + $0x25c] sm:$0xff]
        %v2580 = vld [vmem:[%s8 + $0x264] sm:$0xf]
        %v2581 = vld [vmem:[%s8 + $0x268] sm:$0xff]
        %v2582 = vld [vmem:[%s8 + $0x270] sm:$0xff]
        %v2583 = vld [vmem:[%s8 + $0x278] sm:$0xff]
        %v2584 = vld [vmem:[%s8 + $0x280] sm:$0xf]
        %v2585 = vld [vmem:[%s8 + $0x284] sm:$0xff]
        %v2586 = vld [vmem:[%s8 + $0x28c] sm:$0xff]
        %v2587 = vld [vmem:[%s8 + $0x294] sm:$0xff]
        %v2588 = vld [vmem:[%s8 + $0x29c] sm:$0xf]
        %v2589 = vld [vmem:[%s8 + $0x2a0] sm:$0xff]
        %v2590 = vld [vmem:[%s8 + $0x2a8] sm:$0xff]
        %v2591 = vld [vmem:[%s8 + $0x2b0] sm:$0xff]
        %v2592 = vld [vmem:[%s8 + $0x2b8] sm:$0xf]
        %v2593 = vld [vmem:[%s8 + $0x2bc] sm:$0xff]
        %v2594 = vld [vmem:[%s8 + $0x2c4] sm:$0xff]
        %v2595 = vld [vmem:[%s8 + $0x2cc] sm:$0xff]
        %v2596 = vld [vmem:[%s8 + $0x2d4] sm:$0xf]
        %v2597 = vld [vmem:[%s8 + $0x2d8] sm:$0xff]
        %v2598 = vld [vmem:[%s8 + $0x2e0] sm:$0xff]
        %v2599 = vld [vmem:[%s8 + $0x2e8] sm:$0xff]
        %v2600 = vld [vmem:[%s8 + $0x2f0] sm:$0xf]
        %v2601 = vld [vmem:[%s8 + $0x2f4] sm:$0xff]
        %v2602 = vld [vmem:[%s8 + $0x2fc] sm:$0xff]
        %v2603 = vld [vmem:[%s8 + $0x304] sm:$0xff]
        %v2604 = vld [vmem:[%s8 + $0x30c] sm:$0xf]
        %v2605 = vld [vmem:[%s8 + $0x310] sm:$0xff]
        %v2606 = vld [vmem:[%s8 + $0x318] sm:$0xff]
        %v2607 = vld [vmem:[%s8 + $0x320] sm:$0xff]
        %v2608 = vld [vmem:[%s8 + $0x328] sm:$0xf]
        %v2609 = vld [vmem:[%s8 + $0x32c] sm:$0xff]
        %v2610 = vld [vmem:[%s8 + $0x334] sm:$0xff]
        %v2611 = vld [vmem:[%s8 + $0x33c] sm:$0xff]
        %v2612 = vld [vmem:[%s8 + $0x344] sm:$0xf]
        %v2613 = vld [vmem:[%s8 + $0x348] sm:$0xff]
        %v2614 = vld [vmem:[%s8 + $0x350] sm:$0xff]
        %v2615 = vld [vmem:[%s8 + $0x358] sm:$0xff]
        %v2616 = vld [vmem:[%s8 + $0x360] sm:$0xf]
        %v2617 = vld [vmem:[%s8 + $0x364] sm:$0xff]
        %v2618 = vld [vmem:[%s8 + $0x36c] sm:$0xff]
        %v2619 = vld [vmem:[%s8 + $0x374] sm:$0xff]
        %v2620 = vld [vmem:[%s8 + $0x37c] sm:$0xf]
        %v2621 = vld [vmem:[%s8 + $0x380] sm:$0xff]
        %v2622 = vld [vmem:[%s8 + $0x388] sm:$0xff]
        %v2623 = vld [vmem:[%s8 + $0x390] sm:$0xff]
        %v2624 = vld [vmem:[%s8 + $0x398] sm:$0xf]
        %v2625 = vld [vmem:[%s8 + $0x39c] sm:$0xff]
        %v2626 = vld [vmem:[%s8 + $0x3a4] sm:$0xff]
        %v2627 = vld [vmem:[%s8 + $0x3ac] sm:$0xff]
        %v2628 = vld [vmem:[%s8 + $0x3b4] sm:$0xf]
        %v2629 = vld [vmem:[%s8 + $0x3b8] sm:$0xff]
        %v2630 = vld [vmem:[%s8 + $0x3c0] sm:$0xff]
        %v2631 = vld [vmem:[%s8 + $0x3c8] sm:$0xff]
        %v2632 = vld [vmem:[%s8 + $0x3d0] sm:$0xf]
        %v2633 = vld [vmem:[%s8 + $0x3d4] sm:$0xff]
        %v2634 = vld [vmem:[%s8 + $0x3dc] sm:$0xff]
        %v2635 = vld [vmem:[%s8 + $0x3e4] sm:$0xff]
        %v2636 = vld [vmem:[%s8 + $0x3ec] sm:$0xf]
        %v2637 = vld [vmem:[%s8 + $0x3f0] sm:$0xff]
        %v2638 = vld [vmem:[%s8 + $0x3f8] sm:$0xff]
        %v2639 = vld [vmem:[%s8 + $0x400] sm:$0xff]
        %v2640 = vld [vmem:[%s8 + $0x408] sm:$0xf]
        %v2641 = vld [vmem:[%s8 + $0x40c] sm:$0xff]
        %v2642 = vld [vmem:[%s8 + $0x414] sm:$0xff]
        %v2643 = vld [vmem:[%s8 + $0x41c] sm:$0xff]
        %v2644 = vld [vmem:[%s8 + $0x424] sm:$0xf]
        %v2645 = vld [vmem:[%s8 + $0x428] sm:$0xff]
        %v2646 = vld [vmem:[%s8 + $0x430] sm:$0xff]
        %v2647 = vld [vmem:[%s8 + $0x438] sm:$0xff]
        %v2648 = vld [vmem:[%s8 + $0x440] sm:$0xf]
        %v2649 = vld [vmem:[%s8 + $0x444] sm:$0xff]
        %v2650 = vld [vmem:[%s8 + $0x44c] sm:$0xff]
        %v2651 = vld [vmem:[%s8 + $0x454] sm:$0xff]
        %v2652 = vld [vmem:[%s8 + $0x45c] sm:$0xf]
        %v2653 = vld [vmem:[%s8 + $0x460] sm:$0xff]
        %v2654 = vld [vmem:[%s8 + $0x468] sm:$0xff]
        %v2655 = vld [vmem:[%s8 + $0x470] sm:$0xff]
        %v2656 = vld [vmem:[%s8 + $0x478] sm:$0xf]
        %v2657 = vld [vmem:[%s8 + $0x47c] sm:$0xff]
        %v2658 = vld [vmem:[%s8 + $0x484] sm:$0xff]
        %v2659 = vld [vmem:[%s8 + $0x48c] sm:$0xff]
        %v2660 = vld [vmem:[%s8 + $0x494] sm:$0xf]
        %v2661 = vld [vmem:[%s8 + $0x498] sm:$0xff]
        %v2662 = vld [vmem:[%s8 + $0x4a0] sm:$0xff]
        %v2663 = vld [vmem:[%s8 + $0x4a8] sm:$0xff]
        %v2664 = vld [vmem:[%s8 + $0x4b0] sm:$0xf]
        %v2665 = vld [vmem:[%s8 + $0x4b4] sm:$0xff]
        %v2666 = vld [vmem:[%s8 + $0x4bc] sm:$0xff]
        %v2667 = vld [vmem:[%s8 + $0x4c4] sm:$0xff]
        %v2668 = vld [vmem:[%s8 + $0x4cc] sm:$0xf]
        %v2669 = vld [vmem:[%s8 + $0x4d0] sm:$0xff]
        %v2670 = vld [vmem:[%s8 + $0x4d8] sm:$0xff]
        %v2671 = vld [vmem:[%s8 + $0x4e0] sm:$0xff]
        %v2672 = vld [vmem:[%s8 + $0x4e8] sm:$0xf]
        %v2673 = vld [vmem:[%s8 + $0x4ec] sm:$0xff]
        %v2674 = vld [vmem:[%s8 + $0x4f4] sm:$0xff]
        %v2675 = vld [vmem:[%s8 + $0x4fc] sm:$0xff]
        %v2676 = vld [vmem:[%s8 + $0x504] sm:$0xf]
        %v2677 = vld [vmem:[%s8 + $0x508] sm:$0xff]
        %v2678 = vld [vmem:[%s8 + $0x510] sm:$0xff]
        %v2679 = vld [vmem:[%s8 + $0x518] sm:$0xff]
        %v2680 = vld [vmem:[%s8 + $0x520] sm:$0xf]
        %v2681 = vld [vmem:[%s8 + $0x524] sm:$0xff]
        %v2682 = vld [vmem:[%s8 + $0x52c] sm:$0xff]
        %v2683 = vld [vmem:[%s8 + $0x534] sm:$0xff]
        %v2684 = vld [vmem:[%s8 + $0x53c] sm:$0xf]
        %v2685 = vld [vmem:[%s8 + $0x540] sm:$0xff]
        %v2686 = vld [vmem:[%s8 + $0x548] sm:$0xff]
        %v2687 = vld [vmem:[%s8 + $0x550] sm:$0xff]
        %v2688 = vld [vmem:[%s8 + $0x558] sm:$0xf]
        %v2689 = vld [vmem:[%s8 + $0x55c] sm:$0xff]
        %v2690 = vld [vmem:[%s8 + $0x564] sm:$0xff]
        %v2691 = vld [vmem:[%s8 + $0x56c] sm:$0xff]
        %v2692 = vld [vmem:[%s8 + $0x574] sm:$0xf]
        %v2693 = vld [vmem:[%s9] sm:$0x7f]
        %v2695 = vlaneseq
        %v2696 = vshrl.u32 %v2695, 7
        %v2697 = vsub.s32 0, %v2696
        %v2698 = vrot.slane %v2693, %v2697
        %v2699 = vlaneseq
        %v2700 = vshrl.u32 %v2699, 7
        %v2701 = vsub.s32 1, %v2700
        %v2702 = vrot.slane %v2693, %v2701
        %v2703 = vlaneseq
        %v2704 = vshrl.u32 %v2703, 7
        %v2705 = vsub.s32 2, %v2704
        %v2706 = vrot.slane %v2693, %v2705
        %v2707 = vlaneseq
        %v2708 = vshrl.u32 %v2707, 7
        %v2709 = vsub.s32 3, %v2708
        %v2710 = vrot.slane %v2693, %v2709
        %v2711 = vlaneseq
        %v2712 = vshrl.u32 %v2711, 7
        %v2713 = vsub.s32 4, %v2712
        %v2714 = vrot.slane %v2693, %v2713
        %v2715 = vlaneseq
        %v2716 = vshrl.u32 %v2715, 7
        %v2717 = vsub.s32 5, %v2716
        %v2718 = vrot.slane %v2693, %v2717
        %v2719 = vlaneseq
        %v2720 = vshrl.u32 %v2719, 7
        %v2721 = vsub.s32 6, %v2720
        %v2722 = vrot.slane %v2693, %v2721
        %v2930 = vunpack.c.l.b16 %v2493
        %v2931 = vunpack.c.h.b16 %v2493
        %v2932 = vunpack.c.l.b16 %v2494
        %v2933 = vunpack.c.h.b16 %v2494
        %v2934 = vunpack.c.l.b16 %v2495
        %v2935 = vunpack.c.h.b16 %v2495
        %v2936 = vunpack.c.l.b16 %v2496
        %v2937 = vunpack.c.l.b16 %v2497
        %v2938 = vunpack.c.h.b16 %v2497
        %v2939 = vunpack.c.l.b16 %v2498
        %v2940 = vunpack.c.h.b16 %v2498
        %v2941 = vunpack.c.l.b16 %v2499
        %v2942 = vunpack.c.h.b16 %v2499
        %v2943 = vunpack.c.l.b16 %v2500
        %v2944 = vunpack.c.l.b16 %v2501
        %v2945 = vunpack.c.h.b16 %v2501
        %v2946 = vunpack.c.l.b16 %v2502
        %v2947 = vunpack.c.h.b16 %v2502
        %v2948 = vunpack.c.l.b16 %v2503
        %v2949 = vunpack.c.h.b16 %v2503
        %v2950 = vunpack.c.l.b16 %v2504
        %v2951 = vunpack.c.l.b16 %v2505
        %v2952 = vunpack.c.h.b16 %v2505
        %v2953 = vunpack.c.l.b16 %v2506
        %v2954 = vunpack.c.h.b16 %v2506
        %v2955 = vunpack.c.l.b16 %v2507
        %v2956 = vunpack.c.h.b16 %v2507
        %v2957 = vunpack.c.l.b16 %v2508
        %v2958 = vunpack.c.l.b16 %v2509
        %v2959 = vunpack.c.h.b16 %v2509
        %v2960 = vunpack.c.l.b16 %v2510
        %v2961 = vunpack.c.h.b16 %v2510
        %v2962 = vunpack.c.l.b16 %v2511
        %v2963 = vunpack.c.h.b16 %v2511
        %v2964 = vunpack.c.l.b16 %v2512
        %v2965 = vunpack.c.l.b16 %v2513
        %v2966 = vunpack.c.h.b16 %v2513
        %v2967 = vunpack.c.l.b16 %v2514
        %v2968 = vunpack.c.h.b16 %v2514
        %v2969 = vunpack.c.l.b16 %v2515
        %v2970 = vunpack.c.h.b16 %v2515
        %v2971 = vunpack.c.l.b16 %v2516
        %v2972 = vunpack.c.l.b16 %v2517
        %v2973 = vunpack.c.h.b16 %v2517
        %v2974 = vunpack.c.l.b16 %v2518
        %v2975 = vunpack.c.h.b16 %v2518
        %v2976 = vunpack.c.l.b16 %v2519
        %v2977 = vunpack.c.h.b16 %v2519
        %v2978 = vunpack.c.l.b16 %v2520
        %v2979 = vunpack.c.l.b16 %v2521
        %v2980 = vunpack.c.h.b16 %v2521
        %v2981 = vunpack.c.l.b16 %v2522
        %v2982 = vunpack.c.h.b16 %v2522
        %v2983 = vunpack.c.l.b16 %v2523
        %v2984 = vunpack.c.h.b16 %v2523
        %v2985 = vunpack.c.l.b16 %v2524
        %v2986 = vunpack.c.l.b16 %v2525
        %v2987 = vunpack.c.h.b16 %v2525
        %v2988 = vunpack.c.l.b16 %v2526
        %v2989 = vunpack.c.h.b16 %v2526
        %v2990 = vunpack.c.l.b16 %v2527
        %v2991 = vunpack.c.h.b16 %v2527
        %v2992 = vunpack.c.l.b16 %v2528
        %v2993 = vunpack.c.l.b16 %v2529
        %v2994 = vunpack.c.h.b16 %v2529
        %v2995 = vunpack.c.l.b16 %v2530
        %v2996 = vunpack.c.h.b16 %v2530
        %v2997 = vunpack.c.l.b16 %v2531
        %v2998 = vunpack.c.h.b16 %v2531
        %v2999 = vunpack.c.l.b16 %v2532
        %v3000 = vunpack.c.l.b16 %v2533
        %v3001 = vunpack.c.h.b16 %v2533
        %v3002 = vunpack.c.l.b16 %v2534
        %v3003 = vunpack.c.h.b16 %v2534
        %v3004 = vunpack.c.l.b16 %v2535
        %v3005 = vunpack.c.h.b16 %v2535
        %v3006 = vunpack.c.l.b16 %v2536
        %v3007 = vunpack.c.l.b16 %v2537
        %v3008 = vunpack.c.h.b16 %v2537
        %v3009 = vunpack.c.l.b16 %v2538
        %v3010 = vunpack.c.h.b16 %v2538
        %v3011 = vunpack.c.l.b16 %v2539
        %v3012 = vunpack.c.h.b16 %v2539
        %v3013 = vunpack.c.l.b16 %v2540
        %v3014 = vunpack.c.l.b16 %v2541
        %v3015 = vunpack.c.h.b16 %v2541
        %v3016 = vunpack.c.l.b16 %v2542
        %v3017 = vunpack.c.h.b16 %v2542
        %v3018 = vunpack.c.l.b16 %v2543
        %v3019 = vunpack.c.h.b16 %v2543
        %v3020 = vunpack.c.l.b16 %v2544
        %v3021 = vunpack.c.l.b16 %v2545
        %v3022 = vunpack.c.h.b16 %v2545
        %v3023 = vunpack.c.l.b16 %v2546
        %v3024 = vunpack.c.h.b16 %v2546
        %v3025 = vunpack.c.l.b16 %v2547
        %v3026 = vunpack.c.h.b16 %v2547
        %v3027 = vunpack.c.l.b16 %v2548
        %v3028 = vunpack.c.l.b16 %v2549
        %v3029 = vunpack.c.h.b16 %v2549
        %v3030 = vunpack.c.l.b16 %v2550
        %v3031 = vunpack.c.h.b16 %v2550
        %v3032 = vunpack.c.l.b16 %v2551
        %v3033 = vunpack.c.h.b16 %v2551
        %v3034 = vunpack.c.l.b16 %v2552
        %v3035 = vunpack.c.l.b16 %v2553
        %v3036 = vunpack.c.h.b16 %v2553
        %v3037 = vunpack.c.l.b16 %v2554
        %v3038 = vunpack.c.h.b16 %v2554
        %v3039 = vunpack.c.l.b16 %v2555
        %v3040 = vunpack.c.h.b16 %v2555
        %v3041 = vunpack.c.l.b16 %v2556
        %v3042 = vunpack.c.l.b16 %v2557
        %v3043 = vunpack.c.h.b16 %v2557
        %v3044 = vunpack.c.l.b16 %v2558
        %v3045 = vunpack.c.h.b16 %v2558
        %v3046 = vunpack.c.l.b16 %v2559
        %v3047 = vunpack.c.h.b16 %v2559
        %v3048 = vunpack.c.l.b16 %v2560
        %v3049 = vunpack.c.l.b16 %v2561
        %v3050 = vunpack.c.h.b16 %v2561
        %v3051 = vunpack.c.l.b16 %v2562
        %v3052 = vunpack.c.h.b16 %v2562
        %v3053 = vunpack.c.l.b16 %v2563
        %v3054 = vunpack.c.h.b16 %v2563
        %v3055 = vunpack.c.l.b16 %v2564
        %v3056 = vunpack.c.l.b16 %v2565
        %v3057 = vunpack.c.h.b16 %v2565
        %v3058 = vunpack.c.l.b16 %v2566
        %v3059 = vunpack.c.h.b16 %v2566
        %v3060 = vunpack.c.l.b16 %v2567
        %v3061 = vunpack.c.h.b16 %v2567
        %v3062 = vunpack.c.l.b16 %v2568
        %v3063 = vunpack.c.l.b16 %v2569
        %v3064 = vunpack.c.h.b16 %v2569
        %v3065 = vunpack.c.l.b16 %v2570
        %v3066 = vunpack.c.h.b16 %v2570
        %v3067 = vunpack.c.l.b16 %v2571
        %v3068 = vunpack.c.h.b16 %v2571
        %v3069 = vunpack.c.l.b16 %v2572
        %v3070 = vunpack.c.l.b16 %v2573
        %v3071 = vunpack.c.h.b16 %v2573
        %v3072 = vunpack.c.l.b16 %v2574
        %v3073 = vunpack.c.h.b16 %v2574
        %v3074 = vunpack.c.l.b16 %v2575
        %v3075 = vunpack.c.h.b16 %v2575
        %v3076 = vunpack.c.l.b16 %v2576
        %v3077 = vunpack.c.l.b16 %v2577
        %v3078 = vunpack.c.h.b16 %v2577
        %v3079 = vunpack.c.l.b16 %v2578
        %v3080 = vunpack.c.h.b16 %v2578
        %v3081 = vunpack.c.l.b16 %v2579
        %v3082 = vunpack.c.h.b16 %v2579
        %v3083 = vunpack.c.l.b16 %v2580
        %v3084 = vunpack.c.l.b16 %v2581
        %v3085 = vunpack.c.h.b16 %v2581
        %v3086 = vunpack.c.l.b16 %v2582
        %v3087 = vunpack.c.h.b16 %v2582
        %v3088 = vunpack.c.l.b16 %v2583
        %v3089 = vunpack.c.h.b16 %v2583
        %v3090 = vunpack.c.l.b16 %v2584
        %v3091 = vunpack.c.l.b16 %v2585
        %v3092 = vunpack.c.h.b16 %v2585
        %v3093 = vunpack.c.l.b16 %v2586
        %v3094 = vunpack.c.h.b16 %v2586
        %v3095 = vunpack.c.l.b16 %v2587
        %v3096 = vunpack.c.h.b16 %v2587
        %v3097 = vunpack.c.l.b16 %v2588
        %v3098 = vunpack.c.l.b16 %v2589
        %v3099 = vunpack.c.h.b16 %v2589
        %v3100 = vunpack.c.l.b16 %v2590
        %v3101 = vunpack.c.h.b16 %v2590
        %v3102 = vunpack.c.l.b16 %v2591
        %v3103 = vunpack.c.h.b16 %v2591
        %v3104 = vunpack.c.l.b16 %v2592
        %v3105 = vunpack.c.l.b16 %v2593
        %v3106 = vunpack.c.h.b16 %v2593
        %v3107 = vunpack.c.l.b16 %v2594
        %v3108 = vunpack.c.h.b16 %v2594
        %v3109 = vunpack.c.l.b16 %v2595
        %v3110 = vunpack.c.h.b16 %v2595
        %v3111 = vunpack.c.l.b16 %v2596
        %v3112 = vunpack.c.l.b16 %v2597
        %v3113 = vunpack.c.h.b16 %v2597
        %v3114 = vunpack.c.l.b16 %v2598
        %v3115 = vunpack.c.h.b16 %v2598
        %v3116 = vunpack.c.l.b16 %v2599
        %v3117 = vunpack.c.h.b16 %v2599
        %v3118 = vunpack.c.l.b16 %v2600
        %v3119 = vunpack.c.l.b16 %v2601
        %v3120 = vunpack.c.h.b16 %v2601
        %v3121 = vunpack.c.l.b16 %v2602
        %v3122 = vunpack.c.h.b16 %v2602
        %v3123 = vunpack.c.l.b16 %v2603
        %v3124 = vunpack.c.h.b16 %v2603
        %v3125 = vunpack.c.l.b16 %v2604
        %v3126 = vunpack.c.l.b16 %v2605
        %v3127 = vunpack.c.h.b16 %v2605
        %v3128 = vunpack.c.l.b16 %v2606
        %v3129 = vunpack.c.h.b16 %v2606
        %v3130 = vunpack.c.l.b16 %v2607
        %v3131 = vunpack.c.h.b16 %v2607
        %v3132 = vunpack.c.l.b16 %v2608
        %v3133 = vunpack.c.l.b16 %v2609
        %v3134 = vunpack.c.h.b16 %v2609
        %v3135 = vunpack.c.l.b16 %v2610
        %v3136 = vunpack.c.h.b16 %v2610
        %v3137 = vunpack.c.l.b16 %v2611
        %v3138 = vunpack.c.h.b16 %v2611
        %v3139 = vunpack.c.l.b16 %v2612
        %v3140 = vunpack.c.l.b16 %v2613
        %v3141 = vunpack.c.h.b16 %v2613
        %v3142 = vunpack.c.l.b16 %v2614
        %v3143 = vunpack.c.h.b16 %v2614
        %v3144 = vunpack.c.l.b16 %v2615
        %v3145 = vunpack.c.h.b16 %v2615
        %v3146 = vunpack.c.l.b16 %v2616
        %v3147 = vunpack.c.l.b16 %v2617
        %v3148 = vunpack.c.h.b16 %v2617
        %v3149 = vunpack.c.l.b16 %v2618
        %v3150 = vunpack.c.h.b16 %v2618
        %v3151 = vunpack.c.l.b16 %v2619
        %v3152 = vunpack.c.h.b16 %v2619
        %v3153 = vunpack.c.l.b16 %v2620
        %v3154 = vunpack.c.l.b16 %v2621
        %v3155 = vunpack.c.h.b16 %v2621
        %v3156 = vunpack.c.l.b16 %v2622
        %v3157 = vunpack.c.h.b16 %v2622
        %v3158 = vunpack.c.l.b16 %v2623
        %v3159 = vunpack.c.h.b16 %v2623
        %v3160 = vunpack.c.l.b16 %v2624
        %v3161 = vunpack.c.l.b16 %v2625
        %v3162 = vunpack.c.h.b16 %v2625
        %v3163 = vunpack.c.l.b16 %v2626
        %v3164 = vunpack.c.h.b16 %v2626
        %v3165 = vunpack.c.l.b16 %v2627
        %v3166 = vunpack.c.h.b16 %v2627
        %v3167 = vunpack.c.l.b16 %v2628
        %v3168 = vunpack.c.l.b16 %v2629
        %v3169 = vunpack.c.h.b16 %v2629
        %v3170 = vunpack.c.l.b16 %v2630
        %v3171 = vunpack.c.h.b16 %v2630
        %v3172 = vunpack.c.l.b16 %v2631
        %v3173 = vunpack.c.h.b16 %v2631
        %v3174 = vunpack.c.l.b16 %v2632
        %v3175 = vunpack.c.l.b16 %v2633
        %v3176 = vunpack.c.h.b16 %v2633
        %v3177 = vunpack.c.l.b16 %v2634
        %v3178 = vunpack.c.h.b16 %v2634
        %v3179 = vunpack.c.l.b16 %v2635
        %v3180 = vunpack.c.h.b16 %v2635
        %v3181 = vunpack.c.l.b16 %v2636
        %v3182 = vunpack.c.l.b16 %v2637
        %v3183 = vunpack.c.h.b16 %v2637
        %v3184 = vunpack.c.l.b16 %v2638
        %v3185 = vunpack.c.h.b16 %v2638
        %v3186 = vunpack.c.l.b16 %v2639
        %v3187 = vunpack.c.h.b16 %v2639
        %v3188 = vunpack.c.l.b16 %v2640
        %v3189 = vunpack.c.l.b16 %v2641
        %v3190 = vunpack.c.h.b16 %v2641
        %v3191 = vunpack.c.l.b16 %v2642
        %v3192 = vunpack.c.h.b16 %v2642
        %v3193 = vunpack.c.l.b16 %v2643
        %v3194 = vunpack.c.h.b16 %v2643
        %v3195 = vunpack.c.l.b16 %v2644
        %v3196 = vunpack.c.l.b16 %v2645
        %v3197 = vunpack.c.h.b16 %v2645
        %v3198 = vunpack.c.l.b16 %v2646
        %v3199 = vunpack.c.h.b16 %v2646
        %v3200 = vunpack.c.l.b16 %v2647
        %v3201 = vunpack.c.h.b16 %v2647
        %v3202 = vunpack.c.l.b16 %v2648
        %v3203 = vunpack.c.l.b16 %v2649
        %v3204 = vunpack.c.h.b16 %v2649
        %v3205 = vunpack.c.l.b16 %v2650
        %v3206 = vunpack.c.h.b16 %v2650
        %v3207 = vunpack.c.l.b16 %v2651
        %v3208 = vunpack.c.h.b16 %v2651
        %v3209 = vunpack.c.l.b16 %v2652
        %v3210 = vunpack.c.l.b16 %v2653
        %v3211 = vunpack.c.h.b16 %v2653
        %v3212 = vunpack.c.l.b16 %v2654
        %v3213 = vunpack.c.h.b16 %v2654
        %v3214 = vunpack.c.l.b16 %v2655
        %v3215 = vunpack.c.h.b16 %v2655
        %v3216 = vunpack.c.l.b16 %v2656
        %v3217 = vunpack.c.l.b16 %v2657
        %v3218 = vunpack.c.h.b16 %v2657
        %v3219 = vunpack.c.l.b16 %v2658
        %v3220 = vunpack.c.h.b16 %v2658
        %v3221 = vunpack.c.l.b16 %v2659
        %v3222 = vunpack.c.h.b16 %v2659
        %v3223 = vunpack.c.l.b16 %v2660
        %v3224 = vunpack.c.l.b16 %v2661
        %v3225 = vunpack.c.h.b16 %v2661
        %v3226 = vunpack.c.l.b16 %v2662
        %v3227 = vunpack.c.h.b16 %v2662
        %v3228 = vunpack.c.l.b16 %v2663
        %v3229 = vunpack.c.h.b16 %v2663
        %v3230 = vunpack.c.l.b16 %v2664
        %v3231 = vunpack.c.l.b16 %v2665
        %v3232 = vunpack.c.h.b16 %v2665
        %v3233 = vunpack.c.l.b16 %v2666
        %v3234 = vunpack.c.h.b16 %v2666
        %v3235 = vunpack.c.l.b16 %v2667
        %v3236 = vunpack.c.h.b16 %v2667
        %v3237 = vunpack.c.l.b16 %v2668
        %v3238 = vunpack.c.l.b16 %v2669
        %v3239 = vunpack.c.h.b16 %v2669
        %v3240 = vunpack.c.l.b16 %v2670
        %v3241 = vunpack.c.h.b16 %v2670
        %v3242 = vunpack.c.l.b16 %v2671
        %v3243 = vunpack.c.h.b16 %v2671
        %v3244 = vunpack.c.l.b16 %v2672
        %v3245 = vunpack.c.l.b16 %v2673
        %v3246 = vunpack.c.h.b16 %v2673
        %v3247 = vunpack.c.l.b16 %v2674
        %v3248 = vunpack.c.h.b16 %v2674
        %v3249 = vunpack.c.l.b16 %v2675
        %v3250 = vunpack.c.h.b16 %v2675
        %v3251 = vunpack.c.l.b16 %v2676
        %v3252 = vunpack.c.l.b16 %v2677
        %v3253 = vunpack.c.h.b16 %v2677
        %v3254 = vunpack.c.l.b16 %v2678
        %v3255 = vunpack.c.h.b16 %v2678
        %v3256 = vunpack.c.l.b16 %v2679
        %v3257 = vunpack.c.h.b16 %v2679
        %v3258 = vunpack.c.l.b16 %v2680
        %v3259 = vunpack.c.l.b16 %v2681
        %v3260 = vunpack.c.h.b16 %v2681
        %v3261 = vunpack.c.l.b16 %v2682
        %v3262 = vunpack.c.h.b16 %v2682
        %v3263 = vunpack.c.l.b16 %v2683
        %v3264 = vunpack.c.h.b16 %v2683
        %v3265 = vunpack.c.l.b16 %v2684
        %v3266 = vunpack.c.l.b16 %v2685
        %v3267 = vunpack.c.h.b16 %v2685
        %v3268 = vunpack.c.l.b16 %v2686
        %v3269 = vunpack.c.h.b16 %v2686
        %v3270 = vunpack.c.l.b16 %v2687
        %v3271 = vunpack.c.h.b16 %v2687
        %v3272 = vunpack.c.l.b16 %v2688
        %v3273 = vunpack.c.l.b16 %v2689
        %v3274 = vunpack.c.h.b16 %v2689
        %v3275 = vunpack.c.l.b16 %v2690
        %v3276 = vunpack.c.h.b16 %v2690
        %v3277 = vunpack.c.l.b16 %v2691
        %v3278 = vunpack.c.h.b16 %v2691
        %v3279 = vunpack.c.l.b16 %v2692
        %v3280 = vpack.c.b16 %v2937, %v2930
        %v3281 = vpack.c.b16 %v2938, %v2931
        %v3282 = vpack.c.b16 %v2939, %v2932
        %v3283 = vpack.c.b16 %v2940, %v2933
        %v3284 = vpack.c.b16 %v2941, %v2934
        %v3285 = vpack.c.b16 %v2942, %v2935
        %v3286 = vpack.c.b16 %v2943, %v2936
        %v3287 = vpack.c.b16 %v2951, %v2944
        %v3288 = vpack.c.b16 %v2952, %v2945
        %v3289 = vpack.c.b16 %v2953, %v2946
        %v3290 = vpack.c.b16 %v2954, %v2947
        %v3291 = vpack.c.b16 %v2955, %v2948
        %v3292 = vpack.c.b16 %v2956, %v2949
        %v3293 = vpack.c.b16 %v2957, %v2950
        %v3294 = vpack.c.b16 %v2965, %v2958
        %v3295 = vpack.c.b16 %v2966, %v2959
        %v3296 = vpack.c.b16 %v2967, %v2960
        %v3297 = vpack.c.b16 %v2968, %v2961
        %v3298 = vpack.c.b16 %v2969, %v2962
        %v3299 = vpack.c.b16 %v2970, %v2963
        %v3300 = vpack.c.b16 %v2971, %v2964
        %v3301 = vpack.c.b16 %v2979, %v2972
        %v3302 = vpack.c.b16 %v2980, %v2973
        %v3303 = vpack.c.b16 %v2981, %v2974
        %v3304 = vpack.c.b16 %v2982, %v2975
        %v3305 = vpack.c.b16 %v2983, %v2976
        %v3306 = vpack.c.b16 %v2984, %v2977
        %v3307 = vpack.c.b16 %v2985, %v2978
        %v3308 = vpack.c.b16 %v2993, %v2986
        %v3309 = vpack.c.b16 %v2994, %v2987
        %v3310 = vpack.c.b16 %v2995, %v2988
        %v3311 = vpack.c.b16 %v2996, %v2989
        %v3312 = vpack.c.b16 %v2997, %v2990
        %v3313 = vpack.c.b16 %v2998, %v2991
        %v3314 = vpack.c.b16 %v2999, %v2992
        %v3315 = vpack.c.b16 %v3007, %v3000
        %v3316 = vpack.c.b16 %v3008, %v3001
        %v3317 = vpack.c.b16 %v3009, %v3002
        %v3318 = vpack.c.b16 %v3010, %v3003
        %v3319 = vpack.c.b16 %v3011, %v3004
        %v3320 = vpack.c.b16 %v3012, %v3005
        %v3321 = vpack.c.b16 %v3013, %v3006
        %v3322 = vpack.c.b16 %v3021, %v3014
        %v3323 = vpack.c.b16 %v3022, %v3015
        %v3324 = vpack.c.b16 %v3023, %v3016
        %v3325 = vpack.c.b16 %v3024, %v3017
        %v3326 = vpack.c.b16 %v3025, %v3018
        %v3327 = vpack.c.b16 %v3026, %v3019
        %v3328 = vpack.c.b16 %v3027, %v3020
        %v3329 = vpack.c.b16 %v3035, %v3028
        %v3330 = vpack.c.b16 %v3036, %v3029
        %v3331 = vpack.c.b16 %v3037, %v3030
        %v3332 = vpack.c.b16 %v3038, %v3031
        %v3333 = vpack.c.b16 %v3039, %v3032
        %v3334 = vpack.c.b16 %v3040, %v3033
        %v3335 = vpack.c.b16 %v3041, %v3034
        %v3336 = vpack.c.b16 %v3049, %v3042
        %v3337 = vpack.c.b16 %v3050, %v3043
        %v3338 = vpack.c.b16 %v3051, %v3044
        %v3339 = vpack.c.b16 %v3052, %v3045
        %v3340 = vpack.c.b16 %v3053, %v3046
        %v3341 = vpack.c.b16 %v3054, %v3047
        %v3342 = vpack.c.b16 %v3055, %v3048
        %v3343 = vpack.c.b16 %v3063, %v3056
        %v3344 = vpack.c.b16 %v3064, %v3057
        %v3345 = vpack.c.b16 %v3065, %v3058
        %v3346 = vpack.c.b16 %v3066, %v3059
        %v3347 = vpack.c.b16 %v3067, %v3060
        %v3348 = vpack.c.b16 %v3068, %v3061
        %v3349 = vpack.c.b16 %v3069, %v3062
        %v3350 = vpack.c.b16 %v3077, %v3070
        %v3351 = vpack.c.b16 %v3078, %v3071
        %v3352 = vpack.c.b16 %v3079, %v3072
        %v3353 = vpack.c.b16 %v3080, %v3073
        %v3354 = vpack.c.b16 %v3081, %v3074
        %v3355 = vpack.c.b16 %v3082, %v3075
        %v3356 = vpack.c.b16 %v3083, %v3076
        %v3357 = vpack.c.b16 %v3091, %v3084
        %v3358 = vpack.c.b16 %v3092, %v3085
        %v3359 = vpack.c.b16 %v3093, %v3086
        %v3360 = vpack.c.b16 %v3094, %v3087
        %v3361 = vpack.c.b16 %v3095, %v3088
        %v3362 = vpack.c.b16 %v3096, %v3089
        %v3363 = vpack.c.b16 %v3097, %v3090
        %v3364 = vpack.c.b16 %v3105, %v3098
        %v3365 = vpack.c.b16 %v3106, %v3099
        %v3366 = vpack.c.b16 %v3107, %v3100
        %v3367 = vpack.c.b16 %v3108, %v3101
        %v3368 = vpack.c.b16 %v3109, %v3102
        %v3369 = vpack.c.b16 %v3110, %v3103
        %v3370 = vpack.c.b16 %v3111, %v3104
        %v3371 = vpack.c.b16 %v3119, %v3112
        %v3372 = vpack.c.b16 %v3120, %v3113
        %v3373 = vpack.c.b16 %v3121, %v3114
        %v3374 = vpack.c.b16 %v3122, %v3115
        %v3375 = vpack.c.b16 %v3123, %v3116
        %v3376 = vpack.c.b16 %v3124, %v3117
        %v3377 = vpack.c.b16 %v3125, %v3118
        %v3378 = vpack.c.b16 %v3133, %v3126
        %v3379 = vpack.c.b16 %v3134, %v3127
        %v3380 = vpack.c.b16 %v3135, %v3128
        %v3381 = vpack.c.b16 %v3136, %v3129
        %v3382 = vpack.c.b16 %v3137, %v3130
        %v3383 = vpack.c.b16 %v3138, %v3131
        %v3384 = vpack.c.b16 %v3139, %v3132
        %v3385 = vpack.c.b16 %v3147, %v3140
        %v3386 = vpack.c.b16 %v3148, %v3141
        %v3387 = vpack.c.b16 %v3149, %v3142
        %v3388 = vpack.c.b16 %v3150, %v3143
        %v3389 = vpack.c.b16 %v3151, %v3144
        %v3390 = vpack.c.b16 %v3152, %v3145
        %v3391 = vpack.c.b16 %v3153, %v3146
        %v3392 = vpack.c.b16 %v3161, %v3154
        %v3393 = vpack.c.b16 %v3162, %v3155
        %v3394 = vpack.c.b16 %v3163, %v3156
        %v3395 = vpack.c.b16 %v3164, %v3157
        %v3396 = vpack.c.b16 %v3165, %v3158
        %v3397 = vpack.c.b16 %v3166, %v3159
        %v3398 = vpack.c.b16 %v3167, %v3160
        %v3399 = vpack.c.b16 %v3175, %v3168
        %v3400 = vpack.c.b16 %v3176, %v3169
        %v3401 = vpack.c.b16 %v3177, %v3170
        %v3402 = vpack.c.b16 %v3178, %v3171
        %v3403 = vpack.c.b16 %v3179, %v3172
        %v3404 = vpack.c.b16 %v3180, %v3173
        %v3405 = vpack.c.b16 %v3181, %v3174
        %v3406 = vpack.c.b16 %v3189, %v3182
        %v3407 = vpack.c.b16 %v3190, %v3183
        %v3408 = vpack.c.b16 %v3191, %v3184
        %v3409 = vpack.c.b16 %v3192, %v3185
        %v3410 = vpack.c.b16 %v3193, %v3186
        %v3411 = vpack.c.b16 %v3194, %v3187
        %v3412 = vpack.c.b16 %v3195, %v3188
        %v3413 = vpack.c.b16 %v3203, %v3196
        %v3414 = vpack.c.b16 %v3204, %v3197
        %v3415 = vpack.c.b16 %v3205, %v3198
        %v3416 = vpack.c.b16 %v3206, %v3199
        %v3417 = vpack.c.b16 %v3207, %v3200
        %v3418 = vpack.c.b16 %v3208, %v3201
        %v3419 = vpack.c.b16 %v3209, %v3202
        %v3420 = vpack.c.b16 %v3217, %v3210
        %v3421 = vpack.c.b16 %v3218, %v3211
        %v3422 = vpack.c.b16 %v3219, %v3212
        %v3423 = vpack.c.b16 %v3220, %v3213
        %v3424 = vpack.c.b16 %v3221, %v3214
        %v3425 = vpack.c.b16 %v3222, %v3215
        %v3426 = vpack.c.b16 %v3223, %v3216
        %v3427 = vpack.c.b16 %v3231, %v3224
        %v3428 = vpack.c.b16 %v3232, %v3225
        %v3429 = vpack.c.b16 %v3233, %v3226
        %v3430 = vpack.c.b16 %v3234, %v3227
        %v3431 = vpack.c.b16 %v3235, %v3228
        %v3432 = vpack.c.b16 %v3236, %v3229
        %v3433 = vpack.c.b16 %v3237, %v3230
        %v3434 = vpack.c.b16 %v3245, %v3238
        %v3435 = vpack.c.b16 %v3246, %v3239
        %v3436 = vpack.c.b16 %v3247, %v3240
        %v3437 = vpack.c.b16 %v3248, %v3241
        %v3438 = vpack.c.b16 %v3249, %v3242
        %v3439 = vpack.c.b16 %v3250, %v3243
        %v3440 = vpack.c.b16 %v3251, %v3244
        %v3441 = vpack.c.b16 %v3259, %v3252
        %v3442 = vpack.c.b16 %v3260, %v3253
        %v3443 = vpack.c.b16 %v3261, %v3254
        %v3444 = vpack.c.b16 %v3262, %v3255
        %v3445 = vpack.c.b16 %v3263, %v3256
        %v3446 = vpack.c.b16 %v3264, %v3257
        %v3447 = vpack.c.b16 %v3265, %v3258
        %v3448 = vpack.c.b16 %v3273, %v3266
        %v3449 = vpack.c.b16 %v3274, %v3267
        %v3450 = vpack.c.b16 %v3275, %v3268
        %v3451 = vpack.c.b16 %v3276, %v3269
        %v3452 = vpack.c.b16 %v3277, %v3270
        %v3453 = vpack.c.b16 %v3278, %v3271
        %v3454 = vpack.c.b16 %v3279, %v3272
        %v3631 = vsel %vm1647, %v2492, 0
        %3633 = vmatprep.subr.bf16.mxu0 %v3281
        %3634 = vmatpush1.bf16.msra.mxu0 %v3280
        %3635 = vmatprep.subr.bf16.mxu0 %v3288
        %3636 = vmatpush1.bf16.msra.mxu0 %v3287
        %3637 = vmatprep.subr.bf16.mxu0 %v3295
        %3638 = vmatpush1.bf16.msra.mxu0 %v3294
        %3639 = vmatprep.subr.bf16.mxu0 %v3302
        %3640 = vmatpush1.bf16.msra.mxu0 %v3301
        %3641 = vmatprep.subr.bf16.mxu0 %v3309
        %3642 = vmatpush1.bf16.msra.mxu0 %v3308
        %3643 = vmatprep.subr.bf16.mxu0 %v3316
        %3644 = vmatpush1.bf16.msra.mxu0 %v3315
        %3645 = vmatprep.subr.bf16.mxu0 %v3323
        %3646 = vmatpush1.bf16.msra.mxu0 %v3322
        %3647 = vmatprep.subr.bf16.mxu0 %v3330
        %3648 = vmatpush1.bf16.msra.mxu0 %v3329
        %3649 = vmatprep.subr.bf16.mxu0 %v3337
        %3650 = vmatpush1.bf16.msra.mxu0 %v3336
        %3651 = vmatprep.subr.bf16.mxu0 %v3344
        %3652 = vmatpush1.bf16.msra.mxu0 %v3343
        %3653 = vmatprep.subr.bf16.mxu0 %v3351
        %3654 = vmatpush1.bf16.msra.mxu0 %v3350
        %3655 = vmatprep.subr.bf16.mxu0 %v3358
        %3656 = vmatpush1.bf16.msra.mxu0 %v3357
        %3657 = vmatprep.subr.bf16.mxu0 %v3365
        %3658 = vmatpush1.bf16.msra.mxu0 %v3364
        %3659 = vmatprep.subr.bf16.mxu0 %v3372
        %3660 = vmatpush1.bf16.msra.mxu0 %v3371
        %3661 = vmatprep.subr.bf16.mxu0 %v3379
        %3662 = vmatpush1.bf16.msra.mxu0 %v3378
        %3663 = vmatprep.subr.bf16.mxu0 %v3386
        %3664 = vmatpush1.bf16.msra.mxu0 %v3385
        %3665 = vmatprep.mubr.bf16.mxu0 %v2490
        %3666 = vmatmul.mubr.bf16.gmra.mrb[0].mxu0 %v2489
        %v3667 = vpop.f32.mrb[0].mxu0
        %v3668 = vadd.f32 %v2698, %v3667
        %v3669 = vpop.f32.mrb[0].mxu0
        %v3670 = vadd.f32 %v2702, %v3669
        %v3671 = vpop.f32.mrb[0].mxu0
        %v3672 = vadd.f32 %v2698, %v3671
        %v3673 = vpop.f32.mrb[0].mxu0
        %v3674 = vadd.f32 %v2702, %v3673
        %3675 = vdwg.mxu0
        %3676 = vmatprep.subr.bf16.mxu0 %v3393
        %3677 = vmatpush1.bf16.msra.mxu0 %v3392
        %3678 = vmatprep.subr.bf16.mxu0 %v3400
        %3679 = vmatpush1.bf16.msra.mxu0 %v3399
        %3680 = vmatprep.subr.bf16.mxu0 %v3407
        %3681 = vmatpush1.bf16.msra.mxu0 %v3406
        %3682 = vmatprep.subr.bf16.mxu0 %v3414
        %3683 = vmatpush1.bf16.msra.mxu0 %v3413
        %3684 = vmatprep.subr.bf16.mxu0 %v3421
        %3685 = vmatpush1.bf16.msra.mxu0 %v3420
        %3686 = vmatprep.subr.bf16.mxu0 %v3428
        %3687 = vmatpush1.bf16.msra.mxu0 %v3427
        %3688 = vmatprep.subr.bf16.mxu0 %v3435
        %3689 = vmatpush1.bf16.msra.mxu0 %v3434
        %3690 = vmatprep.subr.bf16.mxu0 %v3442
        %3691 = vmatpush1.bf16.msra.mxu0 %v3441
        %3692 = vmatprep.subr.bf16.mxu0 %v3449
        %3693 = vmatpush1.bf16.msra.mxu0 %v3448
        %3694 = vmatprep.subr.bf16.mxu0 0
        %3695 = vmatpush1.bf16.msra.mxu0 0
        %3696 = vmatprep.subr.bf16.mxu0 0
        %3697 = vmatpush1.bf16.msra.mxu0 0
        %3698 = vmatprep.subr.bf16.mxu0 0
        %3699 = vmatpush1.bf16.msra.mxu0 0
        %3700 = vmatprep.subr.bf16.mxu0 0
        %3701 = vmatpush1.bf16.msra.mxu0 0
        %3702 = vmatprep.subr.bf16.mxu0 0
        %3703 = vmatpush1.bf16.msra.mxu0 0
        %3704 = vmatprep.subr.bf16.mxu0 0
        %3705 = vmatpush1.bf16.msra.mxu0 0
        %3706 = vmatprep.subr.bf16.mxu0 0
        %3707 = vmatpush1.bf16.msra.mxu0 0
        %3708 = vmatprep.mubr.bf16.mxu0 %v3631
        %3709 = vmatmul.mubr.bf16.gmra.mrb[0].mxu0 %v2491
        %v3710 = vpop.f32.mrb[0].mxu0
        %v3711 = vadd.f32 %v3668, %v3710
        %v3712 = vpop.f32.mrb[0].mxu0
        %v3713 = vadd.f32 %v3670, %v3712
        %v3714 = vpop.f32.mrb[0].mxu0
        %v3715 = vadd.f32 %v3672, %v3714
        %v3716 = vpop.f32.mrb[0].mxu0
        %v3717 = vadd.f32 %v3674, %v3716
        %3718 = vdwg.mxu0
        %3719 = vmatprep.subr.bf16.mxu0 %v3283
        %3720 = vmatpush1.bf16.msra.mxu0 %v3282
        %3721 = vmatprep.subr.bf16.mxu0 %v3290
        %3722 = vmatpush1.bf16.msra.mxu0 %v3289
        %3723 = vmatprep.subr.bf16.mxu0 %v3297
        %3724 = vmatpush1.bf16.msra.mxu0 %v3296
        %3725 = vmatprep.subr.bf16.mxu0 %v3304
        %3726 = vmatpush1.bf16.msra.mxu0 %v3303
        %3727 = vmatprep.subr.bf16.mxu0 %v3311
        %3728 = vmatpush1.bf16.msra.mxu0 %v3310
        %3729 = vmatprep.subr.bf16.mxu0 %v3318
        %3730 = vmatpush1.bf16.msra.mxu0 %v3317
        %3731 = vmatprep.subr.bf16.mxu0 %v3325
        %3732 = vmatpush1.bf16.msra.mxu0 %v3324
        %3733 = vmatprep.subr.bf16.mxu0 %v3332
        %3734 = vmatpush1.bf16.msra.mxu0 %v3331
        %3735 = vmatprep.subr.bf16.mxu0 %v3339
        %3736 = vmatpush1.bf16.msra.mxu0 %v3338
        %3737 = vmatprep.subr.bf16.mxu0 %v3346
        %3738 = vmatpush1.bf16.msra.mxu0 %v3345
        %3739 = vmatprep.subr.bf16.mxu0 %v3353
        %3740 = vmatpush1.bf16.msra.mxu0 %v3352
        %3741 = vmatprep.subr.bf16.mxu0 %v3360
        %3742 = vmatpush1.bf16.msra.mxu0 %v3359
        %3743 = vmatprep.subr.bf16.mxu0 %v3367
        %3744 = vmatpush1.bf16.msra.mxu0 %v3366
        %3745 = vmatprep.subr.bf16.mxu0 %v3374
        %3746 = vmatpush1.bf16.msra.mxu0 %v3373
        %3747 = vmatprep.subr.bf16.mxu0 %v3381
        %3748 = vmatpush1.bf16.msra.mxu0 %v3380
        %3749 = vmatprep.subr.bf16.mxu0 %v3388
        %3750 = vmatpush1.bf16.msra.mxu0 %v3387
        %3751 = vmatprep.mubr.bf16.mxu0 %v2490
        %3752 = vmatmul.mubr.bf16.gmra.mrb[0].mxu0 %v2489
        %v3753 = vpop.f32.mrb[0].mxu0
        %v3754 = vadd.f32 %v2706, %v3753
        %v3755 = vpop.f32.mrb[0].mxu0
        %v3756 = vadd.f32 %v2710, %v3755
        %v3757 = vpop.f32.mrb[0].mxu0
        %v3758 = vadd.f32 %v2706, %v3757
        %v3759 = vpop.f32.mrb[0].mxu0
        %v3760 = vadd.f32 %v2710, %v3759
        %3761 = vdwg.mxu0
        %3762 = vmatprep.subr.bf16.mxu0 %v3395
        %3763 = vmatpush1.bf16.msra.mxu0 %v3394
        %3764 = vmatprep.subr.bf16.mxu0 %v3402
        %3765 = vmatpush1.bf16.msra.mxu0 %v3401
        %3766 = vmatprep.subr.bf16.mxu0 %v3409
        %3767 = vmatpush1.bf16.msra.mxu0 %v3408
        %3768 = vmatprep.subr.bf16.mxu0 %v3416
        %3769 = vmatpush1.bf16.msra.mxu0 %v3415
        %3770 = vmatprep.subr.bf16.mxu0 %v3423
        %3771 = vmatpush1.bf16.msra.mxu0 %v3422
        %3772 = vmatprep.subr.bf16.mxu0 %v3430
        %3773 = vmatpush1.bf16.msra.mxu0 %v3429
        %3774 = vmatprep.subr.bf16.mxu0 %v3437
        %3775 = vmatpush1.bf16.msra.mxu0 %v3436
        %3776 = vmatprep.subr.bf16.mxu0 %v3444
        %3777 = vmatpush1.bf16.msra.mxu0 %v3443
        %3778 = vmatprep.subr.bf16.mxu0 %v3451
        %3779 = vmatpush1.bf16.msra.mxu0 %v3450
        %3780 = vmatprep.subr.bf16.mxu0 0
        %3781 = vmatpush1.bf16.msra.mxu0 0
        %3782 = vmatprep.subr.bf16.mxu0 0
        %3783 = vmatpush1.bf16.msra.mxu0 0
        %3784 = vmatprep.subr.bf16.mxu0 0
        %3785 = vmatpush1.bf16.msra.mxu0 0
        %3786 = vmatprep.subr.bf16.mxu0 0
        %3787 = vmatpush1.bf16.msra.mxu0 0
        %3788 = vmatprep.subr.bf16.mxu0 0
        %3789 = vmatpush1.bf16.msra.mxu0 0
        %3790 = vmatprep.subr.bf16.mxu0 0
        %3791 = vmatpush1.bf16.msra.mxu0 0
        %3792 = vmatprep.subr.bf16.mxu0 0
        %3793 = vmatpush1.bf16.msra.mxu0 0
        %3794 = vmatprep.mubr.bf16.mxu0 %v3631
        %3795 = vmatmul.mubr.bf16.gmra.mrb[0].mxu0 %v2491
        %v3796 = vpop.f32.mrb[0].mxu0
        %v3797 = vadd.f32 %v3754, %v3796
        %v3798 = vpop.f32.mrb[0].mxu0
        %v3799 = vadd.f32 %v3756, %v3798
        %v3800 = vpop.f32.mrb[0].mxu0
        %v3801 = vadd.f32 %v3758, %v3800
        %v3802 = vpop.f32.mrb[0].mxu0
        %v3803 = vadd.f32 %v3760, %v3802
        %3804 = vdwg.mxu0
        %3805 = vmatprep.subr.bf16.mxu0 %v3285
        %3806 = vmatpush1.bf16.msra.mxu0 %v3284
        %3807 = vmatprep.subr.bf16.mxu0 %v3292
        %3808 = vmatpush1.bf16.msra.mxu0 %v3291
        %3809 = vmatprep.subr.bf16.mxu0 %v3299
        %3810 = vmatpush1.bf16.msra.mxu0 %v3298
        %3811 = vmatprep.subr.bf16.mxu0 %v3306
        %3812 = vmatpush1.bf16.msra.mxu0 %v3305
        %3813 = vmatprep.subr.bf16.mxu0 %v3313
        %3814 = vmatpush1.bf16.msra.mxu0 %v3312
        %3815 = vmatprep.subr.bf16.mxu0 %v3320
        %3816 = vmatpush1.bf16.msra.mxu0 %v3319
        %3817 = vmatprep.subr.bf16.mxu0 %v3327
        %3818 = vmatpush1.bf16.msra.mxu0 %v3326
        %3819 = vmatprep.subr.bf16.mxu0 %v3334
        %3820 = vmatpush1.bf16.msra.mxu0 %v3333
        %3821 = vmatprep.subr.bf16.mxu0 %v3341
        %3822 = vmatpush1.bf16.msra.mxu0 %v3340
        %3823 = vmatprep.subr.bf16.mxu0 %v3348
        %3824 = vmatpush1.bf16.msra.mxu0 %v3347
        %3825 = vmatprep.subr.bf16.mxu0 %v3355
        %3826 = vmatpush1.bf16.msra.mxu0 %v3354
        %3827 = vmatprep.subr.bf16.mxu0 %v3362
        %3828 = vmatpush1.bf16.msra.mxu0 %v3361
        %3829 = vmatprep.subr.bf16.mxu0 %v3369
        %3830 = vmatpush1.bf16.msra.mxu0 %v3368
        %3831 = vmatprep.subr.bf16.mxu0 %v3376
        %3832 = vmatpush1.bf16.msra.mxu0 %v3375
        %3833 = vmatprep.subr.bf16.mxu0 %v3383
        %3834 = vmatpush1.bf16.msra.mxu0 %v3382
        %3835 = vmatprep.subr.bf16.mxu0 %v3390
        %3836 = vmatpush1.bf16.msra.mxu0 %v3389
        %3837 = vmatprep.mubr.bf16.mxu0 %v2490
        %3838 = vmatmul.mubr.bf16.gmra.mrb[0].mxu0 %v2489
        %v3839 = vpop.f32.mrb[0].mxu0
        %v3840 = vadd.f32 %v2714, %v3839
        %v3841 = vpop.f32.mrb[0].mxu0
        %v3842 = vadd.f32 %v2718, %v3841
        %v3843 = vpop.f32.mrb[0].mxu0
        %v3844 = vadd.f32 %v2714, %v3843
        %v3845 = vpop.f32.mrb[0].mxu0
        %v3846 = vadd.f32 %v2718, %v3845
        %3847 = vdwg.mxu0
        %3848 = vmatprep.subr.bf16.mxu0 %v3397
        %3849 = vmatpush1.bf16.msra.mxu0 %v3396
        %3850 = vmatprep.subr.bf16.mxu0 %v3404
        %3851 = vmatpush1.bf16.msra.mxu0 %v3403
        %3852 = vmatprep.subr.bf16.mxu0 %v3411
        %3853 = vmatpush1.bf16.msra.mxu0 %v3410
        %3854 = vmatprep.subr.bf16.mxu0 %v3418
        %3855 = vmatpush1.bf16.msra.mxu0 %v3417
        %3856 = vmatprep.subr.bf16.mxu0 %v3425
        %3857 = vmatpush1.bf16.msra.mxu0 %v3424
        %3858 = vmatprep.subr.bf16.mxu0 %v3432
        %3859 = vmatpush1.bf16.msra.mxu0 %v3431
        %3860 = vmatprep.subr.bf16.mxu0 %v3439
        %3861 = vmatpush1.bf16.msra.mxu0 %v3438
        %3862 = vmatprep.subr.bf16.mxu0 %v3446
        %3863 = vmatpush1.bf16.msra.mxu0 %v3445
        %3864 = vmatprep.subr.bf16.mxu0 %v3453
        %3865 = vmatpush1.bf16.msra.mxu0 %v3452
        %3866 = vmatprep.subr.bf16.mxu0 0
        %3867 = vmatpush1.bf16.msra.mxu0 0
        %3868 = vmatprep.subr.bf16.mxu0 0
        %3869 = vmatpush1.bf16.msra.mxu0 0
        %3870 = vmatprep.subr.bf16.mxu0 0
        %3871 = vmatpush1.bf16.msra.mxu0 0
        %3872 = vmatprep.subr.bf16.mxu0 0
        %3873 = vmatpush1.bf16.msra.mxu0 0
        %3874 = vmatprep.subr.bf16.mxu0 0
        %3875 = vmatpush1.bf16.msra.mxu0 0
        %3876 = vmatprep.subr.bf16.mxu0 0
        %3877 = vmatpush1.bf16.msra.mxu0 0
        %3878 = vmatprep.subr.bf16.mxu0 0
        %3879 = vmatpush1.bf16.msra.mxu0 0
        %3880 = vmatprep.mubr.bf16.mxu0 %v3631
        %3881 = vmatmul.mubr.bf16.gmra.mrb[0].mxu0 %v2491
        %v3882 = vpop.f32.mrb[0].mxu0
        %v3883 = vadd.f32 %v3840, %v3882
        %v3884 = vpop.f32.mrb[0].mxu0
        %v3885 = vadd.f32 %v3842, %v3884
        %v3886 = vpop.f32.mrb[0].mxu0
        %v3887 = vadd.f32 %v3844, %v3886
        %v3888 = vpop.f32.mrb[0].mxu0
        %v3889 = vadd.f32 %v3846, %v3888
        %3890 = vdwg.mxu0
        %3891 = vmatprep.subr.bf16.mxu0 0
        %3892 = vmatpush1.bf16.msra.mxu0 %v3286
        %3893 = vmatprep.subr.bf16.mxu0 0
        %3894 = vmatpush1.bf16.msra.mxu0 %v3293
        %3895 = vmatprep.subr.bf16.mxu0 0
        %3896 = vmatpush1.bf16.msra.mxu0 %v3300
        %3897 = vmatprep.subr.bf16.mxu0 0
        %3898 = vmatpush1.bf16.msra.mxu0 %v3307
        %3899 = vmatprep.subr.bf16.mxu0 0
        %3900 = vmatpush1.bf16.msra.mxu0 %v3314
        %3901 = vmatprep.subr.bf16.mxu0 0
        %3902 = vmatpush1.bf16.msra.mxu0 %v3321
        %3903 = vmatprep.subr.bf16.mxu0 0
        %3904 = vmatpush1.bf16.msra.mxu0 %v3328
        %3905 = vmatprep.subr.bf16.mxu0 0
        %3906 = vmatpush1.bf16.msra.mxu0 %v3335
        %3907 = vmatprep.subr.bf16.mxu0 0
        %3908 = vmatpush1.bf16.msra.mxu0 %v3342
        %3909 = vmatprep.subr.bf16.mxu0 0
        %3910 = vmatpush1.bf16.msra.mxu0 %v3349
        %3911 = vmatprep.subr.bf16.mxu0 0
        %3912 = vmatpush1.bf16.msra.mxu0 %v3356
        %3913 = vmatprep.subr.bf16.mxu0 0
        %3914 = vmatpush1.bf16.msra.mxu0 %v3363
        %3915 = vmatprep.subr.bf16.mxu0 0
        %3916 = vmatpush1.bf16.msra.mxu0 %v3370
        %3917 = vmatprep.subr.bf16.mxu0 0
        %3918 = vmatpush1.bf16.msra.mxu0 %v3377
        %3919 = vmatprep.subr.bf16.mxu0 0
        %3920 = vmatpush1.bf16.msra.mxu0 %v3384
        %3921 = vmatprep.subr.bf16.mxu0 0
        %3922 = vmatpush1.bf16.msra.mxu0 %v3391
        %3923 = vmatprep.mubr.bf16.mxu0 %v2490
        %3924 = vmatmul.mubr.bf16.gmra.mrb[0].mxu0 %v2489
        %v3925 = vpop.f32.mrb[0].mxu0
        %v3926 = vadd.f32 %v2722, %v3925
        %v3927 = vpop.f32.mrb[0].mxu0
        %v3928 = vpop.f32.mrb[0].mxu0
        %v3929 = vadd.f32 %v2722, %v3928
        %v3930 = vpop.f32.mrb[0].mxu0
        %3931 = vdwg.mxu0
        %3932 = vmatprep.subr.bf16.mxu0 0
        %3933 = vmatpush1.bf16.msra.mxu0 %v3398
        %3934 = vmatprep.subr.bf16.mxu0 0
        %3935 = vmatpush1.bf16.msra.mxu0 %v3405
        %3936 = vmatprep.subr.bf16.mxu0 0
        %3937 = vmatpush1.bf16.msra.mxu0 %v3412
        %3938 = vmatprep.subr.bf16.mxu0 0
        %3939 = vmatpush1.bf16.msra.mxu0 %v3419
        %3940 = vmatprep.subr.bf16.mxu0 0
        %3941 = vmatpush1.bf16.msra.mxu0 %v3426
        %3942 = vmatprep.subr.bf16.mxu0 0
        %3943 = vmatpush1.bf16.msra.mxu0 %v3433
        %3944 = vmatprep.subr.bf16.mxu0 0
        %3945 = vmatpush1.bf16.msra.mxu0 %v3440
        %3946 = vmatprep.subr.bf16.mxu0 0
        %3947 = vmatpush1.bf16.msra.mxu0 %v3447
        %3948 = vmatprep.subr.bf16.mxu0 0
        %3949 = vmatpush1.bf16.msra.mxu0 %v3454
        %3950 = vmatprep.subr.bf16.mxu0 0
        %3951 = vmatpush1.bf16.msra.mxu0 0
        %3952 = vmatprep.subr.bf16.mxu0 0
        %3953 = vmatpush1.bf16.msra.mxu0 0
        %3954 = vmatprep.subr.bf16.mxu0 0
        %3955 = vmatpush1.bf16.msra.mxu0 0
        %3956 = vmatprep.subr.bf16.mxu0 0
        %3957 = vmatpush1.bf16.msra.mxu0 0
        %3958 = vmatprep.subr.bf16.mxu0 0
        %3959 = vmatpush1.bf16.msra.mxu0 0
        %3960 = vmatprep.subr.bf16.mxu0 0
        %3961 = vmatpush1.bf16.msra.mxu0 0
        %3962 = vmatprep.subr.bf16.mxu0 0
        %3963 = vmatpush1.bf16.msra.mxu0 0
        %3964 = vmatprep.mubr.bf16.mxu0 %v3631
        %3965 = vmatmul.mubr.bf16.gmra.mrb[0].mxu0 %v2491
        %v3966 = vpop.f32.mrb[0].mxu0
        %v3967 = vadd.f32 %v3926, %v3966
        %v3968 = vpop.f32.mrb[0].mxu0
        %v3969 = vpop.f32.mrb[0].mxu0
        %v3970 = vadd.f32 %v3929, %v3969
        %v3971 = vpop.f32.mrb[0].mxu0
        %3972 = vdwg.mxu0
        %v3973 = vxor.u32 %v3711, 2147483648
        %v3974 = vxor.u32 %v3713, 2147483648
        %v3975 = vxor.u32 %v3797, 2147483648
        %v3976 = vxor.u32 %v3799, 2147483648
        %v3977 = vxor.u32 %v3883, 2147483648
        %v3978 = vxor.u32 %v3885, 2147483648
        %v3979 = vxor.u32 %v3967, 2147483648
        %v3980 = vxor.u32 %v3715, 2147483648
        %v3981 = vxor.u32 %v3717, 2147483648
        %v3982 = vxor.u32 %v3801, 2147483648
        %v3983 = vxor.u32 %v3803, 2147483648
        %v3984 = vxor.u32 %v3887, 2147483648
        %v3985 = vxor.u32 %v3889, 2147483648
        %v3986 = vxor.u32 %v3970, 2147483648
        %v3987 = vmul.f32 %v3973, 1.442695
        %v3988 = vpow.pop %v3987
        %v3989 = vmul.f32 %v3974, 1.442695
        %v3990 = vpow.pop %v3989
        %v3991 = vmul.f32 %v3975, 1.442695
        %v3992 = vpow.pop %v3991
        %v3993 = vmul.f32 %v3976, 1.442695
        %v3994 = vpow.pop %v3993
        %v3995 = vmul.f32 %v3977, 1.442695
        %v3996 = vpow.pop %v3995
        %v3997 = vmul.f32 %v3978, 1.442695
        %v3998 = vpow.pop %v3997
        %v3999 = vmul.f32 %v3979, 1.442695
        %v4000 = vpow.pop %v3999
        %v4001 = vmul.f32 %v3980, 1.442695
        %v4002 = vpow.pop %v4001
        %v4003 = vmul.f32 %v3981, 1.442695
        %v4004 = vpow.pop %v4003
        %v4005 = vmul.f32 %v3982, 1.442695
        %v4006 = vpow.pop %v4005
        %v4007 = vmul.f32 %v3983, 1.442695
        %v4008 = vpow.pop %v4007
        %v4009 = vmul.f32 %v3984, 1.442695
        %v4010 = vpow.pop %v4009
        %v4011 = vmul.f32 %v3985, 1.442695
        %v4012 = vpow.pop %v4011
        %v4013 = vmul.f32 %v3986, 1.442695
        %v4014 = vpow.pop %v4013
        %v4015 = vadd.f32 %v3988, 1.0
        %v4016 = vadd.f32 %v3990, 1.0
        %v4017 = vadd.f32 %v3992, 1.0
        %v4018 = vadd.f32 %v3994, 1.0
        %v4019 = vadd.f32 %v3996, 1.0
        %v4020 = vadd.f32 %v3998, 1.0
        %v4021 = vadd.f32 %v4000, 1.0
        %v4022 = vadd.f32 %v4002, 1.0
        %v4023 = vadd.f32 %v4004, 1.0
        %v4024 = vadd.f32 %v4006, 1.0
        %v4025 = vadd.f32 %v4008, 1.0
        %v4026 = vadd.f32 %v4010, 1.0
        %v4027 = vadd.f32 %v4012, 1.0
        %v4028 = vadd.f32 %v4014, 1.0
        %v4029 = vrcp.pop %v4015
        %v4030 = vmul.f32 1.0, %v4029
        %v4031 = vrcp.pop %v4016
        %v4032 = vmul.f32 1.0, %v4031
        %v4033 = vrcp.pop %v4017
        %v4034 = vmul.f32 1.0, %v4033
        %v4035 = vrcp.pop %v4018
        %v4036 = vmul.f32 1.0, %v4035
        %v4037 = vrcp.pop %v4019
        %v4038 = vmul.f32 1.0, %v4037
        %v4039 = vrcp.pop %v4020
        %v4040 = vmul.f32 1.0, %v4039
        %v4041 = vrcp.pop %v4021
        %v4042 = vmul.f32 1.0, %v4041
        %v4043 = vrcp.pop %v4022
        %v4044 = vmul.f32 1.0, %v4043
        %v4045 = vrcp.pop %v4023
        %v4046 = vmul.f32 1.0, %v4045
        %v4047 = vrcp.pop %v4024
        %v4048 = vmul.f32 1.0, %v4047
        %v4049 = vrcp.pop %v4025
        %v4050 = vmul.f32 1.0, %v4049
        %v4051 = vrcp.pop %v4026
        %v4052 = vmul.f32 1.0, %v4051
        %v4053 = vrcp.pop %v4027
        %v4054 = vmul.f32 1.0, %v4053
        %v4055 = vrcp.pop %v4028
        %v4056 = vmul.f32 1.0, %v4055
        %4057 = vst [vmem:[%s399] sm:$0xff] %v4030
        %4058 = vst [vmem:[%s399 + $0x8] sm:$0xff] %v4032
        %4059 = vst [vmem:[%s399 + $0x10] sm:$0xff] %v4034
        %4060 = vst [vmem:[%s399 + $0x18] sm:$0xff] %v4036
        %4061 = vst [vmem:[%s399 + $0x20] sm:$0xff] %v4038
        %4062 = vst [vmem:[%s399 + $0x28] sm:$0xff] %v4040
        %4063 = vst.msk [vmem:[%s399 + $0x30] sm:$0xff] %vm1647, %v4042
        %4064 = vst [vmem:[%s399 + $0x38] sm:$0xff] %v4044
        %4065 = vst [vmem:[%s399 + $0x40] sm:$0xff] %v4046
        %4066 = vst [vmem:[%s399 + $0x48] sm:$0xff] %v4048
        %4067 = vst [vmem:[%s399 + $0x50] sm:$0xff] %v4050
        %4068 = vst [vmem:[%s399 + $0x58] sm:$0xff] %v4052
        %4069 = vst [vmem:[%s399 + $0x60] sm:$0xff] %v4054
        %4070 = vst.msk [vmem:[%s399 + $0x68] sm:$0xff] %vm1647, %v4056
        %vm4071 = vcmask 326656
        %4072 = vst.msk [vmem:[%s425] sm:$0xff] %vm4071, %v2293
        %4073 = vst.msk [vmem:[%s425 + $0x8] sm:$0xff] %vm4071, %v2296
        %s4074 = sand.u32 %s254, 1
        %s4075 = scalar_lea.sflag [#allocation3], %s4074
        %s4076 = sand.u32 %s254, 1
        %s4077 = smul.addr %s4076, 112
        %s4078 = scalar_lea.vmem [#allocation2], %s4077
        %s4079 = smul.u32 2, %s26
        %p4080 = scmp.lt.s32.totalorder %s4079, 7
        %s4081 = scalar_select %p4080, %s4079, 7
        %s4082 = smul.addr %s4081, 8
        %s4083 = scalar_lea.vmem %s11, %s4082
        // Predicated region
        $region61: #{vae_forward.1} parent=59 // pred_check
          %p4084 = pneg %p264
        $region62: #{vae_forward.1} parent=59 // pred_check_branch
          %4086 = sbr.rel (%p4084) target = $region64
        $region63: #{vae_forward.1} parent=59 // pred_region
          %s4087 = smul.u32 2, %s26
          %s4089 = ssub.s32 1792, 1792
          %4090 = vsyncadd %s4075, %s4089
          %s4091 = smul.addr %s4087, 7
          %s4092 = smul.addr %s4091, 128
          %s4093 = scalar_lea.hbm %s10, %s4092
          %s4094 = sshll.u32 %s4078, 4
          %s4095 = int_to_ptr.vmem [resolvable:$true] %s4094
          %4100 = dma.vmem_to_hbm [thread:$0]  %s4095, 1792, %s4093, %s4075, 896, 896, 56
        $region64: #{vae_forward.1} parent=59 // pred_fallthru
          _
        // Predicated region
        $region65: #{vae_forward.1} parent=59 // pred_check
          %p4101 = pneg %p290
        $region66: #{vae_forward.1} parent=59 // pred_check_branch
          %4103 = sbr.rel (%p4101) target = $region68
        $region67: #{vae_forward.1} parent=59 // pred_region
          %s4104 = smul.u32 2, %s26
        $region68: #{vae_forward.1} parent=59 // pred_fallthru
          _
      $region60: #{vae_forward.1} parent=5 // pred_fallthru
        _
      %p4105 = scmp.le.s32.totalorder 2, %s21
      // Predicated region
      $region69: #{vae_forward.1} parent=5 // pred_check
        %p4106 = pneg %p4105
      $region70: #{vae_forward.1} parent=5 // pred_check_branch
        %4108 = sbr.rel (%p4106) target = $region72
      $region71: #{vae_forward.1} parent=5 // pred_region
        %s4109 = ssub.s32 %s21, 2
        // Predicated region
        $region73: #{vae_forward.1} parent=71 // pred_check
          %p4110 = pneg %p270
        $region74: #{vae_forward.1} parent=71 // pred_check_branch
          %4112 = sbr.rel (%p4110) target = $region76
        $region75: #{vae_forward.1} parent=71 // pred_region
          %s4113 = sand.u32 %s255, 1
          %s4114 = scalar_lea.sflag [#allocation3], %s4113
          %s4115 = sand.u32 %s255, 1
          %s4116 = smul.addr %s4115, 112
          %s4117 = scalar_lea.vmem [#allocation2], %s4116
          %4118 = dma.done %s4114, 1792
        $region76: #{vae_forward.1} parent=71 // pred_fallthru
          _
        // Predicated region
        $region77: #{vae_forward.1} parent=71 // pred_check
          %p4119 = pneg %p296
        $region78: #{vae_forward.1} parent=71 // pred_check_branch
          %4121 = sbr.rel (%p4119) target = $region80
        $region79: #{vae_forward.1} parent=71 // pred_region
          %s4122 = smul.u32 2, %s27
          %p4123 = scmp.lt.s32.totalorder %s4122, 7
          %s4124 = scalar_select %p4123, %s4122, 7
          %s4125 = smul.addr %s4124, 8
          %s4126 = scalar_lea.vmem %s11, %s4125
        $region80: #{vae_forward.1} parent=71 // pred_fallthru
          _
      $region72: #{vae_forward.1} parent=5 // pred_fallthru
        _
    $region6: #{vae_forward.1} parent=1 // loop_footer
      %s25 = sadd.s32 1, %s21
    $region7: #{vae_forward.1} parent=1 // loop_footer_branch
      %20 = sbr.rel target = $region3
    $region8: #{vae_forward.1} parent=1 // loop_exit
      _
    %4127 = vsyncpa [#allocation3], 1
    %s4128 = scalar_lea.sflag [#allocation3], 1
    %4129 = vsyncpa %s4128, 1

</llo_original>
